<compile_context>
chip_gen: v7x
topology: tpu7x:2x2x1
jax: 0.10.0
libtpu: 0.0.40
codegen_flags: <defaults>
</compile_context>

<pallas_src>
import math

import jax
import jax.numpy as jnp
import numpy as np
from jax.experimental import pallas as pl
from jax.experimental.pallas import tpu as pltpu


OUT_RESOLUTION = 28                        # final image side
HALF_RES = OUT_RESOLUTION // 2             # 14 (fc3 image side)
NUM_CLASSES = 10
CAPS_DIM = 16

H1 = 512
H2 = 1024
R_DIM = HALF_RES * HALF_RES                # 196
R_PAD = 256                                # 196 -> 256 (lane-dense)
OUT_DIM = OUT_RESOLUTION * OUT_RESOLUTION  # 784
OUT_PAD = 896                              # 784 -> 896 (= 7*128, lane-dense)


def _round_up(x, m):
    return ((x + m - 1) // m) * m


def _bilinear_matrix(out_size: int, in_size: int) -> np.ndarray:
    """1-D bilinear interpolation matrix, align_corners=True
    (the semantics of nn.UpsamplingBilinear2d)."""
    W = np.zeros((out_size, in_size), dtype=np.float32)
    if out_size == 1:
        W[0, 0] = 1.0
        return W
    scale = (in_size - 1) / (out_size - 1)
    for i in range(out_size):
        src = i * scale
        i0 = min(int(np.floor(src)), in_size - 1)
        i1 = min(i0 + 1, in_size - 1)
        frac = src - i0
        W[i, i0] += 1.0 - frac
        W[i, i1] += frac
    return W


def _bilinear_upsample_direct(img: np.ndarray) -> np.ndarray:
    """Per-pixel x2 bilinear upsample, align_corners=True. numpy-only; used to
    independently verify the folded kron(Wh, Ww) operator."""
    H, W = img.shape
    OH, OW = 2 * H, 2 * W
    out = np.zeros((OH, OW), np.float64)
    sh = (H - 1) / (OH - 1)
    sw = (W - 1) / (OW - 1)
    for i in range(OH):
        for j in range(OW):
            y, x = i * sh, j * sw
            y0, x0 = int(np.floor(y)), int(np.floor(x))
            y1, x1 = min(y0 + 1, H - 1), min(x0 + 1, W - 1)
            dy, dx = y - y0, x - x0
            out[i, j] = (img[y0, x0] * (1 - dy) * (1 - dx)
                         + img[y0, x1] * (1 - dy) * dx
                         + img[y1, x0] * dy * (1 - dx)
                         + img[y1, x1] * dy * dx)
    return out


# ----------------------------------------------------------------------------
# Kernel
# ----------------------------------------------------------------------------
def _decoder_kernel(vm_ref, w1_ref, b1_ref, w2_ref, b2_ref,
                    w3_ref, b3_ref, up_ref, out_ref):
    # Masked capsule vector already class-summed in the wrapper -> [TB,16].
    vm = vm_ref[...].astype(jnp.bfloat16)

    h1 = jnp.dot(vm, w1_ref[...],
                 preferred_element_type=jnp.float32) + b1_ref[...]
    h1 = jnp.maximum(h1, 0.0)                                         # f32 relu

    h2 = jnp.dot(h1.astype(jnp.bfloat16), w2_ref[...],
                 preferred_element_type=jnp.float32) + b2_ref[...]
    h2 = jnp.maximum(h2, 0.0)

    r = jnp.dot(h2.astype(jnp.bfloat16), w3_ref[...],
                preferred_element_type=jnp.float32) + b3_ref[...]
    # sigmoid(x) == 0.5*(tanh(0.5*x)+1): exact, and tanh runs on the (idle)
    # EUP slot instead of putting a divide on the busy VALU.
    r = 0.5 * (jnp.tanh(0.5 * r) + 1.0)                               # [TB,256]

    # Bilinear x2 upsample folded into one matmul: [TB,256] @ [256,896].
    # Padded rows of up (196:256) are zero, killing the sigmoid(0)=0.5 values
    # in the padded r lanes.
    out_ref[...] = jnp.dot(r.astype(jnp.bfloat16), up_ref[...],
                           preferred_element_type=jnp.float32)        # [TB,896]


# ----------------------------------------------------------------------------
# Wrapper
# ----------------------------------------------------------------------------
def decoder_forward(v, target, params, *, batch_tile=512):
    """v: [B,10,16] f32, target: [B,10] f32 one-hot -> [B,1,28,28] f32."""
    w1t, b1, w2t, b2, w3t, b3, up_t = params
    B = v.shape[0]

    # Capsule mask + class-sum fused into the wrapper's (tiny) elementwise
    # chain: vm[b,:] = sum_c target[b,c] * v[b,c,:]   -> [B,16] f32.
    vm = jnp.sum(v.astype(jnp.float32) * target.astype(jnp.float32)[:, :, None],
                 axis=1)

    B8 = _round_up(B, 8)
    # Large tiles (amortize ~0.35us/step overhead, fill the 256-wide MXU), but
    # cap at ~half the batch so the grid has >=2 steps and the "parallel" axis
    # can shard across v7x's two TensorCores.
    TB = max(8, min(batch_tile, _round_up(pl.cdiv(B8, 2), 8)))
    Bp = _round_up(B8, TB)
    if Bp != B:
        vm = jnp.pad(vm, ((0, Bp - B), (0, 0)))

    grid = (Bp // TB,)

    n_weight_params = CAPS_DIM * H1 + H1 * H2 + H2 * R_PAD + R_PAD * OUT_PAD
    cost = pl.CostEstimate(
        flops=2 * Bp * n_weight_params,
        transcendentals=Bp * R_PAD,                        # tanh (sigmoid)
        bytes_accessed=(2 * n_weight_params                # bf16 weights
                        + 4 * (H1 + H2 + R_PAD)            # f32 biases
                        + 4 * Bp * (CAPS_DIM + OUT_PAD)))  # f32 in/out

    out_flat = pl.pallas_call(
        _decoder_kernel,
        out_shape=jax.ShapeDtypeStruct((Bp, OUT_PAD), jnp.float32),
        grid=grid,
        in_specs=[
            pl.BlockSpec((TB, CAPS_DIM), lambda i: (i, 0)),    # masked caps vec f32
            pl.BlockSpec((CAPS_DIM, H1), lambda i: (0, 0)),    # W1^T            bf16
            pl.BlockSpec((1, H1), lambda i: (0, 0)),           # b1              f32
            pl.BlockSpec((H1, H2), lambda i: (0, 0)),          # W2^T            bf16
            pl.BlockSpec((1, H2), lambda i: (0, 0)),           # b2              f32
            pl.BlockSpec((H2, R_PAD), lambda i: (0, 0)),       # W3^T (lane-pad) bf16
            pl.BlockSpec((1, R_PAD), lambda i: (0, 0)),        # b3 (padded)     f32
            pl.BlockSpec((R_PAD, OUT_PAD), lambda i: (0, 0)),  # folded upsample bf16
        ],
        out_specs=pl.BlockSpec((TB, OUT_PAD), lambda i: (i, 0)),
        compiler_params=pltpu.CompilerParams(
            dimension_semantics=("parallel",),                 # shard batch tiles (v7x)
            vmem_limit_bytes=32 * 1024 * 1024,                 # needed on v5e at TB>=384
        ),
        cost_estimate=cost,
    )(vm, w1t, b1, w2t, b2, w3t, b3, up_t)

    out = out_flat[:B, :OUT_DIM]                               # drop batch/lane padding
    return out.reshape(B, 1, OUT_RESOLUTION, OUT_RESOLUTION)


# ----------------------------------------------------------------------------
# Params
# ----------------------------------------------------------------------------
def init_params(key):
    """PyTorch-Linear-style init. Returns (kernel_params, raw_f32):
    kernel_params = pre-packed (lane-padded / bf16 / folded-upsample) arrays for
    the Pallas kernel; raw_f32 = plain PyTorch-layout f32 tensors for the
    step-by-step reference."""
    def linear(k, fan_in, fan_out):
        kw, kb = jax.random.split(k)
        bound = 1.0 / math.sqrt(fan_in)
        w = jax.random.uniform(kw, (fan_out, fan_in), jnp.float32, -bound, bound)
        b = jax.random.uniform(kb, (fan_out,), jnp.float32, -bound, bound)
        return w, b

    k1, k2, k3 = jax.random.split(key, 3)
    w1, b1 = linear(k1, CAPS_DIM, H1)          # [512,16],  [512]
    w2, b2 = linear(k2, H1, H2)                # [1024,512],[1024]
    w3, b3 = linear(k3, H2, R_DIM)             # [196,1024],[196]
    raw = dict(w1=w1, b1=b1, w2=w2, b2=b2, w3=w3, b3=b3)

    w1k = w1.T.astype(jnp.bfloat16)                                    # [16,512]
    b1k = b1.reshape(1, H1)                                            # f32
    w2k = w2.T.astype(jnp.bfloat16)                                    # [512,1024]
    b2k = b2.reshape(1, H2)
    # fc3 zero-padded 196 -> 256 output lanes.
    w3k = jnp.zeros((H2, R_PAD), jnp.float32).at[:, :R_DIM].set(w3.T).astype(jnp.bfloat16)
    b3k = jnp.zeros((1, R_PAD), jnp.float32).at[:, :R_DIM].set(b3.reshape(1, R_DIM))

    # Fixed bilinear-upsample operator (align_corners=True) as a [256,896] matmul.
    Wh = _bilinear_matrix(OUT_RESOLUTION, HALF_RES)
    M = np.kron(Wh, Wh)                                                # [784,196]
    up = np.zeros((R_PAD, OUT_PAD), np.float32)
    up[:R_DIM, :OUT_DIM] = M.T
    up_k = jnp.asarray(up, jnp.bfloat16)

    kernel_params = (w1k, b1k, w2k, b2k, w3k, b3k, up_k)
    return kernel_params, raw


# ----------------------------------------------------------------------------
# References
# ----------------------------------------------------------------------------
def decoder_reference_bf16(v, target, params):
    """Pure-JAX reference at the kernel's precision (bf16 weights/operands,
    f32 accumulation, tanh-form sigmoid) for a tight numerical comparison."""
    w1t, b1, w2t, b2, w3t, b3, up_t = params
    B = v.shape[0]
    vm = jnp.sum(v * target[:, :, None], axis=1)
    h1 = jax.nn.relu(jnp.dot(vm.astype(jnp.bfloat16), w1t,
                             preferred_element_type=jnp.float32) + b1)
    h2 = jax.nn.relu(jnp.dot(h1.astype(jnp.bfloat16), w2t,
                             preferred_element_type=jnp.float32) + b2)
    z = jnp.dot(h2.astype(jnp.bfloat16), w3t,
                preferred_element_type=jnp.float32) + b3
    r = 0.5 * (jnp.tanh(0.5 * z) + 1.0)
    out = jnp.dot(r.astype(jnp.bfloat16), up_t, preferred_element_type=jnp.float32)
    return out[:, :OUT_DIM].reshape(B, 1, OUT_RESOLUTION, OUT_RESOLUTION)


def decoder_reference_f32(v, target, raw):
    """f32 reference that follows the original PyTorch module step-by-step
    (explicit mask+sum, fc layers, separate bilinear upsample — no kron fold)."""
    B = v.shape[0]
    vm = jnp.sum(v * target[:, :, None], axis=1)
    h1 = jax.nn.relu(vm @ raw["w1"].T + raw["b1"])
    h2 = jax.nn.relu(h1 @ raw["w2"].T + raw["b2"])
    r = jax.nn.sigmoid(h2 @ raw["w3"].T + raw["b3"])
    r_img = r.reshape(B, HALF_RES, HALF_RES)
    Wh = jnp.asarray(_bilinear_matrix(OUT_RESOLUTION, HALF_RES))
    out = jnp.einsum("oi,bij,pj->bop", Wh, r_img, Wh)
    return out[:, None, :, :]


if __name__ == "__main__":
    # Independent check of the folded upsample operator against a per-pixel
    # align_corners=True bilinear implementation.
    rng = np.random.default_rng(0)
    img = rng.standard_normal((HALF_RES, HALF_RES)).astype(np.float32)
    Wh_np = _bilinear_matrix(OUT_RESOLUTION, HALF_RES)
    M_np = np.kron(Wh_np, Wh_np)
    np.testing.assert_allclose(
        (M_np @ img.ravel()).reshape(OUT_RESOLUTION, OUT_RESOLUTION),
        _bilinear_upsample_direct(img), rtol=1e-5, atol=1e-5)

    key = jax.random.PRNGKey(0)
    k_params, k_v, k_t = jax.random.split(key, 3)

    B = 8
    kernel_params, raw = init_params(k_params)
    v = jax.random.normal(k_v, (B, NUM_CLASSES, CAPS_DIM), jnp.float32)
    labels = jax.random.randint(k_t, (B,), 0, NUM_CLASSES)
    target = jax.nn.one_hot(labels, NUM_CLASSES, dtype=jnp.float32)

    fwd = jax.jit(lambda vv, tt: decoder_forward(vv, tt, kernel_params))
    out = jax.block_until_ready(fwd(v, target))
    assert out.shape == (B, 1, OUT_RESOLUTION, OUT_RESOLUTION)

    # Tight check vs a precision-matched pure-JAX reference.
    ref_bf16 = jax.block_until_ready(decoder_reference_bf16(v, target, kernel_params))
    np.testing.assert_allclose(np.asarray(out), np.asarray(ref_bf16),
                               rtol=1e-3, atol=1e-3)

    # Semantic check vs the step-by-step f32 PyTorch-equivalent reference
    # (tolerance covers bf16 weight quantization).
    ref_f32 = jax.block_until_ready(decoder_reference_f32(v, target, raw))
    np.testing.assert_allclose(np.asarray(out), np.asarray(ref_f32),
                               rtol=0, atol=3e-2)

    print("KERNEL_OK")
</pallas_src>

<mosaic_0001>
module attributes {stable_mosaic.version = 11 : i64} {
  func.func @_decoder_kernel(%arg0: i32, %arg1: memref<8x16xf32, #tpu.memory_space<vmem>>, %arg2: memref<16x512xbf16, #tpu.memory_space<vmem>>, %arg3: memref<1x512xf32, #tpu.memory_space<vmem>>, %arg4: memref<512x1024xbf16, #tpu.memory_space<vmem>>, %arg5: memref<1x1024xf32, #tpu.memory_space<vmem>>, %arg6: memref<1024x256xbf16, #tpu.memory_space<vmem>>, %arg7: memref<1x256xf32, #tpu.memory_space<vmem>>, %arg8: memref<256x896xbf16, #tpu.memory_space<vmem>>, %arg9: memref<8x896xf32, #tpu.memory_space<vmem>>) attributes {dimension_semantics = [#tpu.dimension_semantics<parallel>], iteration_bounds = array<i64: 1>, scalar_prefetch = 0 : i64, scratch_operands = 0 : i64, tpu.core_type = #tpu.core_type<tc>, window_params = [{transform_indices = @transform_0, window_bounds = array<i64: 8, 16>}, {pipeline_mode = #tpu.pipeline_mode<synchronous>, transform_indices = @transform_1, window_bounds = array<i64: 16, 512>}, {pipeline_mode = #tpu.pipeline_mode<synchronous>, transform_indices = @transform_2, window_bounds = array<i64: 1, 512>}, {pipeline_mode = #tpu.pipeline_mode<synchronous>, transform_indices = @transform_3, window_bounds = array<i64: 512, 1024>}, {pipeline_mode = #tpu.pipeline_mode<synchronous>, transform_indices = @transform_4, window_bounds = array<i64: 1, 1024>}, {pipeline_mode = #tpu.pipeline_mode<synchronous>, transform_indices = @transform_5, window_bounds = array<i64: 1024, 256>}, {pipeline_mode = #tpu.pipeline_mode<synchronous>, transform_indices = @transform_6, window_bounds = array<i64: 1, 256>}, {pipeline_mode = #tpu.pipeline_mode<synchronous>, transform_indices = @transform_7, window_bounds = array<i64: 256, 896>}, {transform_indices = @transform_8, window_bounds = array<i64: 8, 896>}]} {
    %c0 = arith.constant 0 : index
    %c0_0 = arith.constant 0 : index
    %0 = vector.load %arg1[%c0, %c0_0] : memref<8x16xf32, #tpu.memory_space<vmem>>, vector<8x16xf32>
    %1 = arith.truncf %0 : vector<8x16xf32> to vector<8x16xbf16>
    %c0_1 = arith.constant 0 : index
    %c0_2 = arith.constant 0 : index
    %2 = vector.load %arg2[%c0_1, %c0_2] : memref<16x512xbf16, #tpu.memory_space<vmem>>, vector<16x512xbf16>
    %cst = arith.constant dense<0.000000e+00> : vector<8x512xf32>
    %3 = tpu.matmul %1, %2, %cst {dimension_numbers = #tpu.dot_dimension_numbers<[1], [0], [0], [1], [0, 0, 1, 1], [], []>} : vector<8x16xbf16>, vector<16x512xbf16>, vector<8x512xf32> -> vector<8x512xf32>
    %c0_3 = arith.constant 0 : index
    %c0_4 = arith.constant 0 : index
    %4 = vector.load %arg3[%c0_3, %c0_4] : memref<1x512xf32, #tpu.memory_space<vmem>>, vector<1x512xf32>
    %5 = vector.broadcast %4 : vector<1x512xf32> to vector<8x512xf32>
    %6 = arith.addf %3, %5 : vector<8x512xf32>
    %cst_5 = arith.constant 0.000000e+00 : f32
    %7 = vector.broadcast %cst_5 : f32 to vector<8x512xf32>
    %8 = arith.maximumf %6, %7 : vector<8x512xf32>
    %9 = arith.truncf %8 : vector<8x512xf32> to vector<8x512xbf16>
    %c0_6 = arith.constant 0 : index
    %c0_7 = arith.constant 0 : index
    %10 = vector.load %arg4[%c0_6, %c0_7] : memref<512x1024xbf16, #tpu.memory_space<vmem>>, vector<512x1024xbf16>
    %cst_8 = arith.constant dense<0.000000e+00> : vector<8x1024xf32>
    %11 = tpu.matmul %9, %10, %cst_8 {dimension_numbers = #tpu.dot_dimension_numbers<[1], [0], [0], [1], [0, 0, 1, 1], [], []>} : vector<8x512xbf16>, vector<512x1024xbf16>, vector<8x1024xf32> -> vector<8x1024xf32>
    %c0_9 = arith.constant 0 : index
    %c0_10 = arith.constant 0 : index
    %12 = vector.load %arg5[%c0_9, %c0_10] : memref<1x1024xf32, #tpu.memory_space<vmem>>, vector<1x1024xf32>
    %13 = vector.broadcast %12 : vector<1x1024xf32> to vector<8x1024xf32>
    %14 = arith.addf %11, %13 : vector<8x1024xf32>
    %cst_11 = arith.constant 0.000000e+00 : f32
    %15 = vector.broadcast %cst_11 : f32 to vector<8x1024xf32>
    %16 = arith.maximumf %14, %15 : vector<8x1024xf32>
    %17 = arith.truncf %16 : vector<8x1024xf32> to vector<8x1024xbf16>
    %c0_12 = arith.constant 0 : index
    %c0_13 = arith.constant 0 : index
    %18 = vector.load %arg6[%c0_12, %c0_13] : memref<1024x256xbf16, #tpu.memory_space<vmem>>, vector<1024x256xbf16>
    %cst_14 = arith.constant dense<0.000000e+00> : vector<8x256xf32>
    %19 = tpu.matmul %17, %18, %cst_14 {dimension_numbers = #tpu.dot_dimension_numbers<[1], [0], [0], [1], [0, 0, 1, 1], [], []>} : vector<8x1024xbf16>, vector<1024x256xbf16>, vector<8x256xf32> -> vector<8x256xf32>
    %c0_15 = arith.constant 0 : index
    %c0_16 = arith.constant 0 : index
    %20 = vector.load %arg7[%c0_15, %c0_16] : memref<1x256xf32, #tpu.memory_space<vmem>>, vector<1x256xf32>
    %21 = vector.broadcast %20 : vector<1x256xf32> to vector<8x256xf32>
    %22 = arith.addf %19, %21 : vector<8x256xf32>
    %cst_17 = arith.constant 5.000000e-01 : f32
    %23 = vector.broadcast %cst_17 : f32 to vector<8x256xf32>
    %24 = arith.mulf %23, %22 : vector<8x256xf32>
    %25 = math.tanh %24 : vector<8x256xf32>
    %cst_18 = arith.constant 1.000000e+00 : f32
    %26 = vector.broadcast %cst_18 : f32 to vector<8x256xf32>
    %27 = arith.addf %25, %26 : vector<8x256xf32>
    %cst_19 = arith.constant 5.000000e-01 : f32
    %28 = vector.broadcast %cst_19 : f32 to vector<8x256xf32>
    %29 = arith.mulf %28, %27 : vector<8x256xf32>
    %30 = arith.truncf %29 : vector<8x256xf32> to vector<8x256xbf16>
    %c0_20 = arith.constant 0 : index
    %c0_21 = arith.constant 0 : index
    %31 = vector.load %arg8[%c0_20, %c0_21] : memref<256x896xbf16, #tpu.memory_space<vmem>>, vector<256x896xbf16>
    %cst_22 = arith.constant dense<0.000000e+00> : vector<8x896xf32>
    %32 = tpu.matmul %30, %31, %cst_22 {dimension_numbers = #tpu.dot_dimension_numbers<[1], [0], [0], [1], [0, 0, 1, 1], [], []>} : vector<8x256xbf16>, vector<256x896xbf16>, vector<8x896xf32> -> vector<8x896xf32>
    %c0_23 = arith.constant 0 : index
    %c0_24 = arith.constant 0 : index
    %33 = vector.load %arg9[%c0_23, %c0_24] : memref<8x896xf32, #tpu.memory_space<vmem>>, vector<8x896xf32>
    tpu.vector_store %arg9[%c0_23, %c0_24], %32 {strides = array<i32>} : memref<8x896xf32, #tpu.memory_space<vmem>>, vector<8x896xf32>,
    return
  }
  func.func @transform_0(%arg0: i32) -> (i32, i32) {
    %c0_i32 = arith.constant 0 : i32
    %c0_i32_0 = arith.constant 0 : i32
    return %arg0, %c0_i32 : i32, i32
  }
  func.func @transform_1(%arg0: i32) -> (i32, i32) {
    %c0_i32 = arith.constant 0 : i32
    %c0_i32_0 = arith.constant 0 : i32
    %c0_i32_1 = arith.constant 0 : i32
    return %c0_i32, %c0_i32_0 : i32, i32
  }
  func.func @transform_2(%arg0: i32) -> (i32, i32) {
    %c0_i32 = arith.constant 0 : i32
    %c0_i32_0 = arith.constant 0 : i32
    %c0_i32_1 = arith.constant 0 : i32
    return %c0_i32, %c0_i32_0 : i32, i32
  }
  func.func @transform_3(%arg0: i32) -> (i32, i32) {
    %c0_i32 = arith.constant 0 : i32
    %c0_i32_0 = arith.constant 0 : i32
    %c0_i32_1 = arith.constant 0 : i32
    return %c0_i32, %c0_i32_0 : i32, i32
  }
  func.func @transform_4(%arg0: i32) -> (i32, i32) {
    %c0_i32 = arith.constant 0 : i32
    %c0_i32_0 = arith.constant 0 : i32
    %c0_i32_1 = arith.constant 0 : i32
    return %c0_i32, %c0_i32_0 : i32, i32
  }
  func.func @transform_5(%arg0: i32) -> (i32, i32) {
    %c0_i32 = arith.constant 0 : i32
    %c0_i32_0 = arith.constant 0 : i32
    %c0_i32_1 = arith.constant 0 : i32
    return %c0_i32, %c0_i32_0 : i32, i32
  }
  func.func @transform_6(%arg0: i32) -> (i32, i32) {
    %c0_i32 = arith.constant 0 : i32
    %c0_i32_0 = arith.constant 0 : i32
    %c0_i32_1 = arith.constant 0 : i32
    return %c0_i32, %c0_i32_0 : i32, i32
  }
  func.func @transform_7(%arg0: i32) -> (i32, i32) {
    %c0_i32 = arith.constant 0 : i32
    %c0_i32_0 = arith.constant 0 : i32
    %c0_i32_1 = arith.constant 0 : i32
    return %c0_i32, %c0_i32_0 : i32, i32
  }
  func.func @transform_8(%arg0: i32) -> (i32, i32) {
    %c0_i32 = arith.constant 0 : i32
    %c0_i32_0 = arith.constant 0 : i32
    return %arg0, %c0_i32 : i32, i32
  }
}

</mosaic_0001>

<llo_original>
// kernel: _lambda_.1
$region0: #{_lambda_.1}
  #allocation0 [shape = 'u32[]', space=smem, size = 0x4, offset = 0x4, fixed_abs, tag = 'smem constant byte address 0x4 - core index']
  #allocation1 [shape = 'u32[144,128]{1,0:T(1,128)}', space=vmem, size = 0x12000, scoped, tag = 'internal scratch']
  %s0 = inlined_call_operand.vmem [shape: f32[8,16], index: 0, kind: input, shape index: {}]
  %s1 = inlined_call_operand.vmem [shape: bf16[16,512], index: 1, kind: input, shape index: {}]
  %s2 = inlined_call_operand.vmem [shape: f32[1,512], index: 2, kind: input, shape index: {}]
  %s3 = inlined_call_operand.vmem [shape: bf16[512,1024], index: 3, kind: input, shape index: {}]
  %s4 = inlined_call_operand.vmem [shape: f32[1,1024], index: 4, kind: input, shape index: {}]
  %s5 = inlined_call_operand.vmem [shape: bf16[1024,256], index: 5, kind: input, shape index: {}]
  %s6 = inlined_call_operand.vmem [shape: f32[1,256], index: 6, kind: input, shape index: {}]
  %s7 = inlined_call_operand.vmem [shape: bf16[256,896], index: 7, kind: input, shape index: {}]
  %s8 = inlined_call_operand.vmem [shape: f32[8,896], index: 8, kind: output, shape index: {}]
  %s9 = sld [smem:[#allocation0]]
  $region42: #{_lambda_.1} parent=0
    _
  %s11 = ssub.s32 1, %s9
  %s12 = scalar_select 0, %s11, %s9
  // Predicated region
  $region2: #{_lambda_.1} parent=0 // pred_check
    _
  $region3: #{_lambda_.1} parent=0 // pred_check_branch
    %14 = sbr.rel (0) target = $region5
  $region4: #{_lambda_.1} parent=0 // pred_region
    _
  $region5: #{_lambda_.1} parent=0 // pred_fallthru
    _
  // Predicated region
  $region6: #{_lambda_.1} parent=0 // pred_check
    _
  $region7: #{_lambda_.1} parent=0 // pred_check_branch
    %16 = sbr.rel (0) target = $region9
  $region8: #{_lambda_.1} parent=0 // pred_region
    _
  $region9: #{_lambda_.1} parent=0 // pred_fallthru
    _
  // Predicated region
  $region10: #{_lambda_.1} parent=0 // pred_check
    _
  $region11: #{_lambda_.1} parent=0 // pred_check_branch
    %18 = sbr.rel (0) target = $region13
  $region12: #{_lambda_.1} parent=0 // pred_region
    _
  $region13: #{_lambda_.1} parent=0 // pred_fallthru
    _
  // Predicated region
  $region14: #{_lambda_.1} parent=0 // pred_check
    _
  $region15: #{_lambda_.1} parent=0 // pred_check_branch
    %20 = sbr.rel (0) target = $region17
  $region16: #{_lambda_.1} parent=0 // pred_region
    _
  $region17: #{_lambda_.1} parent=0 // pred_fallthru
    _
  // Predicated region
  $region18: #{_lambda_.1} parent=0 // pred_check
    _
  $region19: #{_lambda_.1} parent=0 // pred_check_branch
    %22 = sbr.rel (0) target = $region21
  $region20: #{_lambda_.1} parent=0 // pred_region
    _
  $region21: #{_lambda_.1} parent=0 // pred_fallthru
    _
  // Predicated region
  $region22: #{_lambda_.1} parent=0 // pred_check
    _
  $region23: #{_lambda_.1} parent=0 // pred_check_branch
    %24 = sbr.rel (0) target = $region25
  $region24: #{_lambda_.1} parent=0 // pred_region
    _
  $region25: #{_lambda_.1} parent=0 // pred_fallthru
    _
  // Predicated region
  $region26: #{_lambda_.1} parent=0 // pred_check
    _
  $region27: #{_lambda_.1} parent=0 // pred_check_branch
    %26 = sbr.rel (0) target = $region29
  $region28: #{_lambda_.1} parent=0 // pred_region
    _
  $region29: #{_lambda_.1} parent=0 // pred_fallthru
    _
  // Predicated region
  $region30: #{_lambda_.1} parent=0 // pred_check
    _
  $region31: #{_lambda_.1} parent=0 // pred_check_branch
    %28 = sbr.rel (0) target = $region33
  $region32: #{_lambda_.1} parent=0 // pred_region
    _
  $region33: #{_lambda_.1} parent=0 // pred_fallthru
    _
  %v30 = vld [vmem:[%s0] sm:$0xff]
  %v31 = vpack.c.bf16 %v30, %v30
  %v32 = vld [vmem:[%s1] sm:$0xff]
  %v33 = vld [vmem:[%s1 + $0x8] sm:$0xff]
  %v34 = vld [vmem:[%s1 + $0x10] sm:$0xff]
  %v35 = vld [vmem:[%s1 + $0x18] sm:$0xff]
  %v36 = vld [vmem:[%s2] sm:$0xf]
  %v38 = vlaneseq
  %v39 = vshrl.u32 %v38, 7
  %v40 = vsub.s32 0, %v39
  %v41 = vrot.slane %v36, %v40
  %v42 = vlaneseq
  %v43 = vshrl.u32 %v42, 7
  %v44 = vsub.s32 1, %v43
  %v45 = vrot.slane %v36, %v44
  %v46 = vlaneseq
  %v47 = vshrl.u32 %v46, 7
  %v48 = vsub.s32 2, %v47
  %v49 = vrot.slane %v36, %v48
  %v50 = vlaneseq
  %v51 = vshrl.u32 %v50, 7
  %v52 = vsub.s32 3, %v51
  %v53 = vrot.slane %v36, %v52
  %v62 = vunpack.c.l.b16 %v32
  %v63 = vunpack.c.h.b16 %v32
  %v64 = vunpack.c.l.b16 %v33
  %v65 = vunpack.c.h.b16 %v33
  %v66 = vunpack.c.l.b16 %v34
  %v67 = vunpack.c.h.b16 %v34
  %v68 = vunpack.c.l.b16 %v35
  %v69 = vunpack.c.h.b16 %v35
  %v70 = vpack.c.b16 %v66, %v62
  %v71 = vpack.c.b16 %v67, %v63
  %v72 = vpack.c.b16 %v68, %v64
  %v73 = vpack.c.b16 %v69, %v65
  %vm78 = vcmask 130048
  %v80 = vsel %vm78, %v31, 0
  %82 = vmatprep.subr.bf16.mxu0 %v71
  %83 = vmatpush1.bf16.msra.mxu0 %v70
  %84 = vmatprep.subr.bf16.mxu0 0
  %85 = vmatpush1.bf16.msra.mxu0 0
  %86 = vmatprep.subr.bf16.mxu0 0
  %87 = vmatpush1.bf16.msra.mxu0 0
  %88 = vmatprep.subr.bf16.mxu0 0
  %89 = vmatpush1.bf16.msra.mxu0 0
  %90 = vmatprep.subr.bf16.mxu0 0
  %91 = vmatpush1.bf16.msra.mxu0 0
  %92 = vmatprep.subr.bf16.mxu0 0
  %93 = vmatpush1.bf16.msra.mxu0 0
  %94 = vmatprep.subr.bf16.mxu0 0
  %95 = vmatpush1.bf16.msra.mxu0 0
  %96 = vmatprep.subr.bf16.mxu0 0
  %97 = vmatpush1.bf16.msra.mxu0 0
  %98 = vmatprep.subr.bf16.mxu0 0
  %99 = vmatpush1.bf16.msra.mxu0 0
  %100 = vmatprep.subr.bf16.mxu0 0
  %101 = vmatpush1.bf16.msra.mxu0 0
  %102 = vmatprep.subr.bf16.mxu0 0
  %103 = vmatpush1.bf16.msra.mxu0 0
  %104 = vmatprep.subr.bf16.mxu0 0
  %105 = vmatpush1.bf16.msra.mxu0 0
  %106 = vmatprep.subr.bf16.mxu0 0
  %107 = vmatpush1.bf16.msra.mxu0 0
  %108 = vmatprep.subr.bf16.mxu0 0
  %109 = vmatpush1.bf16.msra.mxu0 0
  %110 = vmatprep.subr.bf16.mxu0 0
  %111 = vmatpush1.bf16.msra.mxu0 0
  %112 = vmatprep.subr.bf16.mxu0 0
  %113 = vmatpush1.bf16.msra.mxu0 0
  %114 = vmatprep.mubr.bf16.mxu0 0
  %115 = vmatmul.mubr.bf16.gmra.mrb[0].mxu0 %v80
  %v116 = vpop.f32.mrb[0].mxu0
  %v117 = vadd.f32 %v41, %v116
  %v118 = vpop.f32.mrb[0].mxu0
  %v119 = vadd.f32 %v45, %v118
  %v120 = vpop.f32.mrb[0].mxu0
  %v121 = vpop.f32.mrb[0].mxu0
  %122 = vdwg.mxu0
  %123 = vmatprep.subr.bf16.mxu0 %v73
  %124 = vmatpush1.bf16.msra.mxu0 %v72
  %125 = vmatprep.subr.bf16.mxu0 0
  %126 = vmatpush1.bf16.msra.mxu0 0
  %127 = vmatprep.subr.bf16.mxu0 0
  %128 = vmatpush1.bf16.msra.mxu0 0
  %129 = vmatprep.subr.bf16.mxu0 0
  %130 = vmatpush1.bf16.msra.mxu0 0
  %131 = vmatprep.subr.bf16.mxu0 0
  %132 = vmatpush1.bf16.msra.mxu0 0
  %133 = vmatprep.subr.bf16.mxu0 0
  %134 = vmatpush1.bf16.msra.mxu0 0
  %135 = vmatprep.subr.bf16.mxu0 0
  %136 = vmatpush1.bf16.msra.mxu0 0
  %137 = vmatprep.subr.bf16.mxu0 0
  %138 = vmatpush1.bf16.msra.mxu0 0
  %139 = vmatprep.subr.bf16.mxu0 0
  %140 = vmatpush1.bf16.msra.mxu0 0
  %141 = vmatprep.subr.bf16.mxu0 0
  %142 = vmatpush1.bf16.msra.mxu0 0
  %143 = vmatprep.subr.bf16.mxu0 0
  %144 = vmatpush1.bf16.msra.mxu0 0
  %145 = vmatprep.subr.bf16.mxu0 0
  %146 = vmatpush1.bf16.msra.mxu0 0
  %147 = vmatprep.subr.bf16.mxu0 0
  %148 = vmatpush1.bf16.msra.mxu0 0
  %149 = vmatprep.subr.bf16.mxu0 0
  %150 = vmatpush1.bf16.msra.mxu0 0
  %151 = vmatprep.subr.bf16.mxu0 0
  %152 = vmatpush1.bf16.msra.mxu0 0
  %153 = vmatprep.subr.bf16.mxu0 0
  %154 = vmatpush1.bf16.msra.mxu0 0
  %155 = vmatprep.mubr.bf16.mxu0 0
  %156 = vmatmul.mubr.bf16.gmra.mrb[0].mxu0 %v80
  %v157 = vpop.f32.mrb[0].mxu0
  %v158 = vadd.f32 %v49, %v157
  %v159 = vpop.f32.mrb[0].mxu0
  %v160 = vadd.f32 %v53, %v159
  %v161 = vpop.f32.mrb[0].mxu0
  %v162 = vpop.f32.mrb[0].mxu0
  %163 = vdwg.mxu0
  %v164 = vmax.f32 %v117, 0.0
  %v165 = vmax.f32 %v119, 0.0
  %v166 = vmax.f32 %v158, 0.0
  %v167 = vmax.f32 %v160, 0.0
  %v168 = vpack.c.bf16 %v164, %v164
  %v169 = vpack.c.bf16 %v165, %v165
  %v170 = vpack.c.bf16 %v166, %v166
  %v171 = vpack.c.bf16 %v167, %v167
  %v172 = vld [vmem:[%s3] sm:$0xff]
  %v173 = vld [vmem:[%s3 + $0x8] sm:$0xff]
  %v174 = vld [vmem:[%s3 + $0x10] sm:$0xff]
  %v175 = vld [vmem:[%s3 + $0x18] sm:$0xff]
  %v176 = vld [vmem:[%s3 + $0x20] sm:$0xff]
  %v177 = vld [vmem:[%s3 + $0x28] sm:$0xff]
  %v178 = vld [vmem:[%s3 + $0x30] sm:$0xff]
  %v179 = vld [vmem:[%s3 + $0x38] sm:$0xff]
  %v180 = vld [vmem:[%s3 + $0x40] sm:$0xff]
  %v181 = vld [vmem:[%s3 + $0x48] sm:$0xff]
  %v182 = vld [vmem:[%s3 + $0x50] sm:$0xff]
  %v183 = vld [vmem:[%s3 + $0x58] sm:$0xff]
  %v184 = vld [vmem:[%s3 + $0x60] sm:$0xff]
  %v185 = vld [vmem:[%s3 + $0x68] sm:$0xff]
  %v186 = vld [vmem:[%s3 + $0x70] sm:$0xff]
  %v187 = vld [vmem:[%s3 + $0x78] sm:$0xff]
  %v188 = vld [vmem:[%s3 + $0x80] sm:$0xff]
  %v189 = vld [vmem:[%s3 + $0x88] sm:$0xff]
  %v190 = vld [vmem:[%s3 + $0x90] sm:$0xff]
  %v191 = vld [vmem:[%s3 + $0x98] sm:$0xff]
  %v192 = vld [vmem:[%s3 + $0xa0] sm:$0xff]
  %v193 = vld [vmem:[%s3 + $0xa8] sm:$0xff]
  %v194 = vld [vmem:[%s3 + $0xb0] sm:$0xff]
  %v195 = vld [vmem:[%s3 + $0xb8] sm:$0xff]
  %v196 = vld [vmem:[%s3 + $0xc0] sm:$0xff]
  %v197 = vld [vmem:[%s3 + $0xc8] sm:$0xff]
  %v198 = vld [vmem:[%s3 + $0xd0] sm:$0xff]
  %v199 = vld [vmem:[%s3 + $0xd8] sm:$0xff]
  %v200 = vld [vmem:[%s3 + $0xe0] sm:$0xff]
  %v201 = vld [vmem:[%s3 + $0xe8] sm:$0xff]
  %v202 = vld [vmem:[%s3 + $0xf0] sm:$0xff]
  %v203 = vld [vmem:[%s3 + $0xf8] sm:$0xff]
  %v204 = vld [vmem:[%s3 + $0x100] sm:$0xff]
  %v205 = vld [vmem:[%s3 + $0x108] sm:$0xff]
  %v206 = vld [vmem:[%s3 + $0x110] sm:$0xff]
  %v207 = vld [vmem:[%s3 + $0x118] sm:$0xff]
  %v208 = vld [vmem:[%s3 + $0x120] sm:$0xff]
  %v209 = vld [vmem:[%s3 + $0x128] sm:$0xff]
  %v210 = vld [vmem:[%s3 + $0x130] sm:$0xff]
  %v211 = vld [vmem:[%s3 + $0x138] sm:$0xff]
  %v212 = vld [vmem:[%s3 + $0x140] sm:$0xff]
  %v213 = vld [vmem:[%s3 + $0x148] sm:$0xff]
  %v214 = vld [vmem:[%s3 + $0x150] sm:$0xff]
  %v215 = vld [vmem:[%s3 + $0x158] sm:$0xff]
  %v216 = vld [vmem:[%s3 + $0x160] sm:$0xff]
  %v217 = vld [vmem:[%s3 + $0x168] sm:$0xff]
  %v218 = vld [vmem:[%s3 + $0x170] sm:$0xff]
  %v219 = vld [vmem:[%s3 + $0x178] sm:$0xff]
  %v220 = vld [vmem:[%s3 + $0x180] sm:$0xff]
  %v221 = vld [vmem:[%s3 + $0x188] sm:$0xff]
  %v222 = vld [vmem:[%s3 + $0x190] sm:$0xff]
  %v223 = vld [vmem:[%s3 + $0x198] sm:$0xff]
  %v224 = vld [vmem:[%s3 + $0x1a0] sm:$0xff]
  %v225 = vld [vmem:[%s3 + $0x1a8] sm:$0xff]
  %v226 = vld [vmem:[%s3 + $0x1b0] sm:$0xff]
  %v227 = vld [vmem:[%s3 + $0x1b8] sm:$0xff]
  %v228 = vld [vmem:[%s3 + $0x1c0] sm:$0xff]
  %v229 = vld [vmem:[%s3 + $0x1c8] sm:$0xff]
  %v230 = vld [vmem:[%s3 + $0x1d0] sm:$0xff]
  %v231 = vld [vmem:[%s3 + $0x1d8] sm:$0xff]
  %v232 = vld [vmem:[%s3 + $0x1e0] sm:$0xff]
  %v233 = vld [vmem:[%s3 + $0x1e8] sm:$0xff]
  %v234 = vld [vmem:[%s3 + $0x1f0] sm:$0xff]
  %v235 = vld [vmem:[%s3 + $0x1f8] sm:$0xff]
  %v236 = vld [vmem:[%s3 + $0x200] sm:$0xff]
  %v237 = vld [vmem:[%s3 + $0x208] sm:$0xff]
  %v238 = vld [vmem:[%s3 + $0x210] sm:$0xff]
  %v239 = vld [vmem:[%s3 + $0x218] sm:$0xff]
  %v240 = vld [vmem:[%s3 + $0x220] sm:$0xff]
  %v241 = vld [vmem:[%s3 + $0x228] sm:$0xff]
  %v242 = vld [vmem:[%s3 + $0x230] sm:$0xff]
  %v243 = vld [vmem:[%s3 + $0x238] sm:$0xff]
  %v244 = vld [vmem:[%s3 + $0x240] sm:$0xff]
  %v245 = vld [vmem:[%s3 + $0x248] sm:$0xff]
  %v246 = vld [vmem:[%s3 + $0x250] sm:$0xff]
  %v247 = vld [vmem:[%s3 + $0x258] sm:$0xff]
  %v248 = vld [vmem:[%s3 + $0x260] sm:$0xff]
  %v249 = vld [vmem:[%s3 + $0x268] sm:$0xff]
  %v250 = vld [vmem:[%s3 + $0x270] sm:$0xff]
  %v251 = vld [vmem:[%s3 + $0x278] sm:$0xff]
  %v252 = vld [vmem:[%s3 + $0x280] sm:$0xff]
  %v253 = vld [vmem:[%s3 + $0x288] sm:$0xff]
  %v254 = vld [vmem:[%s3 + $0x290] sm:$0xff]
  %v255 = vld [vmem:[%s3 + $0x298] sm:$0xff]
  %v256 = vld [vmem:[%s3 + $0x2a0] sm:$0xff]
  %v257 = vld [vmem:[%s3 + $0x2a8] sm:$0xff]
  %v258 = vld [vmem:[%s3 + $0x2b0] sm:$0xff]
  %v259 = vld [vmem:[%s3 + $0x2b8] sm:$0xff]
  %v260 = vld [vmem:[%s3 + $0x2c0] sm:$0xff]
  %v261 = vld [vmem:[%s3 + $0x2c8] sm:$0xff]
  %v262 = vld [vmem:[%s3 + $0x2d0] sm:$0xff]
  %v263 = vld [vmem:[%s3 + $0x2d8] sm:$0xff]
  %v264 = vld [vmem:[%s3 + $0x2e0] sm:$0xff]
  %v265 = vld [vmem:[%s3 + $0x2e8] sm:$0xff]
  %v266 = vld [vmem:[%s3 + $0x2f0] sm:$0xff]
  %v267 = vld [vmem:[%s3 + $0x2f8] sm:$0xff]
  %v268 = vld [vmem:[%s3 + $0x300] sm:$0xff]
  %v269 = vld [vmem:[%s3 + $0x308] sm:$0xff]
  %v270 = vld [vmem:[%s3 + $0x310] sm:$0xff]
  %v271 = vld [vmem:[%s3 + $0x318] sm:$0xff]
  %v272 = vld [vmem:[%s3 + $0x320] sm:$0xff]
  %v273 = vld [vmem:[%s3 + $0x328] sm:$0xff]
  %v274 = vld [vmem:[%s3 + $0x330] sm:$0xff]
  %v275 = vld [vmem:[%s3 + $0x338] sm:$0xff]
  %v276 = vld [vmem:[%s3 + $0x340] sm:$0xff]
  %v277 = vld [vmem:[%s3 + $0x348] sm:$0xff]
  %v278 = vld [vmem:[%s3 + $0x350] sm:$0xff]
  %v279 = vld [vmem:[%s3 + $0x358] sm:$0xff]
  %v280 = vld [vmem:[%s3 + $0x360] sm:$0xff]
  %v281 = vld [vmem:[%s3 + $0x368] sm:$0xff]
  %v282 = vld [vmem:[%s3 + $0x370] sm:$0xff]
  %v283 = vld [vmem:[%s3 + $0x378] sm:$0xff]
  %v284 = vld [vmem:[%s3 + $0x380] sm:$0xff]
  %v285 = vld [vmem:[%s3 + $0x388] sm:$0xff]
  %v286 = vld [vmem:[%s3 + $0x390] sm:$0xff]
  %v287 = vld [vmem:[%s3 + $0x398] sm:$0xff]
  %v288 = vld [vmem:[%s3 + $0x3a0] sm:$0xff]
  %v289 = vld [vmem:[%s3 + $0x3a8] sm:$0xff]
  %v290 = vld [vmem:[%s3 + $0x3b0] sm:$0xff]
  %v291 = vld [vmem:[%s3 + $0x3b8] sm:$0xff]
  %v292 = vld [vmem:[%s3 + $0x3c0] sm:$0xff]
  %v293 = vld [vmem:[%s3 + $0x3c8] sm:$0xff]
  %v294 = vld [vmem:[%s3 + $0x3d0] sm:$0xff]
  %v295 = vld [vmem:[%s3 + $0x3d8] sm:$0xff]
  %v296 = vld [vmem:[%s3 + $0x3e0] sm:$0xff]
  %v297 = vld [vmem:[%s3 + $0x3e8] sm:$0xff]
  %v298 = vld [vmem:[%s3 + $0x3f0] sm:$0xff]
  %v299 = vld [vmem:[%s3 + $0x3f8] sm:$0xff]
  %v300 = vld [vmem:[%s3 + $0x400] sm:$0xff]
  %v301 = vld [vmem:[%s3 + $0x408] sm:$0xff]
  %v302 = vld [vmem:[%s3 + $0x410] sm:$0xff]
  %v303 = vld [vmem:[%s3 + $0x418] sm:$0xff]
  %v304 = vld [vmem:[%s3 + $0x420] sm:$0xff]
  %v305 = vld [vmem:[%s3 + $0x428] sm:$0xff]
  %v306 = vld [vmem:[%s3 + $0x430] sm:$0xff]
  %v307 = vld [vmem:[%s3 + $0x438] sm:$0xff]
  %v308 = vld [vmem:[%s3 + $0x440] sm:$0xff]
  %v309 = vld [vmem:[%s3 + $0x448] sm:$0xff]
  %v310 = vld [vmem:[%s3 + $0x450] sm:$0xff]
  %v311 = vld [vmem:[%s3 + $0x458] sm:$0xff]
  %v312 = vld [vmem:[%s3 + $0x460] sm:$0xff]
  %v313 = vld [vmem:[%s3 + $0x468] sm:$0xff]
  %v314 = vld [vmem:[%s3 + $0x470] sm:$0xff]
  %v315 = vld [vmem:[%s3 + $0x478] sm:$0xff]
  %v316 = vld [vmem:[%s3 + $0x480] sm:$0xff]
  %v317 = vld [vmem:[%s3 + $0x488] sm:$0xff]
  %v318 = vld [vmem:[%s3 + $0x490] sm:$0xff]
  %v319 = vld [vmem:[%s3 + $0x498] sm:$0xff]
  %v320 = vld [vmem:[%s3 + $0x4a0] sm:$0xff]
  %v321 = vld [vmem:[%s3 + $0x4a8] sm:$0xff]
  %v322 = vld [vmem:[%s3 + $0x4b0] sm:$0xff]
  %v323 = vld [vmem:[%s3 + $0x4b8] sm:$0xff]
  %v324 = vld [vmem:[%s3 + $0x4c0] sm:$0xff]
  %v325 = vld [vmem:[%s3 + $0x4c8] sm:$0xff]
  %v326 = vld [vmem:[%s3 + $0x4d0] sm:$0xff]
  %v327 = vld [vmem:[%s3 + $0x4d8] sm:$0xff]
  %v328 = vld [vmem:[%s3 + $0x4e0] sm:$0xff]
  %v329 = vld [vmem:[%s3 + $0x4e8] sm:$0xff]
  %v330 = vld [vmem:[%s3 + $0x4f0] sm:$0xff]
  %v331 = vld [vmem:[%s3 + $0x4f8] sm:$0xff]
  %v332 = vld [vmem:[%s3 + $0x500] sm:$0xff]
  %v333 = vld [vmem:[%s3 + $0x508] sm:$0xff]
  %v334 = vld [vmem:[%s3 + $0x510] sm:$0xff]
  %v335 = vld [vmem:[%s3 + $0x518] sm:$0xff]
  %v336 = vld [vmem:[%s3 + $0x520] sm:$0xff]
  %v337 = vld [vmem:[%s3 + $0x528] sm:$0xff]
  %v338 = vld [vmem:[%s3 + $0x530] sm:$0xff]
  %v339 = vld [vmem:[%s3 + $0x538] sm:$0xff]
  %v340 = vld [vmem:[%s3 + $0x540] sm:$0xff]
  %v341 = vld [vmem:[%s3 + $0x548] sm:$0xff]
  %v342 = vld [vmem:[%s3 + $0x550] sm:$0xff]
  %v343 = vld [vmem:[%s3 + $0x558] sm:$0xff]
  %v344 = vld [vmem:[%s3 + $0x560] sm:$0xff]
  %v345 = vld [vmem:[%s3 + $0x568] sm:$0xff]
  %v346 = vld [vmem:[%s3 + $0x570] sm:$0xff]
  %v347 = vld [vmem:[%s3 + $0x578] sm:$0xff]
  %v348 = vld [vmem:[%s3 + $0x580] sm:$0xff]
  %v349 = vld [vmem:[%s3 + $0x588] sm:$0xff]
  %v350 = vld [vmem:[%s3 + $0x590] sm:$0xff]
  %v351 = vld [vmem:[%s3 + $0x598] sm:$0xff]
  %v352 = vld [vmem:[%s3 + $0x5a0] sm:$0xff]
  %v353 = vld [vmem:[%s3 + $0x5a8] sm:$0xff]
  %v354 = vld [vmem:[%s3 + $0x5b0] sm:$0xff]
  %v355 = vld [vmem:[%s3 + $0x5b8] sm:$0xff]
  %v356 = vld [vmem:[%s3 + $0x5c0] sm:$0xff]
  %v357 = vld [vmem:[%s3 + $0x5c8] sm:$0xff]
  %v358 = vld [vmem:[%s3 + $0x5d0] sm:$0xff]
  %v359 = vld [vmem:[%s3 + $0x5d8] sm:$0xff]
  %v360 = vld [vmem:[%s3 + $0x5e0] sm:$0xff]
  %v361 = vld [vmem:[%s3 + $0x5e8] sm:$0xff]
  %v362 = vld [vmem:[%s3 + $0x5f0] sm:$0xff]
  %v363 = vld [vmem:[%s3 + $0x5f8] sm:$0xff]
  %v364 = vld [vmem:[%s3 + $0x600] sm:$0xff]
  %v365 = vld [vmem:[%s3 + $0x608] sm:$0xff]
  %v366 = vld [vmem:[%s3 + $0x610] sm:$0xff]
  %v367 = vld [vmem:[%s3 + $0x618] sm:$0xff]
  %v368 = vld [vmem:[%s3 + $0x620] sm:$0xff]
  %v369 = vld [vmem:[%s3 + $0x628] sm:$0xff]
  %v370 = vld [vmem:[%s3 + $0x630] sm:$0xff]
  %v371 = vld [vmem:[%s3 + $0x638] sm:$0xff]
  %v372 = vld [vmem:[%s3 + $0x640] sm:$0xff]
  %v373 = vld [vmem:[%s3 + $0x648] sm:$0xff]
  %v374 = vld [vmem:[%s3 + $0x650] sm:$0xff]
  %v375 = vld [vmem:[%s3 + $0x658] sm:$0xff]
  %v376 = vld [vmem:[%s3 + $0x660] sm:$0xff]
  %v377 = vld [vmem:[%s3 + $0x668] sm:$0xff]
  %v378 = vld [vmem:[%s3 + $0x670] sm:$0xff]
  %v379 = vld [vmem:[%s3 + $0x678] sm:$0xff]
  %v380 = vld [vmem:[%s3 + $0x680] sm:$0xff]
  %v381 = vld [vmem:[%s3 + $0x688] sm:$0xff]
  %v382 = vld [vmem:[%s3 + $0x690] sm:$0xff]
  %v383 = vld [vmem:[%s3 + $0x698] sm:$0xff]
  %v384 = vld [vmem:[%s3 + $0x6a0] sm:$0xff]
  %v385 = vld [vmem:[%s3 + $0x6a8] sm:$0xff]
  %v386 = vld [vmem:[%s3 + $0x6b0] sm:$0xff]
  %v387 = vld [vmem:[%s3 + $0x6b8] sm:$0xff]
  %v388 = vld [vmem:[%s3 + $0x6c0] sm:$0xff]
  %v389 = vld [vmem:[%s3 + $0x6c8] sm:$0xff]
  %v390 = vld [vmem:[%s3 + $0x6d0] sm:$0xff]
  %v391 = vld [vmem:[%s3 + $0x6d8] sm:$0xff]
  %v392 = vld [vmem:[%s3 + $0x6e0] sm:$0xff]
  %v393 = vld [vmem:[%s3 + $0x6e8] sm:$0xff]
  %v394 = vld [vmem:[%s3 + $0x6f0] sm:$0xff]
  %v395 = vld [vmem:[%s3 + $0x6f8] sm:$0xff]
  %v396 = vld [vmem:[%s3 + $0x700] sm:$0xff]
  %v397 = vld [vmem:[%s3 + $0x708] sm:$0xff]
  %v398 = vld [vmem:[%s3 + $0x710] sm:$0xff]
  %v399 = vld [vmem:[%s3 + $0x718] sm:$0xff]
  %v400 = vld [vmem:[%s3 + $0x720] sm:$0xff]
  %v401 = vld [vmem:[%s3 + $0x728] sm:$0xff]
  %v402 = vld [vmem:[%s3 + $0x730] sm:$0xff]
  %v403 = vld [vmem:[%s3 + $0x738] sm:$0xff]
  %v404 = vld [vmem:[%s3 + $0x740] sm:$0xff]
  %v405 = vld [vmem:[%s3 + $0x748] sm:$0xff]
  %v406 = vld [vmem:[%s3 + $0x750] sm:$0xff]
  %v407 = vld [vmem:[%s3 + $0x758] sm:$0xff]
  %v408 = vld [vmem:[%s3 + $0x760] sm:$0xff]
  %v409 = vld [vmem:[%s3 + $0x768] sm:$0xff]
  %v410 = vld [vmem:[%s3 + $0x770] sm:$0xff]
  %v411 = vld [vmem:[%s3 + $0x778] sm:$0xff]
  %v412 = vld [vmem:[%s3 + $0x780] sm:$0xff]
  %v413 = vld [vmem:[%s3 + $0x788] sm:$0xff]
  %v414 = vld [vmem:[%s3 + $0x790] sm:$0xff]
  %v415 = vld [vmem:[%s3 + $0x798] sm:$0xff]
  %v416 = vld [vmem:[%s3 + $0x7a0] sm:$0xff]
  %v417 = vld [vmem:[%s3 + $0x7a8] sm:$0xff]
  %v418 = vld [vmem:[%s3 + $0x7b0] sm:$0xff]
  %v419 = vld [vmem:[%s3 + $0x7b8] sm:$0xff]
  %v420 = vld [vmem:[%s3 + $0x7c0] sm:$0xff]
  %v421 = vld [vmem:[%s3 + $0x7c8] sm:$0xff]
  %v422 = vld [vmem:[%s3 + $0x7d0] sm:$0xff]
  %v423 = vld [vmem:[%s3 + $0x7d8] sm:$0xff]
  %v424 = vld [vmem:[%s3 + $0x7e0] sm:$0xff]
  %v425 = vld [vmem:[%s3 + $0x7e8] sm:$0xff]
  %v426 = vld [vmem:[%s3 + $0x7f0] sm:$0xff]
  %v427 = vld [vmem:[%s3 + $0x7f8] sm:$0xff]
  %v428 = vld [vmem:[%s4] sm:$0xff]
  %v430 = vlaneseq
  %v431 = vshrl.u32 %v430, 7
  %v432 = vsub.s32 0, %v431
  %v433 = vrot.slane %v428, %v432
  %v434 = vlaneseq
  %v435 = vshrl.u32 %v434, 7
  %v436 = vsub.s32 1, %v435
  %v437 = vrot.slane %v428, %v436
  %v438 = vlaneseq
  %v439 = vshrl.u32 %v438, 7
  %v440 = vsub.s32 2, %v439
  %v441 = vrot.slane %v428, %v440
  %v442 = vlaneseq
  %v443 = vshrl.u32 %v442, 7
  %v444 = vsub.s32 3, %v443
  %v445 = vrot.slane %v428, %v444
  %v446 = vlaneseq
  %v447 = vshrl.u32 %v446, 7
  %v448 = vsub.s32 4, %v447
  %v449 = vrot.slane %v428, %v448
  %v450 = vlaneseq
  %v451 = vshrl.u32 %v450, 7
  %v452 = vsub.s32 5, %v451
  %v453 = vrot.slane %v428, %v452
  %v454 = vlaneseq
  %v455 = vshrl.u32 %v454, 7
  %v456 = vsub.s32 6, %v455
  %v457 = vrot.slane %v428, %v456
  %v458 = vlaneseq
  %v459 = vshrl.u32 %v458, 7
  %v460 = vsub.s32 7, %v459
  %v461 = vrot.slane %v428, %v460
  %v726 = vunpack.c.l.b16 %v172
  %v727 = vunpack.c.h.b16 %v172
  %v728 = vunpack.c.l.b16 %v173
  %v729 = vunpack.c.h.b16 %v173
  %v730 = vunpack.c.l.b16 %v174
  %v731 = vunpack.c.h.b16 %v174
  %v732 = vunpack.c.l.b16 %v175
  %v733 = vunpack.c.h.b16 %v175
  %v734 = vunpack.c.l.b16 %v176
  %v735 = vunpack.c.h.b16 %v176
  %v736 = vunpack.c.l.b16 %v177
  %v737 = vunpack.c.h.b16 %v177
  %v738 = vunpack.c.l.b16 %v178
  %v739 = vunpack.c.h.b16 %v178
  %v740 = vunpack.c.l.b16 %v179
  %v741 = vunpack.c.h.b16 %v179
  %v742 = vunpack.c.l.b16 %v180
  %v743 = vunpack.c.h.b16 %v180
  %v744 = vunpack.c.l.b16 %v181
  %v745 = vunpack.c.h.b16 %v181
  %v746 = vunpack.c.l.b16 %v182
  %v747 = vunpack.c.h.b16 %v182
  %v748 = vunpack.c.l.b16 %v183
  %v749 = vunpack.c.h.b16 %v183
  %v750 = vunpack.c.l.b16 %v184
  %v751 = vunpack.c.h.b16 %v184
  %v752 = vunpack.c.l.b16 %v185
  %v753 = vunpack.c.h.b16 %v185
  %v754 = vunpack.c.l.b16 %v186
  %v755 = vunpack.c.h.b16 %v186
  %v756 = vunpack.c.l.b16 %v187
  %v757 = vunpack.c.h.b16 %v187
  %v758 = vunpack.c.l.b16 %v188
  %v759 = vunpack.c.h.b16 %v188
  %v760 = vunpack.c.l.b16 %v189
  %v761 = vunpack.c.h.b16 %v189
  %v762 = vunpack.c.l.b16 %v190
  %v763 = vunpack.c.h.b16 %v190
  %v764 = vunpack.c.l.b16 %v191
  %v765 = vunpack.c.h.b16 %v191
  %v766 = vunpack.c.l.b16 %v192
  %v767 = vunpack.c.h.b16 %v192
  %v768 = vunpack.c.l.b16 %v193
  %v769 = vunpack.c.h.b16 %v193
  %v770 = vunpack.c.l.b16 %v194
  %v771 = vunpack.c.h.b16 %v194
  %v772 = vunpack.c.l.b16 %v195
  %v773 = vunpack.c.h.b16 %v195
  %v774 = vunpack.c.l.b16 %v196
  %v775 = vunpack.c.h.b16 %v196
  %v776 = vunpack.c.l.b16 %v197
  %v777 = vunpack.c.h.b16 %v197
  %v778 = vunpack.c.l.b16 %v198
  %v779 = vunpack.c.h.b16 %v198
  %v780 = vunpack.c.l.b16 %v199
  %v781 = vunpack.c.h.b16 %v199
  %v782 = vunpack.c.l.b16 %v200
  %v783 = vunpack.c.h.b16 %v200
  %v784 = vunpack.c.l.b16 %v201
  %v785 = vunpack.c.h.b16 %v201
  %v786 = vunpack.c.l.b16 %v202
  %v787 = vunpack.c.h.b16 %v202
  %v788 = vunpack.c.l.b16 %v203
  %v789 = vunpack.c.h.b16 %v203
  %v790 = vunpack.c.l.b16 %v204
  %v791 = vunpack.c.h.b16 %v204
  %v792 = vunpack.c.l.b16 %v205
  %v793 = vunpack.c.h.b16 %v205
  %v794 = vunpack.c.l.b16 %v206
  %v795 = vunpack.c.h.b16 %v206
  %v796 = vunpack.c.l.b16 %v207
  %v797 = vunpack.c.h.b16 %v207
  %v798 = vunpack.c.l.b16 %v208
  %v799 = vunpack.c.h.b16 %v208
  %v800 = vunpack.c.l.b16 %v209
  %v801 = vunpack.c.h.b16 %v209
  %v802 = vunpack.c.l.b16 %v210
  %v803 = vunpack.c.h.b16 %v210
  %v804 = vunpack.c.l.b16 %v211
  %v805 = vunpack.c.h.b16 %v211
  %v806 = vunpack.c.l.b16 %v212
  %v807 = vunpack.c.h.b16 %v212
  %v808 = vunpack.c.l.b16 %v213
  %v809 = vunpack.c.h.b16 %v213
  %v810 = vunpack.c.l.b16 %v214
  %v811 = vunpack.c.h.b16 %v214
  %v812 = vunpack.c.l.b16 %v215
  %v813 = vunpack.c.h.b16 %v215
  %v814 = vunpack.c.l.b16 %v216
  %v815 = vunpack.c.h.b16 %v216
  %v816 = vunpack.c.l.b16 %v217
  %v817 = vunpack.c.h.b16 %v217
  %v818 = vunpack.c.l.b16 %v218
  %v819 = vunpack.c.h.b16 %v218
  %v820 = vunpack.c.l.b16 %v219
  %v821 = vunpack.c.h.b16 %v219
  %v822 = vunpack.c.l.b16 %v220
  %v823 = vunpack.c.h.b16 %v220
  %v824 = vunpack.c.l.b16 %v221
  %v825 = vunpack.c.h.b16 %v221
  %v826 = vunpack.c.l.b16 %v222
  %v827 = vunpack.c.h.b16 %v222
  %v828 = vunpack.c.l.b16 %v223
  %v829 = vunpack.c.h.b16 %v223
  %v830 = vunpack.c.l.b16 %v224
  %v831 = vunpack.c.h.b16 %v224
  %v832 = vunpack.c.l.b16 %v225
  %v833 = vunpack.c.h.b16 %v225
  %v834 = vunpack.c.l.b16 %v226
  %v835 = vunpack.c.h.b16 %v226
  %v836 = vunpack.c.l.b16 %v227
  %v837 = vunpack.c.h.b16 %v227
  %v838 = vunpack.c.l.b16 %v228
  %v839 = vunpack.c.h.b16 %v228
  %v840 = vunpack.c.l.b16 %v229
  %v841 = vunpack.c.h.b16 %v229
  %v842 = vunpack.c.l.b16 %v230
  %v843 = vunpack.c.h.b16 %v230
  %v844 = vunpack.c.l.b16 %v231
  %v845 = vunpack.c.h.b16 %v231
  %v846 = vunpack.c.l.b16 %v232
  %v847 = vunpack.c.h.b16 %v232
  %v848 = vunpack.c.l.b16 %v233
  %v849 = vunpack.c.h.b16 %v233
  %v850 = vunpack.c.l.b16 %v234
  %v851 = vunpack.c.h.b16 %v234
  %v852 = vunpack.c.l.b16 %v235
  %v853 = vunpack.c.h.b16 %v235
  %v854 = vunpack.c.l.b16 %v236
  %v855 = vunpack.c.h.b16 %v236
  %v856 = vunpack.c.l.b16 %v237
  %v857 = vunpack.c.h.b16 %v237
  %v858 = vunpack.c.l.b16 %v238
  %v859 = vunpack.c.h.b16 %v238
  %v860 = vunpack.c.l.b16 %v239
  %v861 = vunpack.c.h.b16 %v239
  %v862 = vunpack.c.l.b16 %v240
  %v863 = vunpack.c.h.b16 %v240
  %v864 = vunpack.c.l.b16 %v241
  %v865 = vunpack.c.h.b16 %v241
  %v866 = vunpack.c.l.b16 %v242
  %v867 = vunpack.c.h.b16 %v242
  %v868 = vunpack.c.l.b16 %v243
  %v869 = vunpack.c.h.b16 %v243
  %v870 = vunpack.c.l.b16 %v244
  %v871 = vunpack.c.h.b16 %v244
  %v872 = vunpack.c.l.b16 %v245
  %v873 = vunpack.c.h.b16 %v245
  %v874 = vunpack.c.l.b16 %v246
  %v875 = vunpack.c.h.b16 %v246
  %v876 = vunpack.c.l.b16 %v247
  %v877 = vunpack.c.h.b16 %v247
  %v878 = vunpack.c.l.b16 %v248
  %v879 = vunpack.c.h.b16 %v248
  %v880 = vunpack.c.l.b16 %v249
  %v881 = vunpack.c.h.b16 %v249
  %v882 = vunpack.c.l.b16 %v250
  %v883 = vunpack.c.h.b16 %v250
  %v884 = vunpack.c.l.b16 %v251
  %v885 = vunpack.c.h.b16 %v251
  %v886 = vunpack.c.l.b16 %v252
  %v887 = vunpack.c.h.b16 %v252
  %v888 = vunpack.c.l.b16 %v253
  %v889 = vunpack.c.h.b16 %v253
  %v890 = vunpack.c.l.b16 %v254
  %v891 = vunpack.c.h.b16 %v254
  %v892 = vunpack.c.l.b16 %v255
  %v893 = vunpack.c.h.b16 %v255
  %v894 = vunpack.c.l.b16 %v256
  %v895 = vunpack.c.h.b16 %v256
  %v896 = vunpack.c.l.b16 %v257
  %v897 = vunpack.c.h.b16 %v257
  %v898 = vunpack.c.l.b16 %v258
  %v899 = vunpack.c.h.b16 %v258
  %v900 = vunpack.c.l.b16 %v259
  %v901 = vunpack.c.h.b16 %v259
  %v902 = vunpack.c.l.b16 %v260
  %v903 = vunpack.c.h.b16 %v260
  %v904 = vunpack.c.l.b16 %v261
  %v905 = vunpack.c.h.b16 %v261
  %v906 = vunpack.c.l.b16 %v262
  %v907 = vunpack.c.h.b16 %v262
  %v908 = vunpack.c.l.b16 %v263
  %v909 = vunpack.c.h.b16 %v263
  %v910 = vunpack.c.l.b16 %v264
  %v911 = vunpack.c.h.b16 %v264
  %v912 = vunpack.c.l.b16 %v265
  %v913 = vunpack.c.h.b16 %v265
  %v914 = vunpack.c.l.b16 %v266
  %v915 = vunpack.c.h.b16 %v266
  %v916 = vunpack.c.l.b16 %v267
  %v917 = vunpack.c.h.b16 %v267
  %v918 = vunpack.c.l.b16 %v268
  %v919 = vunpack.c.h.b16 %v268
  %v920 = vunpack.c.l.b16 %v269
  %v921 = vunpack.c.h.b16 %v269
  %v922 = vunpack.c.l.b16 %v270
  %v923 = vunpack.c.h.b16 %v270
  %v924 = vunpack.c.l.b16 %v271
  %v925 = vunpack.c.h.b16 %v271
  %v926 = vunpack.c.l.b16 %v272
  %v927 = vunpack.c.h.b16 %v272
  %v928 = vunpack.c.l.b16 %v273
  %v929 = vunpack.c.h.b16 %v273
  %v930 = vunpack.c.l.b16 %v274
  %v931 = vunpack.c.h.b16 %v274
  %v932 = vunpack.c.l.b16 %v275
  %v933 = vunpack.c.h.b16 %v275
  %v934 = vunpack.c.l.b16 %v276
  %v935 = vunpack.c.h.b16 %v276
  %v936 = vunpack.c.l.b16 %v277
  %v937 = vunpack.c.h.b16 %v277
  %v938 = vunpack.c.l.b16 %v278
  %v939 = vunpack.c.h.b16 %v278
  %v940 = vunpack.c.l.b16 %v279
  %v941 = vunpack.c.h.b16 %v279
  %v942 = vunpack.c.l.b16 %v280
  %v943 = vunpack.c.h.b16 %v280
  %v944 = vunpack.c.l.b16 %v281
  %v945 = vunpack.c.h.b16 %v281
  %v946 = vunpack.c.l.b16 %v282
  %v947 = vunpack.c.h.b16 %v282
  %v948 = vunpack.c.l.b16 %v283
  %v949 = vunpack.c.h.b16 %v283
  %v950 = vunpack.c.l.b16 %v284
  %v951 = vunpack.c.h.b16 %v284
  %v952 = vunpack.c.l.b16 %v285
  %v953 = vunpack.c.h.b16 %v285
  %v954 = vunpack.c.l.b16 %v286
  %v955 = vunpack.c.h.b16 %v286
  %v956 = vunpack.c.l.b16 %v287
  %v957 = vunpack.c.h.b16 %v287
  %v958 = vunpack.c.l.b16 %v288
  %v959 = vunpack.c.h.b16 %v288
  %v960 = vunpack.c.l.b16 %v289
  %v961 = vunpack.c.h.b16 %v289
  %v962 = vunpack.c.l.b16 %v290
  %v963 = vunpack.c.h.b16 %v290
  %v964 = vunpack.c.l.b16 %v291
  %v965 = vunpack.c.h.b16 %v291
  %v966 = vunpack.c.l.b16 %v292
  %v967 = vunpack.c.h.b16 %v292
  %v968 = vunpack.c.l.b16 %v293
  %v969 = vunpack.c.h.b16 %v293
  %v970 = vunpack.c.l.b16 %v294
  %v971 = vunpack.c.h.b16 %v294
  %v972 = vunpack.c.l.b16 %v295
  %v973 = vunpack.c.h.b16 %v295
  %v974 = vunpack.c.l.b16 %v296
  %v975 = vunpack.c.h.b16 %v296
  %v976 = vunpack.c.l.b16 %v297
  %v977 = vunpack.c.h.b16 %v297
  %v978 = vunpack.c.l.b16 %v298
  %v979 = vunpack.c.h.b16 %v298
  %v980 = vunpack.c.l.b16 %v299
  %v981 = vunpack.c.h.b16 %v299
  %v982 = vunpack.c.l.b16 %v300
  %v983 = vunpack.c.h.b16 %v300
  %v984 = vunpack.c.l.b16 %v301
  %v985 = vunpack.c.h.b16 %v301
  %v986 = vunpack.c.l.b16 %v302
  %v987 = vunpack.c.h.b16 %v302
  %v988 = vunpack.c.l.b16 %v303
  %v989 = vunpack.c.h.b16 %v303
  %v990 = vunpack.c.l.b16 %v304
  %v991 = vunpack.c.h.b16 %v304
  %v992 = vunpack.c.l.b16 %v305
  %v993 = vunpack.c.h.b16 %v305
  %v994 = vunpack.c.l.b16 %v306
  %v995 = vunpack.c.h.b16 %v306
  %v996 = vunpack.c.l.b16 %v307
  %v997 = vunpack.c.h.b16 %v307
  %v998 = vunpack.c.l.b16 %v308
  %v999 = vunpack.c.h.b16 %v308
  %v1000 = vunpack.c.l.b16 %v309
  %v1001 = vunpack.c.h.b16 %v309
  %v1002 = vunpack.c.l.b16 %v310
  %v1003 = vunpack.c.h.b16 %v310
  %v1004 = vunpack.c.l.b16 %v311
  %v1005 = vunpack.c.h.b16 %v311
  %v1006 = vunpack.c.l.b16 %v312
  %v1007 = vunpack.c.h.b16 %v312
  %v1008 = vunpack.c.l.b16 %v313
  %v1009 = vunpack.c.h.b16 %v313
  %v1010 = vunpack.c.l.b16 %v314
  %v1011 = vunpack.c.h.b16 %v314
  %v1012 = vunpack.c.l.b16 %v315
  %v1013 = vunpack.c.h.b16 %v315
  %v1014 = vunpack.c.l.b16 %v316
  %v1015 = vunpack.c.h.b16 %v316
  %v1016 = vunpack.c.l.b16 %v317
  %v1017 = vunpack.c.h.b16 %v317
  %v1018 = vunpack.c.l.b16 %v318
  %v1019 = vunpack.c.h.b16 %v318
  %v1020 = vunpack.c.l.b16 %v319
  %v1021 = vunpack.c.h.b16 %v319
  %v1022 = vunpack.c.l.b16 %v320
  %v1023 = vunpack.c.h.b16 %v320
  %v1024 = vunpack.c.l.b16 %v321
  %v1025 = vunpack.c.h.b16 %v321
  %v1026 = vunpack.c.l.b16 %v322
  %v1027 = vunpack.c.h.b16 %v322
  %v1028 = vunpack.c.l.b16 %v323
  %v1029 = vunpack.c.h.b16 %v323
  %v1030 = vunpack.c.l.b16 %v324
  %v1031 = vunpack.c.h.b16 %v324
  %v1032 = vunpack.c.l.b16 %v325
  %v1033 = vunpack.c.h.b16 %v325
  %v1034 = vunpack.c.l.b16 %v326
  %v1035 = vunpack.c.h.b16 %v326
  %v1036 = vunpack.c.l.b16 %v327
  %v1037 = vunpack.c.h.b16 %v327
  %v1038 = vunpack.c.l.b16 %v328
  %v1039 = vunpack.c.h.b16 %v328
  %v1040 = vunpack.c.l.b16 %v329
  %v1041 = vunpack.c.h.b16 %v329
  %v1042 = vunpack.c.l.b16 %v330
  %v1043 = vunpack.c.h.b16 %v330
  %v1044 = vunpack.c.l.b16 %v331
  %v1045 = vunpack.c.h.b16 %v331
  %v1046 = vunpack.c.l.b16 %v332
  %v1047 = vunpack.c.h.b16 %v332
  %v1048 = vunpack.c.l.b16 %v333
  %v1049 = vunpack.c.h.b16 %v333
  %v1050 = vunpack.c.l.b16 %v334
  %v1051 = vunpack.c.h.b16 %v334
  %v1052 = vunpack.c.l.b16 %v335
  %v1053 = vunpack.c.h.b16 %v335
  %v1054 = vunpack.c.l.b16 %v336
  %v1055 = vunpack.c.h.b16 %v336
  %v1056 = vunpack.c.l.b16 %v337
  %v1057 = vunpack.c.h.b16 %v337
  %v1058 = vunpack.c.l.b16 %v338
  %v1059 = vunpack.c.h.b16 %v338
  %v1060 = vunpack.c.l.b16 %v339
  %v1061 = vunpack.c.h.b16 %v339
  %v1062 = vunpack.c.l.b16 %v340
  %v1063 = vunpack.c.h.b16 %v340
  %v1064 = vunpack.c.l.b16 %v341
  %v1065 = vunpack.c.h.b16 %v341
  %v1066 = vunpack.c.l.b16 %v342
  %v1067 = vunpack.c.h.b16 %v342
  %v1068 = vunpack.c.l.b16 %v343
  %v1069 = vunpack.c.h.b16 %v343
  %v1070 = vunpack.c.l.b16 %v344
  %v1071 = vunpack.c.h.b16 %v344
  %v1072 = vunpack.c.l.b16 %v345
  %v1073 = vunpack.c.h.b16 %v345
  %v1074 = vunpack.c.l.b16 %v346
  %v1075 = vunpack.c.h.b16 %v346
  %v1076 = vunpack.c.l.b16 %v347
  %v1077 = vunpack.c.h.b16 %v347
  %v1078 = vunpack.c.l.b16 %v348
  %v1079 = vunpack.c.h.b16 %v348
  %v1080 = vunpack.c.l.b16 %v349
  %v1081 = vunpack.c.h.b16 %v349
  %v1082 = vunpack.c.l.b16 %v350
  %v1083 = vunpack.c.h.b16 %v350
  %v1084 = vunpack.c.l.b16 %v351
  %v1085 = vunpack.c.h.b16 %v351
  %v1086 = vunpack.c.l.b16 %v352
  %v1087 = vunpack.c.h.b16 %v352
  %v1088 = vunpack.c.l.b16 %v353
  %v1089 = vunpack.c.h.b16 %v353
  %v1090 = vunpack.c.l.b16 %v354
  %v1091 = vunpack.c.h.b16 %v354
  %v1092 = vunpack.c.l.b16 %v355
  %v1093 = vunpack.c.h.b16 %v355
  %v1094 = vunpack.c.l.b16 %v356
  %v1095 = vunpack.c.h.b16 %v356
  %v1096 = vunpack.c.l.b16 %v357
  %v1097 = vunpack.c.h.b16 %v357
  %v1098 = vunpack.c.l.b16 %v358
  %v1099 = vunpack.c.h.b16 %v358
  %v1100 = vunpack.c.l.b16 %v359
  %v1101 = vunpack.c.h.b16 %v359
  %v1102 = vunpack.c.l.b16 %v360
  %v1103 = vunpack.c.h.b16 %v360
  %v1104 = vunpack.c.l.b16 %v361
  %v1105 = vunpack.c.h.b16 %v361
  %v1106 = vunpack.c.l.b16 %v362
  %v1107 = vunpack.c.h.b16 %v362
  %v1108 = vunpack.c.l.b16 %v363
  %v1109 = vunpack.c.h.b16 %v363
  %v1110 = vunpack.c.l.b16 %v364
  %v1111 = vunpack.c.h.b16 %v364
  %v1112 = vunpack.c.l.b16 %v365
  %v1113 = vunpack.c.h.b16 %v365
  %v1114 = vunpack.c.l.b16 %v366
  %v1115 = vunpack.c.h.b16 %v366
  %v1116 = vunpack.c.l.b16 %v367
  %v1117 = vunpack.c.h.b16 %v367
  %v1118 = vunpack.c.l.b16 %v368
  %v1119 = vunpack.c.h.b16 %v368
  %v1120 = vunpack.c.l.b16 %v369
  %v1121 = vunpack.c.h.b16 %v369
  %v1122 = vunpack.c.l.b16 %v370
  %v1123 = vunpack.c.h.b16 %v370
  %v1124 = vunpack.c.l.b16 %v371
  %v1125 = vunpack.c.h.b16 %v371
  %v1126 = vunpack.c.l.b16 %v372
  %v1127 = vunpack.c.h.b16 %v372
  %v1128 = vunpack.c.l.b16 %v373
  %v1129 = vunpack.c.h.b16 %v373
  %v1130 = vunpack.c.l.b16 %v374
  %v1131 = vunpack.c.h.b16 %v374
  %v1132 = vunpack.c.l.b16 %v375
  %v1133 = vunpack.c.h.b16 %v375
  %v1134 = vunpack.c.l.b16 %v376
  %v1135 = vunpack.c.h.b16 %v376
  %v1136 = vunpack.c.l.b16 %v377
  %v1137 = vunpack.c.h.b16 %v377
  %v1138 = vunpack.c.l.b16 %v378
  %v1139 = vunpack.c.h.b16 %v378
  %v1140 = vunpack.c.l.b16 %v379
  %v1141 = vunpack.c.h.b16 %v379
  %v1142 = vunpack.c.l.b16 %v380
  %v1143 = vunpack.c.h.b16 %v380
  %v1144 = vunpack.c.l.b16 %v381
  %v1145 = vunpack.c.h.b16 %v381
  %v1146 = vunpack.c.l.b16 %v382
  %v1147 = vunpack.c.h.b16 %v382
  %v1148 = vunpack.c.l.b16 %v383
  %v1149 = vunpack.c.h.b16 %v383
  %v1150 = vunpack.c.l.b16 %v384
  %v1151 = vunpack.c.h.b16 %v384
  %v1152 = vunpack.c.l.b16 %v385
  %v1153 = vunpack.c.h.b16 %v385
  %v1154 = vunpack.c.l.b16 %v386
  %v1155 = vunpack.c.h.b16 %v386
  %v1156 = vunpack.c.l.b16 %v387
  %v1157 = vunpack.c.h.b16 %v387
  %v1158 = vunpack.c.l.b16 %v388
  %v1159 = vunpack.c.h.b16 %v388
  %v1160 = vunpack.c.l.b16 %v389
  %v1161 = vunpack.c.h.b16 %v389
  %v1162 = vunpack.c.l.b16 %v390
  %v1163 = vunpack.c.h.b16 %v390
  %v1164 = vunpack.c.l.b16 %v391
  %v1165 = vunpack.c.h.b16 %v391
  %v1166 = vunpack.c.l.b16 %v392
  %v1167 = vunpack.c.h.b16 %v392
  %v1168 = vunpack.c.l.b16 %v393
  %v1169 = vunpack.c.h.b16 %v393
  %v1170 = vunpack.c.l.b16 %v394
  %v1171 = vunpack.c.h.b16 %v394
  %v1172 = vunpack.c.l.b16 %v395
  %v1173 = vunpack.c.h.b16 %v395
  %v1174 = vunpack.c.l.b16 %v396
  %v1175 = vunpack.c.h.b16 %v396
  %v1176 = vunpack.c.l.b16 %v397
  %v1177 = vunpack.c.h.b16 %v397
  %v1178 = vunpack.c.l.b16 %v398
  %v1179 = vunpack.c.h.b16 %v398
  %v1180 = vunpack.c.l.b16 %v399
  %v1181 = vunpack.c.h.b16 %v399
  %v1182 = vunpack.c.l.b16 %v400
  %v1183 = vunpack.c.h.b16 %v400
  %v1184 = vunpack.c.l.b16 %v401
  %v1185 = vunpack.c.h.b16 %v401
  %v1186 = vunpack.c.l.b16 %v402
  %v1187 = vunpack.c.h.b16 %v402
  %v1188 = vunpack.c.l.b16 %v403
  %v1189 = vunpack.c.h.b16 %v403
  %v1190 = vunpack.c.l.b16 %v404
  %v1191 = vunpack.c.h.b16 %v404
  %v1192 = vunpack.c.l.b16 %v405
  %v1193 = vunpack.c.h.b16 %v405
  %v1194 = vunpack.c.l.b16 %v406
  %v1195 = vunpack.c.h.b16 %v406
  %v1196 = vunpack.c.l.b16 %v407
  %v1197 = vunpack.c.h.b16 %v407
  %v1198 = vunpack.c.l.b16 %v408
  %v1199 = vunpack.c.h.b16 %v408
  %v1200 = vunpack.c.l.b16 %v409
  %v1201 = vunpack.c.h.b16 %v409
  %v1202 = vunpack.c.l.b16 %v410
  %v1203 = vunpack.c.h.b16 %v410
  %v1204 = vunpack.c.l.b16 %v411
  %v1205 = vunpack.c.h.b16 %v411
  %v1206 = vunpack.c.l.b16 %v412
  %v1207 = vunpack.c.h.b16 %v412
  %v1208 = vunpack.c.l.b16 %v413
  %v1209 = vunpack.c.h.b16 %v413
  %v1210 = vunpack.c.l.b16 %v414
  %v1211 = vunpack.c.h.b16 %v414
  %v1212 = vunpack.c.l.b16 %v415
  %v1213 = vunpack.c.h.b16 %v415
  %v1214 = vunpack.c.l.b16 %v416
  %v1215 = vunpack.c.h.b16 %v416
  %v1216 = vunpack.c.l.b16 %v417
  %v1217 = vunpack.c.h.b16 %v417
  %v1218 = vunpack.c.l.b16 %v418
  %v1219 = vunpack.c.h.b16 %v418
  %v1220 = vunpack.c.l.b16 %v419
  %v1221 = vunpack.c.h.b16 %v419
  %v1222 = vunpack.c.l.b16 %v420
  %v1223 = vunpack.c.h.b16 %v420
  %v1224 = vunpack.c.l.b16 %v421
  %v1225 = vunpack.c.h.b16 %v421
  %v1226 = vunpack.c.l.b16 %v422
  %v1227 = vunpack.c.h.b16 %v422
  %v1228 = vunpack.c.l.b16 %v423
  %v1229 = vunpack.c.h.b16 %v423
  %v1230 = vunpack.c.l.b16 %v424
  %v1231 = vunpack.c.h.b16 %v424
  %v1232 = vunpack.c.l.b16 %v425
  %v1233 = vunpack.c.h.b16 %v425
  %v1234 = vunpack.c.l.b16 %v426
  %v1235 = vunpack.c.h.b16 %v426
  %v1236 = vunpack.c.l.b16 %v427
  %v1237 = vunpack.c.h.b16 %v427
  %v1238 = vpack.c.b16 %v734, %v726
  %v1239 = vpack.c.b16 %v735, %v727
  %v1240 = vpack.c.b16 %v736, %v728
  %v1241 = vpack.c.b16 %v737, %v729
  %v1242 = vpack.c.b16 %v738, %v730
  %v1243 = vpack.c.b16 %v739, %v731
  %v1244 = vpack.c.b16 %v740, %v732
  %v1245 = vpack.c.b16 %v741, %v733
  %v1246 = vpack.c.b16 %v750, %v742
  %v1247 = vpack.c.b16 %v751, %v743
  %v1248 = vpack.c.b16 %v752, %v744
  %v1249 = vpack.c.b16 %v753, %v745
  %v1250 = vpack.c.b16 %v754, %v746
  %v1251 = vpack.c.b16 %v755, %v747
  %v1252 = vpack.c.b16 %v756, %v748
  %v1253 = vpack.c.b16 %v757, %v749
  %v1254 = vpack.c.b16 %v766, %v758
  %v1255 = vpack.c.b16 %v767, %v759
  %v1256 = vpack.c.b16 %v768, %v760
  %v1257 = vpack.c.b16 %v769, %v761
  %v1258 = vpack.c.b16 %v770, %v762
  %v1259 = vpack.c.b16 %v771, %v763
  %v1260 = vpack.c.b16 %v772, %v764
  %v1261 = vpack.c.b16 %v773, %v765
  %v1262 = vpack.c.b16 %v782, %v774
  %v1263 = vpack.c.b16 %v783, %v775
  %v1264 = vpack.c.b16 %v784, %v776
  %v1265 = vpack.c.b16 %v785, %v777
  %v1266 = vpack.c.b16 %v786, %v778
  %v1267 = vpack.c.b16 %v787, %v779
  %v1268 = vpack.c.b16 %v788, %v780
  %v1269 = vpack.c.b16 %v789, %v781
  %v1270 = vpack.c.b16 %v798, %v790
  %v1271 = vpack.c.b16 %v799, %v791
  %v1272 = vpack.c.b16 %v800, %v792
  %v1273 = vpack.c.b16 %v801, %v793
  %v1274 = vpack.c.b16 %v802, %v794
  %v1275 = vpack.c.b16 %v803, %v795
  %v1276 = vpack.c.b16 %v804, %v796
  %v1277 = vpack.c.b16 %v805, %v797
  %v1278 = vpack.c.b16 %v814, %v806
  %v1279 = vpack.c.b16 %v815, %v807
  %v1280 = vpack.c.b16 %v816, %v808
  %v1281 = vpack.c.b16 %v817, %v809
  %v1282 = vpack.c.b16 %v818, %v810
  %v1283 = vpack.c.b16 %v819, %v811
  %v1284 = vpack.c.b16 %v820, %v812
  %v1285 = vpack.c.b16 %v821, %v813
  %v1286 = vpack.c.b16 %v830, %v822
  %v1287 = vpack.c.b16 %v831, %v823
  %v1288 = vpack.c.b16 %v832, %v824
  %v1289 = vpack.c.b16 %v833, %v825
  %v1290 = vpack.c.b16 %v834, %v826
  %v1291 = vpack.c.b16 %v835, %v827
  %v1292 = vpack.c.b16 %v836, %v828
  %v1293 = vpack.c.b16 %v837, %v829
  %v1294 = vpack.c.b16 %v846, %v838
  %v1295 = vpack.c.b16 %v847, %v839
  %v1296 = vpack.c.b16 %v848, %v840
  %v1297 = vpack.c.b16 %v849, %v841
  %v1298 = vpack.c.b16 %v850, %v842
  %v1299 = vpack.c.b16 %v851, %v843
  %v1300 = vpack.c.b16 %v852, %v844
  %v1301 = vpack.c.b16 %v853, %v845
  %v1302 = vpack.c.b16 %v862, %v854
  %v1303 = vpack.c.b16 %v863, %v855
  %v1304 = vpack.c.b16 %v864, %v856
  %v1305 = vpack.c.b16 %v865, %v857
  %v1306 = vpack.c.b16 %v866, %v858
  %v1307 = vpack.c.b16 %v867, %v859
  %v1308 = vpack.c.b16 %v868, %v860
  %v1309 = vpack.c.b16 %v869, %v861
  %v1310 = vpack.c.b16 %v878, %v870
  %v1311 = vpack.c.b16 %v879, %v871
  %v1312 = vpack.c.b16 %v880, %v872
  %v1313 = vpack.c.b16 %v881, %v873
  %v1314 = vpack.c.b16 %v882, %v874
  %v1315 = vpack.c.b16 %v883, %v875
  %v1316 = vpack.c.b16 %v884, %v876
  %v1317 = vpack.c.b16 %v885, %v877
  %v1318 = vpack.c.b16 %v894, %v886
  %v1319 = vpack.c.b16 %v895, %v887
  %v1320 = vpack.c.b16 %v896, %v888
  %v1321 = vpack.c.b16 %v897, %v889
  %v1322 = vpack.c.b16 %v898, %v890
  %v1323 = vpack.c.b16 %v899, %v891
  %v1324 = vpack.c.b16 %v900, %v892
  %v1325 = vpack.c.b16 %v901, %v893
  %v1326 = vpack.c.b16 %v910, %v902
  %v1327 = vpack.c.b16 %v911, %v903
  %v1328 = vpack.c.b16 %v912, %v904
  %v1329 = vpack.c.b16 %v913, %v905
  %v1330 = vpack.c.b16 %v914, %v906
  %v1331 = vpack.c.b16 %v915, %v907
  %v1332 = vpack.c.b16 %v916, %v908
  %v1333 = vpack.c.b16 %v917, %v909
  %v1334 = vpack.c.b16 %v926, %v918
  %v1335 = vpack.c.b16 %v927, %v919
  %v1336 = vpack.c.b16 %v928, %v920
  %v1337 = vpack.c.b16 %v929, %v921
  %v1338 = vpack.c.b16 %v930, %v922
  %v1339 = vpack.c.b16 %v931, %v923
  %v1340 = vpack.c.b16 %v932, %v924
  %v1341 = vpack.c.b16 %v933, %v925
  %v1342 = vpack.c.b16 %v942, %v934
  %v1343 = vpack.c.b16 %v943, %v935
  %v1344 = vpack.c.b16 %v944, %v936
  %v1345 = vpack.c.b16 %v945, %v937
  %v1346 = vpack.c.b16 %v946, %v938
  %v1347 = vpack.c.b16 %v947, %v939
  %v1348 = vpack.c.b16 %v948, %v940
  %v1349 = vpack.c.b16 %v949, %v941
  %v1350 = vpack.c.b16 %v958, %v950
  %v1351 = vpack.c.b16 %v959, %v951
  %v1352 = vpack.c.b16 %v960, %v952
  %v1353 = vpack.c.b16 %v961, %v953
  %v1354 = vpack.c.b16 %v962, %v954
  %v1355 = vpack.c.b16 %v963, %v955
  %v1356 = vpack.c.b16 %v964, %v956
  %v1357 = vpack.c.b16 %v965, %v957
  %v1358 = vpack.c.b16 %v974, %v966
  %v1359 = vpack.c.b16 %v975, %v967
  %v1360 = vpack.c.b16 %v976, %v968
  %v1361 = vpack.c.b16 %v977, %v969
  %v1362 = vpack.c.b16 %v978, %v970
  %v1363 = vpack.c.b16 %v979, %v971
  %v1364 = vpack.c.b16 %v980, %v972
  %v1365 = vpack.c.b16 %v981, %v973
  %v1366 = vpack.c.b16 %v990, %v982
  %v1367 = vpack.c.b16 %v991, %v983
  %v1368 = vpack.c.b16 %v992, %v984
  %v1369 = vpack.c.b16 %v993, %v985
  %v1370 = vpack.c.b16 %v994, %v986
  %v1371 = vpack.c.b16 %v995, %v987
  %v1372 = vpack.c.b16 %v996, %v988
  %v1373 = vpack.c.b16 %v997, %v989
  %v1374 = vpack.c.b16 %v1006, %v998
  %v1375 = vpack.c.b16 %v1007, %v999
  %v1376 = vpack.c.b16 %v1008, %v1000
  %v1377 = vpack.c.b16 %v1009, %v1001
  %v1378 = vpack.c.b16 %v1010, %v1002
  %v1379 = vpack.c.b16 %v1011, %v1003
  %v1380 = vpack.c.b16 %v1012, %v1004
  %v1381 = vpack.c.b16 %v1013, %v1005
  %v1382 = vpack.c.b16 %v1022, %v1014
  %v1383 = vpack.c.b16 %v1023, %v1015
  %v1384 = vpack.c.b16 %v1024, %v1016
  %v1385 = vpack.c.b16 %v1025, %v1017
  %v1386 = vpack.c.b16 %v1026, %v1018
  %v1387 = vpack.c.b16 %v1027, %v1019
  %v1388 = vpack.c.b16 %v1028, %v1020
  %v1389 = vpack.c.b16 %v1029, %v1021
  %v1390 = vpack.c.b16 %v1038, %v1030
  %v1391 = vpack.c.b16 %v1039, %v1031
  %v1392 = vpack.c.b16 %v1040, %v1032
  %v1393 = vpack.c.b16 %v1041, %v1033
  %v1394 = vpack.c.b16 %v1042, %v1034
  %v1395 = vpack.c.b16 %v1043, %v1035
  %v1396 = vpack.c.b16 %v1044, %v1036
  %v1397 = vpack.c.b16 %v1045, %v1037
  %v1398 = vpack.c.b16 %v1054, %v1046
  %v1399 = vpack.c.b16 %v1055, %v1047
  %v1400 = vpack.c.b16 %v1056, %v1048
  %v1401 = vpack.c.b16 %v1057, %v1049
  %v1402 = vpack.c.b16 %v1058, %v1050
  %v1403 = vpack.c.b16 %v1059, %v1051
  %v1404 = vpack.c.b16 %v1060, %v1052
  %v1405 = vpack.c.b16 %v1061, %v1053
  %v1406 = vpack.c.b16 %v1070, %v1062
  %v1407 = vpack.c.b16 %v1071, %v1063
  %v1408 = vpack.c.b16 %v1072, %v1064
  %v1409 = vpack.c.b16 %v1073, %v1065
  %v1410 = vpack.c.b16 %v1074, %v1066
  %v1411 = vpack.c.b16 %v1075, %v1067
  %v1412 = vpack.c.b16 %v1076, %v1068
  %v1413 = vpack.c.b16 %v1077, %v1069
  %v1414 = vpack.c.b16 %v1086, %v1078
  %v1415 = vpack.c.b16 %v1087, %v1079
  %v1416 = vpack.c.b16 %v1088, %v1080
  %v1417 = vpack.c.b16 %v1089, %v1081
  %v1418 = vpack.c.b16 %v1090, %v1082
  %v1419 = vpack.c.b16 %v1091, %v1083
  %v1420 = vpack.c.b16 %v1092, %v1084
  %v1421 = vpack.c.b16 %v1093, %v1085
  %v1422 = vpack.c.b16 %v1102, %v1094
  %v1423 = vpack.c.b16 %v1103, %v1095
  %v1424 = vpack.c.b16 %v1104, %v1096
  %v1425 = vpack.c.b16 %v1105, %v1097
  %v1426 = vpack.c.b16 %v1106, %v1098
  %v1427 = vpack.c.b16 %v1107, %v1099
  %v1428 = vpack.c.b16 %v1108, %v1100
  %v1429 = vpack.c.b16 %v1109, %v1101
  %v1430 = vpack.c.b16 %v1118, %v1110
  %v1431 = vpack.c.b16 %v1119, %v1111
  %v1432 = vpack.c.b16 %v1120, %v1112
  %v1433 = vpack.c.b16 %v1121, %v1113
  %v1434 = vpack.c.b16 %v1122, %v1114
  %v1435 = vpack.c.b16 %v1123, %v1115
  %v1436 = vpack.c.b16 %v1124, %v1116
  %v1437 = vpack.c.b16 %v1125, %v1117
  %v1438 = vpack.c.b16 %v1134, %v1126
  %v1439 = vpack.c.b16 %v1135, %v1127
  %v1440 = vpack.c.b16 %v1136, %v1128
  %v1441 = vpack.c.b16 %v1137, %v1129
  %v1442 = vpack.c.b16 %v1138, %v1130
  %v1443 = vpack.c.b16 %v1139, %v1131
  %v1444 = vpack.c.b16 %v1140, %v1132
  %v1445 = vpack.c.b16 %v1141, %v1133
  %v1446 = vpack.c.b16 %v1150, %v1142
  %v1447 = vpack.c.b16 %v1151, %v1143
  %v1448 = vpack.c.b16 %v1152, %v1144
  %v1449 = vpack.c.b16 %v1153, %v1145
  %v1450 = vpack.c.b16 %v1154, %v1146
  %v1451 = vpack.c.b16 %v1155, %v1147
  %v1452 = vpack.c.b16 %v1156, %v1148
  %v1453 = vpack.c.b16 %v1157, %v1149
  %v1454 = vpack.c.b16 %v1166, %v1158
  %v1455 = vpack.c.b16 %v1167, %v1159
  %v1456 = vpack.c.b16 %v1168, %v1160
  %v1457 = vpack.c.b16 %v1169, %v1161
  %v1458 = vpack.c.b16 %v1170, %v1162
  %v1459 = vpack.c.b16 %v1171, %v1163
  %v1460 = vpack.c.b16 %v1172, %v1164
  %v1461 = vpack.c.b16 %v1173, %v1165
  %v1462 = vpack.c.b16 %v1182, %v1174
  %v1463 = vpack.c.b16 %v1183, %v1175
  %v1464 = vpack.c.b16 %v1184, %v1176
  %v1465 = vpack.c.b16 %v1185, %v1177
  %v1466 = vpack.c.b16 %v1186, %v1178
  %v1467 = vpack.c.b16 %v1187, %v1179
  %v1468 = vpack.c.b16 %v1188, %v1180
  %v1469 = vpack.c.b16 %v1189, %v1181
  %v1470 = vpack.c.b16 %v1198, %v1190
  %v1471 = vpack.c.b16 %v1199, %v1191
  %v1472 = vpack.c.b16 %v1200, %v1192
  %v1473 = vpack.c.b16 %v1201, %v1193
  %v1474 = vpack.c.b16 %v1202, %v1194
  %v1475 = vpack.c.b16 %v1203, %v1195
  %v1476 = vpack.c.b16 %v1204, %v1196
  %v1477 = vpack.c.b16 %v1205, %v1197
  %v1478 = vpack.c.b16 %v1214, %v1206
  %v1479 = vpack.c.b16 %v1215, %v1207
  %v1480 = vpack.c.b16 %v1216, %v1208
  %v1481 = vpack.c.b16 %v1217, %v1209
  %v1482 = vpack.c.b16 %v1218, %v1210
  %v1483 = vpack.c.b16 %v1219, %v1211
  %v1484 = vpack.c.b16 %v1220, %v1212
  %v1485 = vpack.c.b16 %v1221, %v1213
  %v1486 = vpack.c.b16 %v1230, %v1222
  %v1487 = vpack.c.b16 %v1231, %v1223
  %v1488 = vpack.c.b16 %v1232, %v1224
  %v1489 = vpack.c.b16 %v1233, %v1225
  %v1490 = vpack.c.b16 %v1234, %v1226
  %v1491 = vpack.c.b16 %v1235, %v1227
  %v1492 = vpack.c.b16 %v1236, %v1228
  %v1493 = vpack.c.b16 %v1237, %v1229
  %1750 = vmatprep.subr.bf16.mxu0 %v1239
  %1751 = vmatpush1.bf16.msra.mxu0 %v1238
  %1752 = vmatprep.subr.bf16.mxu0 %v1247
  %1753 = vmatpush1.bf16.msra.mxu0 %v1246
  %1754 = vmatprep.subr.bf16.mxu0 %v1255
  %1755 = vmatpush1.bf16.msra.mxu0 %v1254
  %1756 = vmatprep.subr.bf16.mxu0 %v1263
  %1757 = vmatpush1.bf16.msra.mxu0 %v1262
  %1758 = vmatprep.subr.bf16.mxu0 %v1271
  %1759 = vmatpush1.bf16.msra.mxu0 %v1270
  %1760 = vmatprep.subr.bf16.mxu0 %v1279
  %1761 = vmatpush1.bf16.msra.mxu0 %v1278
  %1762 = vmatprep.subr.bf16.mxu0 %v1287
  %1763 = vmatpush1.bf16.msra.mxu0 %v1286
  %1764 = vmatprep.subr.bf16.mxu0 %v1295
  %1765 = vmatpush1.bf16.msra.mxu0 %v1294
  %1766 = vmatprep.subr.bf16.mxu0 %v1303
  %1767 = vmatpush1.bf16.msra.mxu0 %v1302
  %1768 = vmatprep.subr.bf16.mxu0 %v1311
  %1769 = vmatpush1.bf16.msra.mxu0 %v1310
  %1770 = vmatprep.subr.bf16.mxu0 %v1319
  %1771 = vmatpush1.bf16.msra.mxu0 %v1318
  %1772 = vmatprep.subr.bf16.mxu0 %v1327
  %1773 = vmatpush1.bf16.msra.mxu0 %v1326
  %1774 = vmatprep.subr.bf16.mxu0 %v1335
  %1775 = vmatpush1.bf16.msra.mxu0 %v1334
  %1776 = vmatprep.subr.bf16.mxu0 %v1343
  %1777 = vmatpush1.bf16.msra.mxu0 %v1342
  %1778 = vmatprep.subr.bf16.mxu0 %v1351
  %1779 = vmatpush1.bf16.msra.mxu0 %v1350
  %1780 = vmatprep.subr.bf16.mxu0 %v1359
  %1781 = vmatpush1.bf16.msra.mxu0 %v1358
  %1782 = vmatprep.mubr.bf16.mxu0 %v169
  %1783 = vmatmul.mubr.bf16.gmra.mrb[0].mxu0 %v168
  %v1784 = vpop.f32.mrb[0].mxu0
  %v1785 = vadd.f32 %v433, %v1784
  %v1786 = vpop.f32.mrb[0].mxu0
  %v1787 = vadd.f32 %v437, %v1786
  %v1788 = vpop.f32.mrb[0].mxu0
  %v1789 = vpop.f32.mrb[0].mxu0
  %1790 = vdwg.mxu0
  %1791 = vmatprep.subr.bf16.mxu0 %v1367
  %1792 = vmatpush1.bf16.msra.mxu0 %v1366
  %1793 = vmatprep.subr.bf16.mxu0 %v1375
  %1794 = vmatpush1.bf16.msra.mxu0 %v1374
  %1795 = vmatprep.subr.bf16.mxu0 %v1383
  %1796 = vmatpush1.bf16.msra.mxu0 %v1382
  %1797 = vmatprep.subr.bf16.mxu0 %v1391
  %1798 = vmatpush1.bf16.msra.mxu0 %v1390
  %1799 = vmatprep.subr.bf16.mxu0 %v1399
  %1800 = vmatpush1.bf16.msra.mxu0 %v1398
  %1801 = vmatprep.subr.bf16.mxu0 %v1407
  %1802 = vmatpush1.bf16.msra.mxu0 %v1406
  %1803 = vmatprep.subr.bf16.mxu0 %v1415
  %1804 = vmatpush1.bf16.msra.mxu0 %v1414
  %1805 = vmatprep.subr.bf16.mxu0 %v1423
  %1806 = vmatpush1.bf16.msra.mxu0 %v1422
  %1807 = vmatprep.subr.bf16.mxu0 %v1431
  %1808 = vmatpush1.bf16.msra.mxu0 %v1430
  %1809 = vmatprep.subr.bf16.mxu0 %v1439
  %1810 = vmatpush1.bf16.msra.mxu0 %v1438
  %1811 = vmatprep.subr.bf16.mxu0 %v1447
  %1812 = vmatpush1.bf16.msra.mxu0 %v1446
  %1813 = vmatprep.subr.bf16.mxu0 %v1455
  %1814 = vmatpush1.bf16.msra.mxu0 %v1454
  %1815 = vmatprep.subr.bf16.mxu0 %v1463
  %1816 = vmatpush1.bf16.msra.mxu0 %v1462
  %1817 = vmatprep.subr.bf16.mxu0 %v1471
  %1818 = vmatpush1.bf16.msra.mxu0 %v1470
  %1819 = vmatprep.subr.bf16.mxu0 %v1479
  %1820 = vmatpush1.bf16.msra.mxu0 %v1478
  %1821 = vmatprep.subr.bf16.mxu0 %v1487
  %1822 = vmatpush1.bf16.msra.mxu0 %v1486
  %1823 = vmatprep.mubr.bf16.mxu0 %v171
  %1824 = vmatmul.mubr.bf16.gmra.mrb[0].mxu0 %v170
  %v1825 = vpop.f32.mrb[0].mxu0
  %v1826 = vadd.f32 %v1785, %v1825
  %v1827 = vpop.f32.mrb[0].mxu0
  %v1828 = vadd.f32 %v1787, %v1827
  %v1829 = vpop.f32.mrb[0].mxu0
  %v1830 = vpop.f32.mrb[0].mxu0
  %1831 = vdwg.mxu0
  %1832 = vmatprep.subr.bf16.mxu0 %v1241
  %1833 = vmatpush1.bf16.msra.mxu0 %v1240
  %1834 = vmatprep.subr.bf16.mxu0 %v1249
  %1835 = vmatpush1.bf16.msra.mxu0 %v1248
  %1836 = vmatprep.subr.bf16.mxu0 %v1257
  %1837 = vmatpush1.bf16.msra.mxu0 %v1256
  %1838 = vmatprep.subr.bf16.mxu0 %v1265
  %1839 = vmatpush1.bf16.msra.mxu0 %v1264
  %1840 = vmatprep.subr.bf16.mxu0 %v1273
  %1841 = vmatpush1.bf16.msra.mxu0 %v1272
  %1842 = vmatprep.subr.bf16.mxu0 %v1281
  %1843 = vmatpush1.bf16.msra.mxu0 %v1280
  %1844 = vmatprep.subr.bf16.mxu0 %v1289
  %1845 = vmatpush1.bf16.msra.mxu0 %v1288
  %1846 = vmatprep.subr.bf16.mxu0 %v1297
  %1847 = vmatpush1.bf16.msra.mxu0 %v1296
  %1848 = vmatprep.subr.bf16.mxu0 %v1305
  %1849 = vmatpush1.bf16.msra.mxu0 %v1304
  %1850 = vmatprep.subr.bf16.mxu0 %v1313
  %1851 = vmatpush1.bf16.msra.mxu0 %v1312
  %1852 = vmatprep.subr.bf16.mxu0 %v1321
  %1853 = vmatpush1.bf16.msra.mxu0 %v1320
  %1854 = vmatprep.subr.bf16.mxu0 %v1329
  %1855 = vmatpush1.bf16.msra.mxu0 %v1328
  %1856 = vmatprep.subr.bf16.mxu0 %v1337
  %1857 = vmatpush1.bf16.msra.mxu0 %v1336
  %1858 = vmatprep.subr.bf16.mxu0 %v1345
  %1859 = vmatpush1.bf16.msra.mxu0 %v1344
  %1860 = vmatprep.subr.bf16.mxu0 %v1353
  %1861 = vmatpush1.bf16.msra.mxu0 %v1352
  %1862 = vmatprep.subr.bf16.mxu0 %v1361
  %1863 = vmatpush1.bf16.msra.mxu0 %v1360
  %1864 = vmatprep.mubr.bf16.mxu0 %v169
  %1865 = vmatmul.mubr.bf16.gmra.mrb[0].mxu0 %v168
  %v1866 = vpop.f32.mrb[0].mxu0
  %v1867 = vadd.f32 %v441, %v1866
  %v1868 = vpop.f32.mrb[0].mxu0
  %v1869 = vadd.f32 %v445, %v1868
  %v1870 = vpop.f32.mrb[0].mxu0
  %v1871 = vpop.f32.mrb[0].mxu0
  %1872 = vdwg.mxu0
  %1873 = vmatprep.subr.bf16.mxu0 %v1369
  %1874 = vmatpush1.bf16.msra.mxu0 %v1368
  %1875 = vmatprep.subr.bf16.mxu0 %v1377
  %1876 = vmatpush1.bf16.msra.mxu0 %v1376
  %1877 = vmatprep.subr.bf16.mxu0 %v1385
  %1878 = vmatpush1.bf16.msra.mxu0 %v1384
  %1879 = vmatprep.subr.bf16.mxu0 %v1393
  %1880 = vmatpush1.bf16.msra.mxu0 %v1392
  %1881 = vmatprep.subr.bf16.mxu0 %v1401
  %1882 = vmatpush1.bf16.msra.mxu0 %v1400
  %1883 = vmatprep.subr.bf16.mxu0 %v1409
  %1884 = vmatpush1.bf16.msra.mxu0 %v1408
  %1885 = vmatprep.subr.bf16.mxu0 %v1417
  %1886 = vmatpush1.bf16.msra.mxu0 %v1416
  %1887 = vmatprep.subr.bf16.mxu0 %v1425
  %1888 = vmatpush1.bf16.msra.mxu0 %v1424
  %1889 = vmatprep.subr.bf16.mxu0 %v1433
  %1890 = vmatpush1.bf16.msra.mxu0 %v1432
  %1891 = vmatprep.subr.bf16.mxu0 %v1441
  %1892 = vmatpush1.bf16.msra.mxu0 %v1440
  %1893 = vmatprep.subr.bf16.mxu0 %v1449
  %1894 = vmatpush1.bf16.msra.mxu0 %v1448
  %1895 = vmatprep.subr.bf16.mxu0 %v1457
  %1896 = vmatpush1.bf16.msra.mxu0 %v1456
  %1897 = vmatprep.subr.bf16.mxu0 %v1465
  %1898 = vmatpush1.bf16.msra.mxu0 %v1464
  %1899 = vmatprep.subr.bf16.mxu0 %v1473
  %1900 = vmatpush1.bf16.msra.mxu0 %v1472
  %1901 = vmatprep.subr.bf16.mxu0 %v1481
  %1902 = vmatpush1.bf16.msra.mxu0 %v1480
  %1903 = vmatprep.subr.bf16.mxu0 %v1489
  %1904 = vmatpush1.bf16.msra.mxu0 %v1488
  %1905 = vmatprep.mubr.bf16.mxu0 %v171
  %1906 = vmatmul.mubr.bf16.gmra.mrb[0].mxu0 %v170
  %v1907 = vpop.f32.mrb[0].mxu0
  %v1908 = vadd.f32 %v1867, %v1907
  %v1909 = vpop.f32.mrb[0].mxu0
  %v1910 = vadd.f32 %v1869, %v1909
  %v1911 = vpop.f32.mrb[0].mxu0
  %v1912 = vpop.f32.mrb[0].mxu0
  %1913 = vdwg.mxu0
  %1914 = vmatprep.subr.bf16.mxu0 %v1243
  %1915 = vmatpush1.bf16.msra.mxu0 %v1242
  %1916 = vmatprep.subr.bf16.mxu0 %v1251
  %1917 = vmatpush1.bf16.msra.mxu0 %v1250
  %1918 = vmatprep.subr.bf16.mxu0 %v1259
  %1919 = vmatpush1.bf16.msra.mxu0 %v1258
  %1920 = vmatprep.subr.bf16.mxu0 %v1267
  %1921 = vmatpush1.bf16.msra.mxu0 %v1266
  %1922 = vmatprep.subr.bf16.mxu0 %v1275
  %1923 = vmatpush1.bf16.msra.mxu0 %v1274
  %1924 = vmatprep.subr.bf16.mxu0 %v1283
  %1925 = vmatpush1.bf16.msra.mxu0 %v1282
  %1926 = vmatprep.subr.bf16.mxu0 %v1291
  %1927 = vmatpush1.bf16.msra.mxu0 %v1290
  %1928 = vmatprep.subr.bf16.mxu0 %v1299
  %1929 = vmatpush1.bf16.msra.mxu0 %v1298
  %1930 = vmatprep.subr.bf16.mxu0 %v1307
  %1931 = vmatpush1.bf16.msra.mxu0 %v1306
  %1932 = vmatprep.subr.bf16.mxu0 %v1315
  %1933 = vmatpush1.bf16.msra.mxu0 %v1314
  %1934 = vmatprep.subr.bf16.mxu0 %v1323
  %1935 = vmatpush1.bf16.msra.mxu0 %v1322
  %1936 = vmatprep.subr.bf16.mxu0 %v1331
  %1937 = vmatpush1.bf16.msra.mxu0 %v1330
  %1938 = vmatprep.subr.bf16.mxu0 %v1339
  %1939 = vmatpush1.bf16.msra.mxu0 %v1338
  %1940 = vmatprep.subr.bf16.mxu0 %v1347
  %1941 = vmatpush1.bf16.msra.mxu0 %v1346
  %1942 = vmatprep.subr.bf16.mxu0 %v1355
  %1943 = vmatpush1.bf16.msra.mxu0 %v1354
  %1944 = vmatprep.subr.bf16.mxu0 %v1363
  %1945 = vmatpush1.bf16.msra.mxu0 %v1362
  %1946 = vmatprep.mubr.bf16.mxu0 %v169
  %1947 = vmatmul.mubr.bf16.gmra.mrb[0].mxu0 %v168
  %v1948 = vpop.f32.mrb[0].mxu0
  %v1949 = vadd.f32 %v449, %v1948
  %v1950 = vpop.f32.mrb[0].mxu0
  %v1951 = vadd.f32 %v453, %v1950
  %v1952 = vpop.f32.mrb[0].mxu0
  %v1953 = vpop.f32.mrb[0].mxu0
  %1954 = vdwg.mxu0
  %1955 = vmatprep.subr.bf16.mxu0 %v1371
  %1956 = vmatpush1.bf16.msra.mxu0 %v1370
  %1957 = vmatprep.subr.bf16.mxu0 %v1379
  %1958 = vmatpush1.bf16.msra.mxu0 %v1378
  %1959 = vmatprep.subr.bf16.mxu0 %v1387
  %1960 = vmatpush1.bf16.msra.mxu0 %v1386
  %1961 = vmatprep.subr.bf16.mxu0 %v1395
  %1962 = vmatpush1.bf16.msra.mxu0 %v1394
  %1963 = vmatprep.subr.bf16.mxu0 %v1403
  %1964 = vmatpush1.bf16.msra.mxu0 %v1402
  %1965 = vmatprep.subr.bf16.mxu0 %v1411
  %1966 = vmatpush1.bf16.msra.mxu0 %v1410
  %1967 = vmatprep.subr.bf16.mxu0 %v1419
  %1968 = vmatpush1.bf16.msra.mxu0 %v1418
  %1969 = vmatprep.subr.bf16.mxu0 %v1427
  %1970 = vmatpush1.bf16.msra.mxu0 %v1426
  %1971 = vmatprep.subr.bf16.mxu0 %v1435
  %1972 = vmatpush1.bf16.msra.mxu0 %v1434
  %1973 = vmatprep.subr.bf16.mxu0 %v1443
  %1974 = vmatpush1.bf16.msra.mxu0 %v1442
  %1975 = vmatprep.subr.bf16.mxu0 %v1451
  %1976 = vmatpush1.bf16.msra.mxu0 %v1450
  %1977 = vmatprep.subr.bf16.mxu0 %v1459
  %1978 = vmatpush1.bf16.msra.mxu0 %v1458
  %1979 = vmatprep.subr.bf16.mxu0 %v1467
  %1980 = vmatpush1.bf16.msra.mxu0 %v1466
  %1981 = vmatprep.subr.bf16.mxu0 %v1475
  %1982 = vmatpush1.bf16.msra.mxu0 %v1474
  %1983 = vmatprep.subr.bf16.mxu0 %v1483
  %1984 = vmatpush1.bf16.msra.mxu0 %v1482
  %1985 = vmatprep.subr.bf16.mxu0 %v1491
  %1986 = vmatpush1.bf16.msra.mxu0 %v1490
  %1987 = vmatprep.mubr.bf16.mxu0 %v171
  %1988 = vmatmul.mubr.bf16.gmra.mrb[0].mxu0 %v170
  %v1989 = vpop.f32.mrb[0].mxu0
  %v1990 = vadd.f32 %v1949, %v1989
  %v1991 = vpop.f32.mrb[0].mxu0
  %v1992 = vadd.f32 %v1951, %v1991
  %v1993 = vpop.f32.mrb[0].mxu0
  %v1994 = vpop.f32.mrb[0].mxu0
  %1995 = vdwg.mxu0
  %1996 = vmatprep.subr.bf16.mxu0 %v1245
  %1997 = vmatpush1.bf16.msra.mxu0 %v1244
  %1998 = vmatprep.subr.bf16.mxu0 %v1253
  %1999 = vmatpush1.bf16.msra.mxu0 %v1252
  %2000 = vmatprep.subr.bf16.mxu0 %v1261
  %2001 = vmatpush1.bf16.msra.mxu0 %v1260
  %2002 = vmatprep.subr.bf16.mxu0 %v1269
  %2003 = vmatpush1.bf16.msra.mxu0 %v1268
  %2004 = vmatprep.subr.bf16.mxu0 %v1277
  %2005 = vmatpush1.bf16.msra.mxu0 %v1276
  %2006 = vmatprep.subr.bf16.mxu0 %v1285
  %2007 = vmatpush1.bf16.msra.mxu0 %v1284
  %2008 = vmatprep.subr.bf16.mxu0 %v1293
  %2009 = vmatpush1.bf16.msra.mxu0 %v1292
  %2010 = vmatprep.subr.bf16.mxu0 %v1301
  %2011 = vmatpush1.bf16.msra.mxu0 %v1300
  %2012 = vmatprep.subr.bf16.mxu0 %v1309
  %2013 = vmatpush1.bf16.msra.mxu0 %v1308
  %2014 = vmatprep.subr.bf16.mxu0 %v1317
  %2015 = vmatpush1.bf16.msra.mxu0 %v1316
  %2016 = vmatprep.subr.bf16.mxu0 %v1325
  %2017 = vmatpush1.bf16.msra.mxu0 %v1324
  %2018 = vmatprep.subr.bf16.mxu0 %v1333
  %2019 = vmatpush1.bf16.msra.mxu0 %v1332
  %2020 = vmatprep.subr.bf16.mxu0 %v1341
  %2021 = vmatpush1.bf16.msra.mxu0 %v1340
  %2022 = vmatprep.subr.bf16.mxu0 %v1349
  %2023 = vmatpush1.bf16.msra.mxu0 %v1348
  %2024 = vmatprep.subr.bf16.mxu0 %v1357
  %2025 = vmatpush1.bf16.msra.mxu0 %v1356
  %2026 = vmatprep.subr.bf16.mxu0 %v1365
  %2027 = vmatpush1.bf16.msra.mxu0 %v1364
  %2028 = vmatprep.mubr.bf16.mxu0 %v169
  %2029 = vmatmul.mubr.bf16.gmra.mrb[0].mxu0 %v168
  %v2030 = vpop.f32.mrb[0].mxu0
  %v2031 = vadd.f32 %v457, %v2030
  %v2032 = vpop.f32.mrb[0].mxu0
  %v2033 = vadd.f32 %v461, %v2032
  %v2034 = vpop.f32.mrb[0].mxu0
  %v2035 = vpop.f32.mrb[0].mxu0
  %2036 = vdwg.mxu0
  %2037 = vmatprep.subr.bf16.mxu0 %v1373
  %2038 = vmatpush1.bf16.msra.mxu0 %v1372
  %2039 = vmatprep.subr.bf16.mxu0 %v1381
  %2040 = vmatpush1.bf16.msra.mxu0 %v1380
  %2041 = vmatprep.subr.bf16.mxu0 %v1389
  %2042 = vmatpush1.bf16.msra.mxu0 %v1388
  %2043 = vmatprep.subr.bf16.mxu0 %v1397
  %2044 = vmatpush1.bf16.msra.mxu0 %v1396
  %2045 = vmatprep.subr.bf16.mxu0 %v1405
  %2046 = vmatpush1.bf16.msra.mxu0 %v1404
  %2047 = vmatprep.subr.bf16.mxu0 %v1413
  %2048 = vmatpush1.bf16.msra.mxu0 %v1412
  %2049 = vmatprep.subr.bf16.mxu0 %v1421
  %2050 = vmatpush1.bf16.msra.mxu0 %v1420
  %2051 = vmatprep.subr.bf16.mxu0 %v1429
  %2052 = vmatpush1.bf16.msra.mxu0 %v1428
  %2053 = vmatprep.subr.bf16.mxu0 %v1437
  %2054 = vmatpush1.bf16.msra.mxu0 %v1436
  %2055 = vmatprep.subr.bf16.mxu0 %v1445
  %2056 = vmatpush1.bf16.msra.mxu0 %v1444
  %2057 = vmatprep.subr.bf16.mxu0 %v1453
  %2058 = vmatpush1.bf16.msra.mxu0 %v1452
  %2059 = vmatprep.subr.bf16.mxu0 %v1461
  %2060 = vmatpush1.bf16.msra.mxu0 %v1460
  %2061 = vmatprep.subr.bf16.mxu0 %v1469
  %2062 = vmatpush1.bf16.msra.mxu0 %v1468
  %2063 = vmatprep.subr.bf16.mxu0 %v1477
  %2064 = vmatpush1.bf16.msra.mxu0 %v1476
  %2065 = vmatprep.subr.bf16.mxu0 %v1485
  %2066 = vmatpush1.bf16.msra.mxu0 %v1484
  %2067 = vmatprep.subr.bf16.mxu0 %v1493
  %2068 = vmatpush1.bf16.msra.mxu0 %v1492
  %2069 = vmatprep.mubr.bf16.mxu0 %v171
  %2070 = vmatmul.mubr.bf16.gmra.mrb[0].mxu0 %v170
  %v2071 = vpop.f32.mrb[0].mxu0
  %v2072 = vadd.f32 %v2031, %v2071
  %v2073 = vpop.f32.mrb[0].mxu0
  %v2074 = vadd.f32 %v2033, %v2073
  %v2075 = vpop.f32.mrb[0].mxu0
  %v2076 = vpop.f32.mrb[0].mxu0
  %2077 = vdwg.mxu0
  %v2078 = vmax.f32 %v1826, 0.0
  %v2079 = vmax.f32 %v1828, 0.0
  %v2080 = vmax.f32 %v1908, 0.0
  %v2081 = vmax.f32 %v1910, 0.0
  %v2082 = vmax.f32 %v1990, 0.0
  %v2083 = vmax.f32 %v1992, 0.0
  %v2084 = vmax.f32 %v2072, 0.0
  %v2085 = vmax.f32 %v2074, 0.0
  %v2086 = vpack.c.bf16 %v2078, %v2078
  %v2087 = vpack.c.bf16 %v2079, %v2079
  %v2088 = vpack.c.bf16 %v2080, %v2080
  %v2089 = vpack.c.bf16 %v2081, %v2081
  %v2090 = vpack.c.bf16 %v2082, %v2082
  %v2091 = vpack.c.bf16 %v2083, %v2083
  %v2092 = vpack.c.bf16 %v2084, %v2084
  %v2093 = vpack.c.bf16 %v2085, %v2085
  %v2094 = vld [vmem:[%s5] sm:$0xff]
  %v2095 = vld [vmem:[%s5 + $0x8] sm:$0xff]
  %v2096 = vld [vmem:[%s5 + $0x10] sm:$0xff]
  %v2097 = vld [vmem:[%s5 + $0x18] sm:$0xff]
  %v2098 = vld [vmem:[%s5 + $0x20] sm:$0xff]
  %v2099 = vld [vmem:[%s5 + $0x28] sm:$0xff]
  %v2100 = vld [vmem:[%s5 + $0x30] sm:$0xff]
  %v2101 = vld [vmem:[%s5 + $0x38] sm:$0xff]
  %v2102 = vld [vmem:[%s5 + $0x40] sm:$0xff]
  %v2103 = vld [vmem:[%s5 + $0x48] sm:$0xff]
  %v2104 = vld [vmem:[%s5 + $0x50] sm:$0xff]
  %v2105 = vld [vmem:[%s5 + $0x58] sm:$0xff]
  %v2106 = vld [vmem:[%s5 + $0x60] sm:$0xff]
  %v2107 = vld [vmem:[%s5 + $0x68] sm:$0xff]
  %v2108 = vld [vmem:[%s5 + $0x70] sm:$0xff]
  %v2109 = vld [vmem:[%s5 + $0x78] sm:$0xff]
  %v2110 = vld [vmem:[%s5 + $0x80] sm:$0xff]
  %v2111 = vld [vmem:[%s5 + $0x88] sm:$0xff]
  %v2112 = vld [vmem:[%s5 + $0x90] sm:$0xff]
  %v2113 = vld [vmem:[%s5 + $0x98] sm:$0xff]
  %v2114 = vld [vmem:[%s5 + $0xa0] sm:$0xff]
  %v2115 = vld [vmem:[%s5 + $0xa8] sm:$0xff]
  %v2116 = vld [vmem:[%s5 + $0xb0] sm:$0xff]
  %v2117 = vld [vmem:[%s5 + $0xb8] sm:$0xff]
  %v2118 = vld [vmem:[%s5 + $0xc0] sm:$0xff]
  %v2119 = vld [vmem:[%s5 + $0xc8] sm:$0xff]
  %v2120 = vld [vmem:[%s5 + $0xd0] sm:$0xff]
  %v2121 = vld [vmem:[%s5 + $0xd8] sm:$0xff]
  %v2122 = vld [vmem:[%s5 + $0xe0] sm:$0xff]
  %v2123 = vld [vmem:[%s5 + $0xe8] sm:$0xff]
  %v2124 = vld [vmem:[%s5 + $0xf0] sm:$0xff]
  %v2125 = vld [vmem:[%s5 + $0xf8] sm:$0xff]
  %v2126 = vld [vmem:[%s5 + $0x100] sm:$0xff]
  %v2127 = vld [vmem:[%s5 + $0x108] sm:$0xff]
  %v2128 = vld [vmem:[%s5 + $0x110] sm:$0xff]
  %v2129 = vld [vmem:[%s5 + $0x118] sm:$0xff]
  %v2130 = vld [vmem:[%s5 + $0x120] sm:$0xff]
  %v2131 = vld [vmem:[%s5 + $0x128] sm:$0xff]
  %v2132 = vld [vmem:[%s5 + $0x130] sm:$0xff]
  %v2133 = vld [vmem:[%s5 + $0x138] sm:$0xff]
  %v2134 = vld [vmem:[%s5 + $0x140] sm:$0xff]
  %v2135 = vld [vmem:[%s5 + $0x148] sm:$0xff]
  %v2136 = vld [vmem:[%s5 + $0x150] sm:$0xff]
  %v2137 = vld [vmem:[%s5 + $0x158] sm:$0xff]
  %v2138 = vld [vmem:[%s5 + $0x160] sm:$0xff]
  %v2139 = vld [vmem:[%s5 + $0x168] sm:$0xff]
  %v2140 = vld [vmem:[%s5 + $0x170] sm:$0xff]
  %v2141 = vld [vmem:[%s5 + $0x178] sm:$0xff]
  %v2142 = vld [vmem:[%s5 + $0x180] sm:$0xff]
  %v2143 = vld [vmem:[%s5 + $0x188] sm:$0xff]
  %v2144 = vld [vmem:[%s5 + $0x190] sm:$0xff]
  %v2145 = vld [vmem:[%s5 + $0x198] sm:$0xff]
  %v2146 = vld [vmem:[%s5 + $0x1a0] sm:$0xff]
  %v2147 = vld [vmem:[%s5 + $0x1a8] sm:$0xff]
  %v2148 = vld [vmem:[%s5 + $0x1b0] sm:$0xff]
  %v2149 = vld [vmem:[%s5 + $0x1b8] sm:$0xff]
  %v2150 = vld [vmem:[%s5 + $0x1c0] sm:$0xff]
  %v2151 = vld [vmem:[%s5 + $0x1c8] sm:$0xff]
  %v2152 = vld [vmem:[%s5 + $0x1d0] sm:$0xff]
  %v2153 = vld [vmem:[%s5 + $0x1d8] sm:$0xff]
  %v2154 = vld [vmem:[%s5 + $0x1e0] sm:$0xff]
  %v2155 = vld [vmem:[%s5 + $0x1e8] sm:$0xff]
  %v2156 = vld [vmem:[%s5 + $0x1f0] sm:$0xff]
  %v2157 = vld [vmem:[%s5 + $0x1f8] sm:$0xff]
  %v2158 = vld [vmem:[%s5 + $0x200] sm:$0xff]
  %v2159 = vld [vmem:[%s5 + $0x208] sm:$0xff]
  %v2160 = vld [vmem:[%s5 + $0x210] sm:$0xff]
  %v2161 = vld [vmem:[%s5 + $0x218] sm:$0xff]
  %v2162 = vld [vmem:[%s5 + $0x220] sm:$0xff]
  %v2163 = vld [vmem:[%s5 + $0x228] sm:$0xff]
  %v2164 = vld [vmem:[%s5 + $0x230] sm:$0xff]
  %v2165 = vld [vmem:[%s5 + $0x238] sm:$0xff]
  %v2166 = vld [vmem:[%s5 + $0x240] sm:$0xff]
  %v2167 = vld [vmem:[%s5 + $0x248] sm:$0xff]
  %v2168 = vld [vmem:[%s5 + $0x250] sm:$0xff]
  %v2169 = vld [vmem:[%s5 + $0x258] sm:$0xff]
  %v2170 = vld [vmem:[%s5 + $0x260] sm:$0xff]
  %v2171 = vld [vmem:[%s5 + $0x268] sm:$0xff]
  %v2172 = vld [vmem:[%s5 + $0x270] sm:$0xff]
  %v2173 = vld [vmem:[%s5 + $0x278] sm:$0xff]
  %v2174 = vld [vmem:[%s5 + $0x280] sm:$0xff]
  %v2175 = vld [vmem:[%s5 + $0x288] sm:$0xff]
  %v2176 = vld [vmem:[%s5 + $0x290] sm:$0xff]
  %v2177 = vld [vmem:[%s5 + $0x298] sm:$0xff]
  %v2178 = vld [vmem:[%s5 + $0x2a0] sm:$0xff]
  %v2179 = vld [vmem:[%s5 + $0x2a8] sm:$0xff]
  %v2180 = vld [vmem:[%s5 + $0x2b0] sm:$0xff]
  %v2181 = vld [vmem:[%s5 + $0x2b8] sm:$0xff]
  %v2182 = vld [vmem:[%s5 + $0x2c0] sm:$0xff]
  %v2183 = vld [vmem:[%s5 + $0x2c8] sm:$0xff]
  %v2184 = vld [vmem:[%s5 + $0x2d0] sm:$0xff]
  %v2185 = vld [vmem:[%s5 + $0x2d8] sm:$0xff]
  %v2186 = vld [vmem:[%s5 + $0x2e0] sm:$0xff]
  %v2187 = vld [vmem:[%s5 + $0x2e8] sm:$0xff]
  %v2188 = vld [vmem:[%s5 + $0x2f0] sm:$0xff]
  %v2189 = vld [vmem:[%s5 + $0x2f8] sm:$0xff]
  %v2190 = vld [vmem:[%s5 + $0x300] sm:$0xff]
  %v2191 = vld [vmem:[%s5 + $0x308] sm:$0xff]
  %v2192 = vld [vmem:[%s5 + $0x310] sm:$0xff]
  %v2193 = vld [vmem:[%s5 + $0x318] sm:$0xff]
  %v2194 = vld [vmem:[%s5 + $0x320] sm:$0xff]
  %v2195 = vld [vmem:[%s5 + $0x328] sm:$0xff]
  %v2196 = vld [vmem:[%s5 + $0x330] sm:$0xff]
  %v2197 = vld [vmem:[%s5 + $0x338] sm:$0xff]
  %v2198 = vld [vmem:[%s5 + $0x340] sm:$0xff]
  %v2199 = vld [vmem:[%s5 + $0x348] sm:$0xff]
  %v2200 = vld [vmem:[%s5 + $0x350] sm:$0xff]
  %v2201 = vld [vmem:[%s5 + $0x358] sm:$0xff]
  %v2202 = vld [vmem:[%s5 + $0x360] sm:$0xff]
  %v2203 = vld [vmem:[%s5 + $0x368] sm:$0xff]
  %v2204 = vld [vmem:[%s5 + $0x370] sm:$0xff]
  %v2205 = vld [vmem:[%s5 + $0x378] sm:$0xff]
  %v2206 = vld [vmem:[%s5 + $0x380] sm:$0xff]
  %v2207 = vld [vmem:[%s5 + $0x388] sm:$0xff]
  %v2208 = vld [vmem:[%s5 + $0x390] sm:$0xff]
  %v2209 = vld [vmem:[%s5 + $0x398] sm:$0xff]
  %v2210 = vld [vmem:[%s5 + $0x3a0] sm:$0xff]
  %v2211 = vld [vmem:[%s5 + $0x3a8] sm:$0xff]
  %v2212 = vld [vmem:[%s5 + $0x3b0] sm:$0xff]
  %v2213 = vld [vmem:[%s5 + $0x3b8] sm:$0xff]
  %v2214 = vld [vmem:[%s5 + $0x3c0] sm:$0xff]
  %v2215 = vld [vmem:[%s5 + $0x3c8] sm:$0xff]
  %v2216 = vld [vmem:[%s5 + $0x3d0] sm:$0xff]
  %v2217 = vld [vmem:[%s5 + $0x3d8] sm:$0xff]
  %v2218 = vld [vmem:[%s5 + $0x3e0] sm:$0xff]
  %v2219 = vld [vmem:[%s5 + $0x3e8] sm:$0xff]
  %v2220 = vld [vmem:[%s5 + $0x3f0] sm:$0xff]
  %v2221 = vld [vmem:[%s5 + $0x3f8] sm:$0xff]
  %v2222 = vld [vmem:[%s6] sm:$0x3]
  %v2224 = vlaneseq
  %v2225 = vshrl.u32 %v2224, 7
  %v2226 = vsub.s32 0, %v2225
  %v2227 = vrot.slane %v2222, %v2226
  %v2228 = vlaneseq
  %v2229 = vshrl.u32 %v2228, 7
  %v2230 = vsub.s32 1, %v2229
  %v2231 = vrot.slane %v2222, %v2230
  %v2362 = vunpack.c.l.b16 %v2094
  %v2363 = vunpack.c.h.b16 %v2094
  %v2364 = vunpack.c.l.b16 %v2095
  %v2365 = vunpack.c.h.b16 %v2095
  %v2366 = vunpack.c.l.b16 %v2096
  %v2367 = vunpack.c.h.b16 %v2096
  %v2368 = vunpack.c.l.b16 %v2097
  %v2369 = vunpack.c.h.b16 %v2097
  %v2370 = vunpack.c.l.b16 %v2098
  %v2371 = vunpack.c.h.b16 %v2098
  %v2372 = vunpack.c.l.b16 %v2099
  %v2373 = vunpack.c.h.b16 %v2099
  %v2374 = vunpack.c.l.b16 %v2100
  %v2375 = vunpack.c.h.b16 %v2100
  %v2376 = vunpack.c.l.b16 %v2101
  %v2377 = vunpack.c.h.b16 %v2101
  %v2378 = vunpack.c.l.b16 %v2102
  %v2379 = vunpack.c.h.b16 %v2102
  %v2380 = vunpack.c.l.b16 %v2103
  %v2381 = vunpack.c.h.b16 %v2103
  %v2382 = vunpack.c.l.b16 %v2104
  %v2383 = vunpack.c.h.b16 %v2104
  %v2384 = vunpack.c.l.b16 %v2105
  %v2385 = vunpack.c.h.b16 %v2105
  %v2386 = vunpack.c.l.b16 %v2106
  %v2387 = vunpack.c.h.b16 %v2106
  %v2388 = vunpack.c.l.b16 %v2107
  %v2389 = vunpack.c.h.b16 %v2107
  %v2390 = vunpack.c.l.b16 %v2108
  %v2391 = vunpack.c.h.b16 %v2108
  %v2392 = vunpack.c.l.b16 %v2109
  %v2393 = vunpack.c.h.b16 %v2109
  %v2394 = vunpack.c.l.b16 %v2110
  %v2395 = vunpack.c.h.b16 %v2110
  %v2396 = vunpack.c.l.b16 %v2111
  %v2397 = vunpack.c.h.b16 %v2111
  %v2398 = vunpack.c.l.b16 %v2112
  %v2399 = vunpack.c.h.b16 %v2112
  %v2400 = vunpack.c.l.b16 %v2113
  %v2401 = vunpack.c.h.b16 %v2113
  %v2402 = vunpack.c.l.b16 %v2114
  %v2403 = vunpack.c.h.b16 %v2114
  %v2404 = vunpack.c.l.b16 %v2115
  %v2405 = vunpack.c.h.b16 %v2115
  %v2406 = vunpack.c.l.b16 %v2116
  %v2407 = vunpack.c.h.b16 %v2116
  %v2408 = vunpack.c.l.b16 %v2117
  %v2409 = vunpack.c.h.b16 %v2117
  %v2410 = vunpack.c.l.b16 %v2118
  %v2411 = vunpack.c.h.b16 %v2118
  %v2412 = vunpack.c.l.b16 %v2119
  %v2413 = vunpack.c.h.b16 %v2119
  %v2414 = vunpack.c.l.b16 %v2120
  %v2415 = vunpack.c.h.b16 %v2120
  %v2416 = vunpack.c.l.b16 %v2121
  %v2417 = vunpack.c.h.b16 %v2121
  %v2418 = vunpack.c.l.b16 %v2122
  %v2419 = vunpack.c.h.b16 %v2122
  %v2420 = vunpack.c.l.b16 %v2123
  %v2421 = vunpack.c.h.b16 %v2123
  %v2422 = vunpack.c.l.b16 %v2124
  %v2423 = vunpack.c.h.b16 %v2124
  %v2424 = vunpack.c.l.b16 %v2125
  %v2425 = vunpack.c.h.b16 %v2125
  %v2426 = vunpack.c.l.b16 %v2126
  %v2427 = vunpack.c.h.b16 %v2126
  %v2428 = vunpack.c.l.b16 %v2127
  %v2429 = vunpack.c.h.b16 %v2127
  %v2430 = vunpack.c.l.b16 %v2128
  %v2431 = vunpack.c.h.b16 %v2128
  %v2432 = vunpack.c.l.b16 %v2129
  %v2433 = vunpack.c.h.b16 %v2129
  %v2434 = vunpack.c.l.b16 %v2130
  %v2435 = vunpack.c.h.b16 %v2130
  %v2436 = vunpack.c.l.b16 %v2131
  %v2437 = vunpack.c.h.b16 %v2131
  %v2438 = vunpack.c.l.b16 %v2132
  %v2439 = vunpack.c.h.b16 %v2132
  %v2440 = vunpack.c.l.b16 %v2133
  %v2441 = vunpack.c.h.b16 %v2133
  %v2442 = vunpack.c.l.b16 %v2134
  %v2443 = vunpack.c.h.b16 %v2134
  %v2444 = vunpack.c.l.b16 %v2135
  %v2445 = vunpack.c.h.b16 %v2135
  %v2446 = vunpack.c.l.b16 %v2136
  %v2447 = vunpack.c.h.b16 %v2136
  %v2448 = vunpack.c.l.b16 %v2137
  %v2449 = vunpack.c.h.b16 %v2137
  %v2450 = vunpack.c.l.b16 %v2138
  %v2451 = vunpack.c.h.b16 %v2138
  %v2452 = vunpack.c.l.b16 %v2139
  %v2453 = vunpack.c.h.b16 %v2139
  %v2454 = vunpack.c.l.b16 %v2140
  %v2455 = vunpack.c.h.b16 %v2140
  %v2456 = vunpack.c.l.b16 %v2141
  %v2457 = vunpack.c.h.b16 %v2141
  %v2458 = vunpack.c.l.b16 %v2142
  %v2459 = vunpack.c.h.b16 %v2142
  %v2460 = vunpack.c.l.b16 %v2143
  %v2461 = vunpack.c.h.b16 %v2143
  %v2462 = vunpack.c.l.b16 %v2144
  %v2463 = vunpack.c.h.b16 %v2144
  %v2464 = vunpack.c.l.b16 %v2145
  %v2465 = vunpack.c.h.b16 %v2145
  %v2466 = vunpack.c.l.b16 %v2146
  %v2467 = vunpack.c.h.b16 %v2146
  %v2468 = vunpack.c.l.b16 %v2147
  %v2469 = vunpack.c.h.b16 %v2147
  %v2470 = vunpack.c.l.b16 %v2148
  %v2471 = vunpack.c.h.b16 %v2148
  %v2472 = vunpack.c.l.b16 %v2149
  %v2473 = vunpack.c.h.b16 %v2149
  %v2474 = vunpack.c.l.b16 %v2150
  %v2475 = vunpack.c.h.b16 %v2150
  %v2476 = vunpack.c.l.b16 %v2151
  %v2477 = vunpack.c.h.b16 %v2151
  %v2478 = vunpack.c.l.b16 %v2152
  %v2479 = vunpack.c.h.b16 %v2152
  %v2480 = vunpack.c.l.b16 %v2153
  %v2481 = vunpack.c.h.b16 %v2153
  %v2482 = vunpack.c.l.b16 %v2154
  %v2483 = vunpack.c.h.b16 %v2154
  %v2484 = vunpack.c.l.b16 %v2155
  %v2485 = vunpack.c.h.b16 %v2155
  %v2486 = vunpack.c.l.b16 %v2156
  %v2487 = vunpack.c.h.b16 %v2156
  %v2488 = vunpack.c.l.b16 %v2157
  %v2489 = vunpack.c.h.b16 %v2157
  %v2490 = vunpack.c.l.b16 %v2158
  %v2491 = vunpack.c.h.b16 %v2158
  %v2492 = vunpack.c.l.b16 %v2159
  %v2493 = vunpack.c.h.b16 %v2159
  %v2494 = vunpack.c.l.b16 %v2160
  %v2495 = vunpack.c.h.b16 %v2160
  %v2496 = vunpack.c.l.b16 %v2161
  %v2497 = vunpack.c.h.b16 %v2161
  %v2498 = vunpack.c.l.b16 %v2162
  %v2499 = vunpack.c.h.b16 %v2162
  %v2500 = vunpack.c.l.b16 %v2163
  %v2501 = vunpack.c.h.b16 %v2163
  %v2502 = vunpack.c.l.b16 %v2164
  %v2503 = vunpack.c.h.b16 %v2164
  %v2504 = vunpack.c.l.b16 %v2165
  %v2505 = vunpack.c.h.b16 %v2165
  %v2506 = vunpack.c.l.b16 %v2166
  %v2507 = vunpack.c.h.b16 %v2166
  %v2508 = vunpack.c.l.b16 %v2167
  %v2509 = vunpack.c.h.b16 %v2167
  %v2510 = vunpack.c.l.b16 %v2168
  %v2511 = vunpack.c.h.b16 %v2168
  %v2512 = vunpack.c.l.b16 %v2169
  %v2513 = vunpack.c.h.b16 %v2169
  %v2514 = vunpack.c.l.b16 %v2170
  %v2515 = vunpack.c.h.b16 %v2170
  %v2516 = vunpack.c.l.b16 %v2171
  %v2517 = vunpack.c.h.b16 %v2171
  %v2518 = vunpack.c.l.b16 %v2172
  %v2519 = vunpack.c.h.b16 %v2172
  %v2520 = vunpack.c.l.b16 %v2173
  %v2521 = vunpack.c.h.b16 %v2173
  %v2522 = vunpack.c.l.b16 %v2174
  %v2523 = vunpack.c.h.b16 %v2174
  %v2524 = vunpack.c.l.b16 %v2175
  %v2525 = vunpack.c.h.b16 %v2175
  %v2526 = vunpack.c.l.b16 %v2176
  %v2527 = vunpack.c.h.b16 %v2176
  %v2528 = vunpack.c.l.b16 %v2177
  %v2529 = vunpack.c.h.b16 %v2177
  %v2530 = vunpack.c.l.b16 %v2178
  %v2531 = vunpack.c.h.b16 %v2178
  %v2532 = vunpack.c.l.b16 %v2179
  %v2533 = vunpack.c.h.b16 %v2179
  %v2534 = vunpack.c.l.b16 %v2180
  %v2535 = vunpack.c.h.b16 %v2180
  %v2536 = vunpack.c.l.b16 %v2181
  %v2537 = vunpack.c.h.b16 %v2181
  %v2538 = vunpack.c.l.b16 %v2182
  %v2539 = vunpack.c.h.b16 %v2182
  %v2540 = vunpack.c.l.b16 %v2183
  %v2541 = vunpack.c.h.b16 %v2183
  %v2542 = vunpack.c.l.b16 %v2184
  %v2543 = vunpack.c.h.b16 %v2184
  %v2544 = vunpack.c.l.b16 %v2185
  %v2545 = vunpack.c.h.b16 %v2185
  %v2546 = vunpack.c.l.b16 %v2186
  %v2547 = vunpack.c.h.b16 %v2186
  %v2548 = vunpack.c.l.b16 %v2187
  %v2549 = vunpack.c.h.b16 %v2187
  %v2550 = vunpack.c.l.b16 %v2188
  %v2551 = vunpack.c.h.b16 %v2188
  %v2552 = vunpack.c.l.b16 %v2189
  %v2553 = vunpack.c.h.b16 %v2189
  %v2554 = vunpack.c.l.b16 %v2190
  %v2555 = vunpack.c.h.b16 %v2190
  %v2556 = vunpack.c.l.b16 %v2191
  %v2557 = vunpack.c.h.b16 %v2191
  %v2558 = vunpack.c.l.b16 %v2192
  %v2559 = vunpack.c.h.b16 %v2192
  %v2560 = vunpack.c.l.b16 %v2193
  %v2561 = vunpack.c.h.b16 %v2193
  %v2562 = vunpack.c.l.b16 %v2194
  %v2563 = vunpack.c.h.b16 %v2194
  %v2564 = vunpack.c.l.b16 %v2195
  %v2565 = vunpack.c.h.b16 %v2195
  %v2566 = vunpack.c.l.b16 %v2196
  %v2567 = vunpack.c.h.b16 %v2196
  %v2568 = vunpack.c.l.b16 %v2197
  %v2569 = vunpack.c.h.b16 %v2197
  %v2570 = vunpack.c.l.b16 %v2198
  %v2571 = vunpack.c.h.b16 %v2198
  %v2572 = vunpack.c.l.b16 %v2199
  %v2573 = vunpack.c.h.b16 %v2199
  %v2574 = vunpack.c.l.b16 %v2200
  %v2575 = vunpack.c.h.b16 %v2200
  %v2576 = vunpack.c.l.b16 %v2201
  %v2577 = vunpack.c.h.b16 %v2201
  %v2578 = vunpack.c.l.b16 %v2202
  %v2579 = vunpack.c.h.b16 %v2202
  %v2580 = vunpack.c.l.b16 %v2203
  %v2581 = vunpack.c.h.b16 %v2203
  %v2582 = vunpack.c.l.b16 %v2204
  %v2583 = vunpack.c.h.b16 %v2204
  %v2584 = vunpack.c.l.b16 %v2205
  %v2585 = vunpack.c.h.b16 %v2205
  %v2586 = vunpack.c.l.b16 %v2206
  %v2587 = vunpack.c.h.b16 %v2206
  %v2588 = vunpack.c.l.b16 %v2207
  %v2589 = vunpack.c.h.b16 %v2207
  %v2590 = vunpack.c.l.b16 %v2208
  %v2591 = vunpack.c.h.b16 %v2208
  %v2592 = vunpack.c.l.b16 %v2209
  %v2593 = vunpack.c.h.b16 %v2209
  %v2594 = vunpack.c.l.b16 %v2210
  %v2595 = vunpack.c.h.b16 %v2210
  %v2596 = vunpack.c.l.b16 %v2211
  %v2597 = vunpack.c.h.b16 %v2211
  %v2598 = vunpack.c.l.b16 %v2212
  %v2599 = vunpack.c.h.b16 %v2212
  %v2600 = vunpack.c.l.b16 %v2213
  %v2601 = vunpack.c.h.b16 %v2213
  %v2602 = vunpack.c.l.b16 %v2214
  %v2603 = vunpack.c.h.b16 %v2214
  %v2604 = vunpack.c.l.b16 %v2215
  %v2605 = vunpack.c.h.b16 %v2215
  %v2606 = vunpack.c.l.b16 %v2216
  %v2607 = vunpack.c.h.b16 %v2216
  %v2608 = vunpack.c.l.b16 %v2217
  %v2609 = vunpack.c.h.b16 %v2217
  %v2610 = vunpack.c.l.b16 %v2218
  %v2611 = vunpack.c.h.b16 %v2218
  %v2612 = vunpack.c.l.b16 %v2219
  %v2613 = vunpack.c.h.b16 %v2219
  %v2614 = vunpack.c.l.b16 %v2220
  %v2615 = vunpack.c.h.b16 %v2220
  %v2616 = vunpack.c.l.b16 %v2221
  %v2617 = vunpack.c.h.b16 %v2221
  %v2618 = vpack.c.b16 %v2364, %v2362
  %v2619 = vpack.c.b16 %v2365, %v2363
  %v2620 = vpack.c.b16 %v2368, %v2366
  %v2621 = vpack.c.b16 %v2369, %v2367
  %v2622 = vpack.c.b16 %v2372, %v2370
  %v2623 = vpack.c.b16 %v2373, %v2371
  %v2624 = vpack.c.b16 %v2376, %v2374
  %v2625 = vpack.c.b16 %v2377, %v2375
  %v2626 = vpack.c.b16 %v2380, %v2378
  %v2627 = vpack.c.b16 %v2381, %v2379
  %v2628 = vpack.c.b16 %v2384, %v2382
  %v2629 = vpack.c.b16 %v2385, %v2383
  %v2630 = vpack.c.b16 %v2388, %v2386
  %v2631 = vpack.c.b16 %v2389, %v2387
  %v2632 = vpack.c.b16 %v2392, %v2390
  %v2633 = vpack.c.b16 %v2393, %v2391
  %v2634 = vpack.c.b16 %v2396, %v2394
  %v2635 = vpack.c.b16 %v2397, %v2395
  %v2636 = vpack.c.b16 %v2400, %v2398
  %v2637 = vpack.c.b16 %v2401, %v2399
  %v2638 = vpack.c.b16 %v2404, %v2402
  %v2639 = vpack.c.b16 %v2405, %v2403
  %v2640 = vpack.c.b16 %v2408, %v2406
  %v2641 = vpack.c.b16 %v2409, %v2407
  %v2642 = vpack.c.b16 %v2412, %v2410
  %v2643 = vpack.c.b16 %v2413, %v2411
  %v2644 = vpack.c.b16 %v2416, %v2414
  %v2645 = vpack.c.b16 %v2417, %v2415
  %v2646 = vpack.c.b16 %v2420, %v2418
  %v2647 = vpack.c.b16 %v2421, %v2419
  %v2648 = vpack.c.b16 %v2424, %v2422
  %v2649 = vpack.c.b16 %v2425, %v2423
  %v2650 = vpack.c.b16 %v2428, %v2426
  %v2651 = vpack.c.b16 %v2429, %v2427
  %v2652 = vpack.c.b16 %v2432, %v2430
  %v2653 = vpack.c.b16 %v2433, %v2431
  %v2654 = vpack.c.b16 %v2436, %v2434
  %v2655 = vpack.c.b16 %v2437, %v2435
  %v2656 = vpack.c.b16 %v2440, %v2438
  %v2657 = vpack.c.b16 %v2441, %v2439
  %v2658 = vpack.c.b16 %v2444, %v2442
  %v2659 = vpack.c.b16 %v2445, %v2443
  %v2660 = vpack.c.b16 %v2448, %v2446
  %v2661 = vpack.c.b16 %v2449, %v2447
  %v2662 = vpack.c.b16 %v2452, %v2450
  %v2663 = vpack.c.b16 %v2453, %v2451
  %v2664 = vpack.c.b16 %v2456, %v2454
  %v2665 = vpack.c.b16 %v2457, %v2455
  %v2666 = vpack.c.b16 %v2460, %v2458
  %v2667 = vpack.c.b16 %v2461, %v2459
  %v2668 = vpack.c.b16 %v2464, %v2462
  %v2669 = vpack.c.b16 %v2465, %v2463
  %v2670 = vpack.c.b16 %v2468, %v2466
  %v2671 = vpack.c.b16 %v2469, %v2467
  %v2672 = vpack.c.b16 %v2472, %v2470
  %v2673 = vpack.c.b16 %v2473, %v2471
  %v2674 = vpack.c.b16 %v2476, %v2474
  %v2675 = vpack.c.b16 %v2477, %v2475
  %v2676 = vpack.c.b16 %v2480, %v2478
  %v2677 = vpack.c.b16 %v2481, %v2479
  %v2678 = vpack.c.b16 %v2484, %v2482
  %v2679 = vpack.c.b16 %v2485, %v2483
  %v2680 = vpack.c.b16 %v2488, %v2486
  %v2681 = vpack.c.b16 %v2489, %v2487
  %v2682 = vpack.c.b16 %v2492, %v2490
  %v2683 = vpack.c.b16 %v2493, %v2491
  %v2684 = vpack.c.b16 %v2496, %v2494
  %v2685 = vpack.c.b16 %v2497, %v2495
  %v2686 = vpack.c.b16 %v2500, %v2498
  %v2687 = vpack.c.b16 %v2501, %v2499
  %v2688 = vpack.c.b16 %v2504, %v2502
  %v2689 = vpack.c.b16 %v2505, %v2503
  %v2690 = vpack.c.b16 %v2508, %v2506
  %v2691 = vpack.c.b16 %v2509, %v2507
  %v2692 = vpack.c.b16 %v2512, %v2510
  %v2693 = vpack.c.b16 %v2513, %v2511
  %v2694 = vpack.c.b16 %v2516, %v2514
  %v2695 = vpack.c.b16 %v2517, %v2515
  %v2696 = vpack.c.b16 %v2520, %v2518
  %v2697 = vpack.c.b16 %v2521, %v2519
  %v2698 = vpack.c.b16 %v2524, %v2522
  %v2699 = vpack.c.b16 %v2525, %v2523
  %v2700 = vpack.c.b16 %v2528, %v2526
  %v2701 = vpack.c.b16 %v2529, %v2527
  %v2702 = vpack.c.b16 %v2532, %v2530
  %v2703 = vpack.c.b16 %v2533, %v2531
  %v2704 = vpack.c.b16 %v2536, %v2534
  %v2705 = vpack.c.b16 %v2537, %v2535
  %v2706 = vpack.c.b16 %v2540, %v2538
  %v2707 = vpack.c.b16 %v2541, %v2539
  %v2708 = vpack.c.b16 %v2544, %v2542
  %v2709 = vpack.c.b16 %v2545, %v2543
  %v2710 = vpack.c.b16 %v2548, %v2546
  %v2711 = vpack.c.b16 %v2549, %v2547
  %v2712 = vpack.c.b16 %v2552, %v2550
  %v2713 = vpack.c.b16 %v2553, %v2551
  %v2714 = vpack.c.b16 %v2556, %v2554
  %v2715 = vpack.c.b16 %v2557, %v2555
  %v2716 = vpack.c.b16 %v2560, %v2558
  %v2717 = vpack.c.b16 %v2561, %v2559
  %v2718 = vpack.c.b16 %v2564, %v2562
  %v2719 = vpack.c.b16 %v2565, %v2563
  %v2720 = vpack.c.b16 %v2568, %v2566
  %v2721 = vpack.c.b16 %v2569, %v2567
  %v2722 = vpack.c.b16 %v2572, %v2570
  %v2723 = vpack.c.b16 %v2573, %v2571
  %v2724 = vpack.c.b16 %v2576, %v2574
  %v2725 = vpack.c.b16 %v2577, %v2575
  %v2726 = vpack.c.b16 %v2580, %v2578
  %v2727 = vpack.c.b16 %v2581, %v2579
  %v2728 = vpack.c.b16 %v2584, %v2582
  %v2729 = vpack.c.b16 %v2585, %v2583
  %v2730 = vpack.c.b16 %v2588, %v2586
  %v2731 = vpack.c.b16 %v2589, %v2587
  %v2732 = vpack.c.b16 %v2592, %v2590
  %v2733 = vpack.c.b16 %v2593, %v2591
  %v2734 = vpack.c.b16 %v2596, %v2594
  %v2735 = vpack.c.b16 %v2597, %v2595
  %v2736 = vpack.c.b16 %v2600, %v2598
  %v2737 = vpack.c.b16 %v2601, %v2599
  %v2738 = vpack.c.b16 %v2604, %v2602
  %v2739 = vpack.c.b16 %v2605, %v2603
  %v2740 = vpack.c.b16 %v2608, %v2606
  %v2741 = vpack.c.b16 %v2609, %v2607
  %v2742 = vpack.c.b16 %v2612, %v2610
  %v2743 = vpack.c.b16 %v2613, %v2611
  %v2744 = vpack.c.b16 %v2616, %v2614
  %v2745 = vpack.c.b16 %v2617, %v2615
  %2874 = vmatprep.subr.bf16.mxu0 %v2619
  %2875 = vmatpush1.bf16.msra.mxu0 %v2618
  %2876 = vmatprep.subr.bf16.mxu0 %v2621
  %2877 = vmatpush1.bf16.msra.mxu0 %v2620
  %2878 = vmatprep.subr.bf16.mxu0 %v2623
  %2879 = vmatpush1.bf16.msra.mxu0 %v2622
  %2880 = vmatprep.subr.bf16.mxu0 %v2625
  %2881 = vmatpush1.bf16.msra.mxu0 %v2624
  %2882 = vmatprep.subr.bf16.mxu0 %v2627
  %2883 = vmatpush1.bf16.msra.mxu0 %v2626
  %2884 = vmatprep.subr.bf16.mxu0 %v2629
  %2885 = vmatpush1.bf16.msra.mxu0 %v2628
  %2886 = vmatprep.subr.bf16.mxu0 %v2631
  %2887 = vmatpush1.bf16.msra.mxu0 %v2630
  %2888 = vmatprep.subr.bf16.mxu0 %v2633
  %2889 = vmatpush1.bf16.msra.mxu0 %v2632
  %2890 = vmatprep.subr.bf16.mxu0 %v2635
  %2891 = vmatpush1.bf16.msra.mxu0 %v2634
  %2892 = vmatprep.subr.bf16.mxu0 %v2637
  %2893 = vmatpush1.bf16.msra.mxu0 %v2636
  %2894 = vmatprep.subr.bf16.mxu0 %v2639
  %2895 = vmatpush1.bf16.msra.mxu0 %v2638
  %2896 = vmatprep.subr.bf16.mxu0 %v2641
  %2897 = vmatpush1.bf16.msra.mxu0 %v2640
  %2898 = vmatprep.subr.bf16.mxu0 %v2643
  %2899 = vmatpush1.bf16.msra.mxu0 %v2642
  %2900 = vmatprep.subr.bf16.mxu0 %v2645
  %2901 = vmatpush1.bf16.msra.mxu0 %v2644
  %2902 = vmatprep.subr.bf16.mxu0 %v2647
  %2903 = vmatpush1.bf16.msra.mxu0 %v2646
  %2904 = vmatprep.subr.bf16.mxu0 %v2649
  %2905 = vmatpush1.bf16.msra.mxu0 %v2648
  %2906 = vmatprep.mubr.bf16.mxu0 %v2087
  %2907 = vmatmul.mubr.bf16.gmra.mrb[0].mxu0 %v2086
  %v2908 = vpop.f32.mrb[0].mxu0
  %v2909 = vadd.f32 %v2227, %v2908
  %v2910 = vpop.f32.mrb[0].mxu0
  %v2911 = vadd.f32 %v2231, %v2910
  %v2912 = vpop.f32.mrb[0].mxu0
  %v2913 = vpop.f32.mrb[0].mxu0
  %2914 = vdwg.mxu0
  %2915 = vmatprep.subr.bf16.mxu0 %v2651
  %2916 = vmatpush1.bf16.msra.mxu0 %v2650
  %2917 = vmatprep.subr.bf16.mxu0 %v2653
  %2918 = vmatpush1.bf16.msra.mxu0 %v2652
  %2919 = vmatprep.subr.bf16.mxu0 %v2655
  %2920 = vmatpush1.bf16.msra.mxu0 %v2654
  %2921 = vmatprep.subr.bf16.mxu0 %v2657
  %2922 = vmatpush1.bf16.msra.mxu0 %v2656
  %2923 = vmatprep.subr.bf16.mxu0 %v2659
  %2924 = vmatpush1.bf16.msra.mxu0 %v2658
  %2925 = vmatprep.subr.bf16.mxu0 %v2661
  %2926 = vmatpush1.bf16.msra.mxu0 %v2660
  %2927 = vmatprep.subr.bf16.mxu0 %v2663
  %2928 = vmatpush1.bf16.msra.mxu0 %v2662
  %2929 = vmatprep.subr.bf16.mxu0 %v2665
  %2930 = vmatpush1.bf16.msra.mxu0 %v2664
  %2931 = vmatprep.subr.bf16.mxu0 %v2667
  %2932 = vmatpush1.bf16.msra.mxu0 %v2666
  %2933 = vmatprep.subr.bf16.mxu0 %v2669
  %2934 = vmatpush1.bf16.msra.mxu0 %v2668
  %2935 = vmatprep.subr.bf16.mxu0 %v2671
  %2936 = vmatpush1.bf16.msra.mxu0 %v2670
  %2937 = vmatprep.subr.bf16.mxu0 %v2673
  %2938 = vmatpush1.bf16.msra.mxu0 %v2672
  %2939 = vmatprep.subr.bf16.mxu0 %v2675
  %2940 = vmatpush1.bf16.msra.mxu0 %v2674
  %2941 = vmatprep.subr.bf16.mxu0 %v2677
  %2942 = vmatpush1.bf16.msra.mxu0 %v2676
  %2943 = vmatprep.subr.bf16.mxu0 %v2679
  %2944 = vmatpush1.bf16.msra.mxu0 %v2678
  %2945 = vmatprep.subr.bf16.mxu0 %v2681
  %2946 = vmatpush1.bf16.msra.mxu0 %v2680
  %2947 = vmatprep.mubr.bf16.mxu0 %v2089
  %2948 = vmatmul.mubr.bf16.gmra.mrb[0].mxu0 %v2088
  %v2949 = vpop.f32.mrb[0].mxu0
  %v2950 = vadd.f32 %v2909, %v2949
  %v2951 = vpop.f32.mrb[0].mxu0
  %v2952 = vadd.f32 %v2911, %v2951
  %v2953 = vpop.f32.mrb[0].mxu0
  %v2954 = vpop.f32.mrb[0].mxu0
  %2955 = vdwg.mxu0
  %2956 = vmatprep.subr.bf16.mxu0 %v2683
  %2957 = vmatpush1.bf16.msra.mxu0 %v2682
  %2958 = vmatprep.subr.bf16.mxu0 %v2685
  %2959 = vmatpush1.bf16.msra.mxu0 %v2684
  %2960 = vmatprep.subr.bf16.mxu0 %v2687
  %2961 = vmatpush1.bf16.msra.mxu0 %v2686
  %2962 = vmatprep.subr.bf16.mxu0 %v2689
  %2963 = vmatpush1.bf16.msra.mxu0 %v2688
  %2964 = vmatprep.subr.bf16.mxu0 %v2691
  %2965 = vmatpush1.bf16.msra.mxu0 %v2690
  %2966 = vmatprep.subr.bf16.mxu0 %v2693
  %2967 = vmatpush1.bf16.msra.mxu0 %v2692
  %2968 = vmatprep.subr.bf16.mxu0 %v2695
  %2969 = vmatpush1.bf16.msra.mxu0 %v2694
  %2970 = vmatprep.subr.bf16.mxu0 %v2697
  %2971 = vmatpush1.bf16.msra.mxu0 %v2696
  %2972 = vmatprep.subr.bf16.mxu0 %v2699
  %2973 = vmatpush1.bf16.msra.mxu0 %v2698
  %2974 = vmatprep.subr.bf16.mxu0 %v2701
  %2975 = vmatpush1.bf16.msra.mxu0 %v2700
  %2976 = vmatprep.subr.bf16.mxu0 %v2703
  %2977 = vmatpush1.bf16.msra.mxu0 %v2702
  %2978 = vmatprep.subr.bf16.mxu0 %v2705
  %2979 = vmatpush1.bf16.msra.mxu0 %v2704
  %2980 = vmatprep.subr.bf16.mxu0 %v2707
  %2981 = vmatpush1.bf16.msra.mxu0 %v2706
  %2982 = vmatprep.subr.bf16.mxu0 %v2709
  %2983 = vmatpush1.bf16.msra.mxu0 %v2708
  %2984 = vmatprep.subr.bf16.mxu0 %v2711
  %2985 = vmatpush1.bf16.msra.mxu0 %v2710
  %2986 = vmatprep.subr.bf16.mxu0 %v2713
  %2987 = vmatpush1.bf16.msra.mxu0 %v2712
  %2988 = vmatprep.mubr.bf16.mxu0 %v2091
  %2989 = vmatmul.mubr.bf16.gmra.mrb[0].mxu0 %v2090
  %v2990 = vpop.f32.mrb[0].mxu0
  %v2991 = vadd.f32 %v2950, %v2990
  %v2992 = vpop.f32.mrb[0].mxu0
  %v2993 = vadd.f32 %v2952, %v2992
  %v2994 = vpop.f32.mrb[0].mxu0
  %v2995 = vpop.f32.mrb[0].mxu0
  %2996 = vdwg.mxu0
  %2997 = vmatprep.subr.bf16.mxu0 %v2715
  %2998 = vmatpush1.bf16.msra.mxu0 %v2714
  %2999 = vmatprep.subr.bf16.mxu0 %v2717
  %3000 = vmatpush1.bf16.msra.mxu0 %v2716
  %3001 = vmatprep.subr.bf16.mxu0 %v2719
  %3002 = vmatpush1.bf16.msra.mxu0 %v2718
  %3003 = vmatprep.subr.bf16.mxu0 %v2721
  %3004 = vmatpush1.bf16.msra.mxu0 %v2720
  %3005 = vmatprep.subr.bf16.mxu0 %v2723
  %3006 = vmatpush1.bf16.msra.mxu0 %v2722
  %3007 = vmatprep.subr.bf16.mxu0 %v2725
  %3008 = vmatpush1.bf16.msra.mxu0 %v2724
  %3009 = vmatprep.subr.bf16.mxu0 %v2727
  %3010 = vmatpush1.bf16.msra.mxu0 %v2726
  %3011 = vmatprep.subr.bf16.mxu0 %v2729
  %3012 = vmatpush1.bf16.msra.mxu0 %v2728
  %3013 = vmatprep.subr.bf16.mxu0 %v2731
  %3014 = vmatpush1.bf16.msra.mxu0 %v2730
  %3015 = vmatprep.subr.bf16.mxu0 %v2733
  %3016 = vmatpush1.bf16.msra.mxu0 %v2732
  %3017 = vmatprep.subr.bf16.mxu0 %v2735
  %3018 = vmatpush1.bf16.msra.mxu0 %v2734
  %3019 = vmatprep.subr.bf16.mxu0 %v2737
  %3020 = vmatpush1.bf16.msra.mxu0 %v2736
  %3021 = vmatprep.subr.bf16.mxu0 %v2739
  %3022 = vmatpush1.bf16.msra.mxu0 %v2738
  %3023 = vmatprep.subr.bf16.mxu0 %v2741
  %3024 = vmatpush1.bf16.msra.mxu0 %v2740
  %3025 = vmatprep.subr.bf16.mxu0 %v2743
  %3026 = vmatpush1.bf16.msra.mxu0 %v2742
  %3027 = vmatprep.subr.bf16.mxu0 %v2745
  %3028 = vmatpush1.bf16.msra.mxu0 %v2744
  %3029 = vmatprep.mubr.bf16.mxu0 %v2093
  %3030 = vmatmul.mubr.bf16.gmra.mrb[0].mxu0 %v2092
  %v3031 = vpop.f32.mrb[0].mxu0
  %v3032 = vadd.f32 %v2991, %v3031
  %v3033 = vpop.f32.mrb[0].mxu0
  %v3034 = vadd.f32 %v2993, %v3033
  %v3035 = vpop.f32.mrb[0].mxu0
  %v3036 = vpop.f32.mrb[0].mxu0
  %3037 = vdwg.mxu0
  %v3038 = vmul.f32 %v3032, 0.5
  %v3039 = vmul.f32 %v3034, 0.5
  %v3040 = vtanh.pop %v3038
  %v3041 = vtanh.pop %v3039
  %v3042 = vadd.f32 %v3040, 1.0
  %v3043 = vadd.f32 %v3041, 1.0
  %v3044 = vmul.f32 %v3042, 0.5
  %v3045 = vmul.f32 %v3043, 0.5
  %v3046 = vpack.c.bf16 %v3044, %v3044
  %v3047 = vpack.c.bf16 %v3045, %v3045
  %v3048 = vld [vmem:[%s7] sm:$0xff]
  %v3049 = vld [vmem:[%s7 + $0x8] sm:$0xff]
  %v3050 = vld [vmem:[%s7 + $0x10] sm:$0xff]
  %v3051 = vld [vmem:[%s7 + $0x18] sm:$0xf]
  %v3052 = vld [vmem:[%s7 + $0x1c] sm:$0xff]
  %v3053 = vld [vmem:[%s7 + $0x24] sm:$0xff]
  %v3054 = vld [vmem:[%s7 + $0x2c] sm:$0xff]
  %v3055 = vld [vmem:[%s7 + $0x34] sm:$0xf]
  %v3056 = vld [vmem:[%s7 + $0x38] sm:$0xff]
  %v3057 = vld [vmem:[%s7 + $0x40] sm:$0xff]
  %v3058 = vld [vmem:[%s7 + $0x48] sm:$0xff]
  %v3059 = vld [vmem:[%s7 + $0x50] sm:$0xf]
  %v3060 = vld [vmem:[%s7 + $0x54] sm:$0xff]
  %v3061 = vld [vmem:[%s7 + $0x5c] sm:$0xff]
  %v3062 = vld [vmem:[%s7 + $0x64] sm:$0xff]
  %v3063 = vld [vmem:[%s7 + $0x6c] sm:$0xf]
  %v3064 = vld [vmem:[%s7 + $0x70] sm:$0xff]
  %v3065 = vld [vmem:[%s7 + $0x78] sm:$0xff]
  %v3066 = vld [vmem:[%s7 + $0x80] sm:$0xff]
  %v3067 = vld [vmem:[%s7 + $0x88] sm:$0xf]
  %v3068 = vld [vmem:[%s7 + $0x8c] sm:$0xff]
  %v3069 = vld [vmem:[%s7 + $0x94] sm:$0xff]
  %v3070 = vld [vmem:[%s7 + $0x9c] sm:$0xff]
  %v3071 = vld [vmem:[%s7 + $0xa4] sm:$0xf]
  %v3072 = vld [vmem:[%s7 + $0xa8] sm:$0xff]
  %v3073 = vld [vmem:[%s7 + $0xb0] sm:$0xff]
  %v3074 = vld [vmem:[%s7 + $0xb8] sm:$0xff]
  %v3075 = vld [vmem:[%s7 + $0xc0] sm:$0xf]
  %v3076 = vld [vmem:[%s7 + $0xc4] sm:$0xff]
  %v3077 = vld [vmem:[%s7 + $0xcc] sm:$0xff]
  %v3078 = vld [vmem:[%s7 + $0xd4] sm:$0xff]
  %v3079 = vld [vmem:[%s7 + $0xdc] sm:$0xf]
  %v3080 = vld [vmem:[%s7 + $0xe0] sm:$0xff]
  %v3081 = vld [vmem:[%s7 + $0xe8] sm:$0xff]
  %v3082 = vld [vmem:[%s7 + $0xf0] sm:$0xff]
  %v3083 = vld [vmem:[%s7 + $0xf8] sm:$0xf]
  %v3084 = vld [vmem:[%s7 + $0xfc] sm:$0xff]
  %v3085 = vld [vmem:[%s7 + $0x104] sm:$0xff]
  %v3086 = vld [vmem:[%s7 + $0x10c] sm:$0xff]
  %v3087 = vld [vmem:[%s7 + $0x114] sm:$0xf]
  %v3088 = vld [vmem:[%s7 + $0x118] sm:$0xff]
  %v3089 = vld [vmem:[%s7 + $0x120] sm:$0xff]
  %v3090 = vld [vmem:[%s7 + $0x128] sm:$0xff]
  %v3091 = vld [vmem:[%s7 + $0x130] sm:$0xf]
  %v3092 = vld [vmem:[%s7 + $0x134] sm:$0xff]
  %v3093 = vld [vmem:[%s7 + $0x13c] sm:$0xff]
  %v3094 = vld [vmem:[%s7 + $0x144] sm:$0xff]
  %v3095 = vld [vmem:[%s7 + $0x14c] sm:$0xf]
  %v3096 = vld [vmem:[%s7 + $0x150] sm:$0xff]
  %v3097 = vld [vmem:[%s7 + $0x158] sm:$0xff]
  %v3098 = vld [vmem:[%s7 + $0x160] sm:$0xff]
  %v3099 = vld [vmem:[%s7 + $0x168] sm:$0xf]
  %v3100 = vld [vmem:[%s7 + $0x16c] sm:$0xff]
  %v3101 = vld [vmem:[%s7 + $0x174] sm:$0xff]
  %v3102 = vld [vmem:[%s7 + $0x17c] sm:$0xff]
  %v3103 = vld [vmem:[%s7 + $0x184] sm:$0xf]
  %v3104 = vld [vmem:[%s7 + $0x188] sm:$0xff]
  %v3105 = vld [vmem:[%s7 + $0x190] sm:$0xff]
  %v3106 = vld [vmem:[%s7 + $0x198] sm:$0xff]
  %v3107 = vld [vmem:[%s7 + $0x1a0] sm:$0xf]
  %v3108 = vld [vmem:[%s7 + $0x1a4] sm:$0xff]
  %v3109 = vld [vmem:[%s7 + $0x1ac] sm:$0xff]
  %v3110 = vld [vmem:[%s7 + $0x1b4] sm:$0xff]
  %v3111 = vld [vmem:[%s7 + $0x1bc] sm:$0xf]
  %v3112 = vld [vmem:[%s7 + $0x1c0] sm:$0xff]
  %v3113 = vld [vmem:[%s7 + $0x1c8] sm:$0xff]
  %v3114 = vld [vmem:[%s7 + $0x1d0] sm:$0xff]
  %v3115 = vld [vmem:[%s7 + $0x1d8] sm:$0xf]
  %v3116 = vld [vmem:[%s7 + $0x1dc] sm:$0xff]
  %v3117 = vld [vmem:[%s7 + $0x1e4] sm:$0xff]
  %v3118 = vld [vmem:[%s7 + $0x1ec] sm:$0xff]
  %v3119 = vld [vmem:[%s7 + $0x1f4] sm:$0xf]
  %v3120 = vld [vmem:[%s7 + $0x1f8] sm:$0xff]
  %v3121 = vld [vmem:[%s7 + $0x200] sm:$0xff]
  %v3122 = vld [vmem:[%s7 + $0x208] sm:$0xff]
  %v3123 = vld [vmem:[%s7 + $0x210] sm:$0xf]
  %v3124 = vld [vmem:[%s7 + $0x214] sm:$0xff]
  %v3125 = vld [vmem:[%s7 + $0x21c] sm:$0xff]
  %v3126 = vld [vmem:[%s7 + $0x224] sm:$0xff]
  %v3127 = vld [vmem:[%s7 + $0x22c] sm:$0xf]
  %v3128 = vld [vmem:[%s7 + $0x230] sm:$0xff]
  %v3129 = vld [vmem:[%s7 + $0x238] sm:$0xff]
  %v3130 = vld [vmem:[%s7 + $0x240] sm:$0xff]
  %v3131 = vld [vmem:[%s7 + $0x248] sm:$0xf]
  %v3132 = vld [vmem:[%s7 + $0x24c] sm:$0xff]
  %v3133 = vld [vmem:[%s7 + $0x254] sm:$0xff]
  %v3134 = vld [vmem:[%s7 + $0x25c] sm:$0xff]
  %v3135 = vld [vmem:[%s7 + $0x264] sm:$0xf]
  %v3136 = vld [vmem:[%s7 + $0x268] sm:$0xff]
  %v3137 = vld [vmem:[%s7 + $0x270] sm:$0xff]
  %v3138 = vld [vmem:[%s7 + $0x278] sm:$0xff]
  %v3139 = vld [vmem:[%s7 + $0x280] sm:$0xf]
  %v3140 = vld [vmem:[%s7 + $0x284] sm:$0xff]
  %v3141 = vld [vmem:[%s7 + $0x28c] sm:$0xff]
  %v3142 = vld [vmem:[%s7 + $0x294] sm:$0xff]
  %v3143 = vld [vmem:[%s7 + $0x29c] sm:$0xf]
  %v3144 = vld [vmem:[%s7 + $0x2a0] sm:$0xff]
  %v3145 = vld [vmem:[%s7 + $0x2a8] sm:$0xff]
  %v3146 = vld [vmem:[%s7 + $0x2b0] sm:$0xff]
  %v3147 = vld [vmem:[%s7 + $0x2b8] sm:$0xf]
  %v3148 = vld [vmem:[%s7 + $0x2bc] sm:$0xff]
  %v3149 = vld [vmem:[%s7 + $0x2c4] sm:$0xff]
  %v3150 = vld [vmem:[%s7 + $0x2cc] sm:$0xff]
  %v3151 = vld [vmem:[%s7 + $0x2d4] sm:$0xf]
  %v3152 = vld [vmem:[%s7 + $0x2d8] sm:$0xff]
  %v3153 = vld [vmem:[%s7 + $0x2e0] sm:$0xff]
  %v3154 = vld [vmem:[%s7 + $0x2e8] sm:$0xff]
  %v3155 = vld [vmem:[%s7 + $0x2f0] sm:$0xf]
  %v3156 = vld [vmem:[%s7 + $0x2f4] sm:$0xff]
  %v3157 = vld [vmem:[%s7 + $0x2fc] sm:$0xff]
  %v3158 = vld [vmem:[%s7 + $0x304] sm:$0xff]
  %v3159 = vld [vmem:[%s7 + $0x30c] sm:$0xf]
  %v3160 = vld [vmem:[%s7 + $0x310] sm:$0xff]
  %v3161 = vld [vmem:[%s7 + $0x318] sm:$0xff]
  %v3162 = vld [vmem:[%s7 + $0x320] sm:$0xff]
  %v3163 = vld [vmem:[%s7 + $0x328] sm:$0xf]
  %v3164 = vld [vmem:[%s7 + $0x32c] sm:$0xff]
  %v3165 = vld [vmem:[%s7 + $0x334] sm:$0xff]
  %v3166 = vld [vmem:[%s7 + $0x33c] sm:$0xff]
  %v3167 = vld [vmem:[%s7 + $0x344] sm:$0xf]
  %v3168 = vld [vmem:[%s7 + $0x348] sm:$0xff]
  %v3169 = vld [vmem:[%s7 + $0x350] sm:$0xff]
  %v3170 = vld [vmem:[%s7 + $0x358] sm:$0xff]
  %v3171 = vld [vmem:[%s7 + $0x360] sm:$0xf]
  %v3172 = vld [vmem:[%s7 + $0x364] sm:$0xff]
  %v3173 = vld [vmem:[%s7 + $0x36c] sm:$0xff]
  %v3174 = vld [vmem:[%s7 + $0x374] sm:$0xff]
  %v3175 = vld [vmem:[%s7 + $0x37c] sm:$0xf]
  %v3304 = vunpack.c.l.b16 %v3048
  %v3305 = vunpack.c.h.b16 %v3048
  %v3306 = vunpack.c.l.b16 %v3049
  %v3307 = vunpack.c.h.b16 %v3049
  %v3308 = vunpack.c.l.b16 %v3050
  %v3309 = vunpack.c.h.b16 %v3050
  %v3310 = vunpack.c.l.b16 %v3051
  %v3311 = vunpack.c.l.b16 %v3052
  %v3312 = vunpack.c.h.b16 %v3052
  %v3313 = vunpack.c.l.b16 %v3053
  %v3314 = vunpack.c.h.b16 %v3053
  %v3315 = vunpack.c.l.b16 %v3054
  %v3316 = vunpack.c.h.b16 %v3054
  %v3317 = vunpack.c.l.b16 %v3055
  %v3318 = vunpack.c.l.b16 %v3056
  %v3319 = vunpack.c.h.b16 %v3056
  %v3320 = vunpack.c.l.b16 %v3057
  %v3321 = vunpack.c.h.b16 %v3057
  %v3322 = vunpack.c.l.b16 %v3058
  %v3323 = vunpack.c.h.b16 %v3058
  %v3324 = vunpack.c.l.b16 %v3059
  %v3325 = vunpack.c.l.b16 %v3060
  %v3326 = vunpack.c.h.b16 %v3060
  %v3327 = vunpack.c.l.b16 %v3061
  %v3328 = vunpack.c.h.b16 %v3061
  %v3329 = vunpack.c.l.b16 %v3062
  %v3330 = vunpack.c.h.b16 %v3062
  %v3331 = vunpack.c.l.b16 %v3063
  %v3332 = vunpack.c.l.b16 %v3064
  %v3333 = vunpack.c.h.b16 %v3064
  %v3334 = vunpack.c.l.b16 %v3065
  %v3335 = vunpack.c.h.b16 %v3065
  %v3336 = vunpack.c.l.b16 %v3066
  %v3337 = vunpack.c.h.b16 %v3066
  %v3338 = vunpack.c.l.b16 %v3067
  %v3339 = vunpack.c.l.b16 %v3068
  %v3340 = vunpack.c.h.b16 %v3068
  %v3341 = vunpack.c.l.b16 %v3069
  %v3342 = vunpack.c.h.b16 %v3069
  %v3343 = vunpack.c.l.b16 %v3070
  %v3344 = vunpack.c.h.b16 %v3070
  %v3345 = vunpack.c.l.b16 %v3071
  %v3346 = vunpack.c.l.b16 %v3072
  %v3347 = vunpack.c.h.b16 %v3072
  %v3348 = vunpack.c.l.b16 %v3073
  %v3349 = vunpack.c.h.b16 %v3073
  %v3350 = vunpack.c.l.b16 %v3074
  %v3351 = vunpack.c.h.b16 %v3074
  %v3352 = vunpack.c.l.b16 %v3075
  %v3353 = vunpack.c.l.b16 %v3076
  %v3354 = vunpack.c.h.b16 %v3076
  %v3355 = vunpack.c.l.b16 %v3077
  %v3356 = vunpack.c.h.b16 %v3077
  %v3357 = vunpack.c.l.b16 %v3078
  %v3358 = vunpack.c.h.b16 %v3078
  %v3359 = vunpack.c.l.b16 %v3079
  %v3360 = vunpack.c.l.b16 %v3080
  %v3361 = vunpack.c.h.b16 %v3080
  %v3362 = vunpack.c.l.b16 %v3081
  %v3363 = vunpack.c.h.b16 %v3081
  %v3364 = vunpack.c.l.b16 %v3082
  %v3365 = vunpack.c.h.b16 %v3082
  %v3366 = vunpack.c.l.b16 %v3083
  %v3367 = vunpack.c.l.b16 %v3084
  %v3368 = vunpack.c.h.b16 %v3084
  %v3369 = vunpack.c.l.b16 %v3085
  %v3370 = vunpack.c.h.b16 %v3085
  %v3371 = vunpack.c.l.b16 %v3086
  %v3372 = vunpack.c.h.b16 %v3086
  %v3373 = vunpack.c.l.b16 %v3087
  %v3374 = vunpack.c.l.b16 %v3088
  %v3375 = vunpack.c.h.b16 %v3088
  %v3376 = vunpack.c.l.b16 %v3089
  %v3377 = vunpack.c.h.b16 %v3089
  %v3378 = vunpack.c.l.b16 %v3090
  %v3379 = vunpack.c.h.b16 %v3090
  %v3380 = vunpack.c.l.b16 %v3091
  %v3381 = vunpack.c.l.b16 %v3092
  %v3382 = vunpack.c.h.b16 %v3092
  %v3383 = vunpack.c.l.b16 %v3093
  %v3384 = vunpack.c.h.b16 %v3093
  %v3385 = vunpack.c.l.b16 %v3094
  %v3386 = vunpack.c.h.b16 %v3094
  %v3387 = vunpack.c.l.b16 %v3095
  %v3388 = vunpack.c.l.b16 %v3096
  %v3389 = vunpack.c.h.b16 %v3096
  %v3390 = vunpack.c.l.b16 %v3097
  %v3391 = vunpack.c.h.b16 %v3097
  %v3392 = vunpack.c.l.b16 %v3098
  %v3393 = vunpack.c.h.b16 %v3098
  %v3394 = vunpack.c.l.b16 %v3099
  %v3395 = vunpack.c.l.b16 %v3100
  %v3396 = vunpack.c.h.b16 %v3100
  %v3397 = vunpack.c.l.b16 %v3101
  %v3398 = vunpack.c.h.b16 %v3101
  %v3399 = vunpack.c.l.b16 %v3102
  %v3400 = vunpack.c.h.b16 %v3102
  %v3401 = vunpack.c.l.b16 %v3103
  %v3402 = vunpack.c.l.b16 %v3104
  %v3403 = vunpack.c.h.b16 %v3104
  %v3404 = vunpack.c.l.b16 %v3105
  %v3405 = vunpack.c.h.b16 %v3105
  %v3406 = vunpack.c.l.b16 %v3106
  %v3407 = vunpack.c.h.b16 %v3106
  %v3408 = vunpack.c.l.b16 %v3107
  %v3409 = vunpack.c.l.b16 %v3108
  %v3410 = vunpack.c.h.b16 %v3108
  %v3411 = vunpack.c.l.b16 %v3109
  %v3412 = vunpack.c.h.b16 %v3109
  %v3413 = vunpack.c.l.b16 %v3110
  %v3414 = vunpack.c.h.b16 %v3110
  %v3415 = vunpack.c.l.b16 %v3111
  %v3416 = vunpack.c.l.b16 %v3112
  %v3417 = vunpack.c.h.b16 %v3112
  %v3418 = vunpack.c.l.b16 %v3113
  %v3419 = vunpack.c.h.b16 %v3113
  %v3420 = vunpack.c.l.b16 %v3114
  %v3421 = vunpack.c.h.b16 %v3114
  %v3422 = vunpack.c.l.b16 %v3115
  %v3423 = vunpack.c.l.b16 %v3116
  %v3424 = vunpack.c.h.b16 %v3116
  %v3425 = vunpack.c.l.b16 %v3117
  %v3426 = vunpack.c.h.b16 %v3117
  %v3427 = vunpack.c.l.b16 %v3118
  %v3428 = vunpack.c.h.b16 %v3118
  %v3429 = vunpack.c.l.b16 %v3119
  %v3430 = vunpack.c.l.b16 %v3120
  %v3431 = vunpack.c.h.b16 %v3120
  %v3432 = vunpack.c.l.b16 %v3121
  %v3433 = vunpack.c.h.b16 %v3121
  %v3434 = vunpack.c.l.b16 %v3122
  %v3435 = vunpack.c.h.b16 %v3122
  %v3436 = vunpack.c.l.b16 %v3123
  %v3437 = vunpack.c.l.b16 %v3124
  %v3438 = vunpack.c.h.b16 %v3124
  %v3439 = vunpack.c.l.b16 %v3125
  %v3440 = vunpack.c.h.b16 %v3125
  %v3441 = vunpack.c.l.b16 %v3126
  %v3442 = vunpack.c.h.b16 %v3126
  %v3443 = vunpack.c.l.b16 %v3127
  %v3444 = vunpack.c.l.b16 %v3128
  %v3445 = vunpack.c.h.b16 %v3128
  %v3446 = vunpack.c.l.b16 %v3129
  %v3447 = vunpack.c.h.b16 %v3129
  %v3448 = vunpack.c.l.b16 %v3130
  %v3449 = vunpack.c.h.b16 %v3130
  %v3450 = vunpack.c.l.b16 %v3131
  %v3451 = vunpack.c.l.b16 %v3132
  %v3452 = vunpack.c.h.b16 %v3132
  %v3453 = vunpack.c.l.b16 %v3133
  %v3454 = vunpack.c.h.b16 %v3133
  %v3455 = vunpack.c.l.b16 %v3134
  %v3456 = vunpack.c.h.b16 %v3134
  %v3457 = vunpack.c.l.b16 %v3135
  %v3458 = vunpack.c.l.b16 %v3136
  %v3459 = vunpack.c.h.b16 %v3136
  %v3460 = vunpack.c.l.b16 %v3137
  %v3461 = vunpack.c.h.b16 %v3137
  %v3462 = vunpack.c.l.b16 %v3138
  %v3463 = vunpack.c.h.b16 %v3138
  %v3464 = vunpack.c.l.b16 %v3139
  %v3465 = vunpack.c.l.b16 %v3140
  %v3466 = vunpack.c.h.b16 %v3140
  %v3467 = vunpack.c.l.b16 %v3141
  %v3468 = vunpack.c.h.b16 %v3141
  %v3469 = vunpack.c.l.b16 %v3142
  %v3470 = vunpack.c.h.b16 %v3142
  %v3471 = vunpack.c.l.b16 %v3143
  %v3472 = vunpack.c.l.b16 %v3144
  %v3473 = vunpack.c.h.b16 %v3144
  %v3474 = vunpack.c.l.b16 %v3145
  %v3475 = vunpack.c.h.b16 %v3145
  %v3476 = vunpack.c.l.b16 %v3146
  %v3477 = vunpack.c.h.b16 %v3146
  %v3478 = vunpack.c.l.b16 %v3147
  %v3479 = vunpack.c.l.b16 %v3148
  %v3480 = vunpack.c.h.b16 %v3148
  %v3481 = vunpack.c.l.b16 %v3149
  %v3482 = vunpack.c.h.b16 %v3149
  %v3483 = vunpack.c.l.b16 %v3150
  %v3484 = vunpack.c.h.b16 %v3150
  %v3485 = vunpack.c.l.b16 %v3151
  %v3486 = vunpack.c.l.b16 %v3152
  %v3487 = vunpack.c.h.b16 %v3152
  %v3488 = vunpack.c.l.b16 %v3153
  %v3489 = vunpack.c.h.b16 %v3153
  %v3490 = vunpack.c.l.b16 %v3154
  %v3491 = vunpack.c.h.b16 %v3154
  %v3492 = vunpack.c.l.b16 %v3155
  %v3493 = vunpack.c.l.b16 %v3156
  %v3494 = vunpack.c.h.b16 %v3156
  %v3495 = vunpack.c.l.b16 %v3157
  %v3496 = vunpack.c.h.b16 %v3157
  %v3497 = vunpack.c.l.b16 %v3158
  %v3498 = vunpack.c.h.b16 %v3158
  %v3499 = vunpack.c.l.b16 %v3159
  %v3500 = vunpack.c.l.b16 %v3160
  %v3501 = vunpack.c.h.b16 %v3160
  %v3502 = vunpack.c.l.b16 %v3161
  %v3503 = vunpack.c.h.b16 %v3161
  %v3504 = vunpack.c.l.b16 %v3162
  %v3505 = vunpack.c.h.b16 %v3162
  %v3506 = vunpack.c.l.b16 %v3163
  %v3507 = vunpack.c.l.b16 %v3164
  %v3508 = vunpack.c.h.b16 %v3164
  %v3509 = vunpack.c.l.b16 %v3165
  %v3510 = vunpack.c.h.b16 %v3165
  %v3511 = vunpack.c.l.b16 %v3166
  %v3512 = vunpack.c.h.b16 %v3166
  %v3513 = vunpack.c.l.b16 %v3167
  %v3514 = vunpack.c.l.b16 %v3168
  %v3515 = vunpack.c.h.b16 %v3168
  %v3516 = vunpack.c.l.b16 %v3169
  %v3517 = vunpack.c.h.b16 %v3169
  %v3518 = vunpack.c.l.b16 %v3170
  %v3519 = vunpack.c.h.b16 %v3170
  %v3520 = vunpack.c.l.b16 %v3171
  %v3521 = vunpack.c.l.b16 %v3172
  %v3522 = vunpack.c.h.b16 %v3172
  %v3523 = vunpack.c.l.b16 %v3173
  %v3524 = vunpack.c.h.b16 %v3173
  %v3525 = vunpack.c.l.b16 %v3174
  %v3526 = vunpack.c.h.b16 %v3174
  %v3527 = vunpack.c.l.b16 %v3175
  %v3528 = vpack.c.b16 %v3311, %v3304
  %v3529 = vpack.c.b16 %v3312, %v3305
  %v3530 = vpack.c.b16 %v3313, %v3306
  %v3531 = vpack.c.b16 %v3314, %v3307
  %v3532 = vpack.c.b16 %v3315, %v3308
  %v3533 = vpack.c.b16 %v3316, %v3309
  %v3534 = vpack.c.b16 %v3317, %v3310
  %v3535 = vpack.c.b16 %v3325, %v3318
  %v3536 = vpack.c.b16 %v3326, %v3319
  %v3537 = vpack.c.b16 %v3327, %v3320
  %v3538 = vpack.c.b16 %v3328, %v3321
  %v3539 = vpack.c.b16 %v3329, %v3322
  %v3540 = vpack.c.b16 %v3330, %v3323
  %v3541 = vpack.c.b16 %v3331, %v3324
  %v3542 = vpack.c.b16 %v3339, %v3332
  %v3543 = vpack.c.b16 %v3340, %v3333
  %v3544 = vpack.c.b16 %v3341, %v3334
  %v3545 = vpack.c.b16 %v3342, %v3335
  %v3546 = vpack.c.b16 %v3343, %v3336
  %v3547 = vpack.c.b16 %v3344, %v3337
  %v3548 = vpack.c.b16 %v3345, %v3338
  %v3549 = vpack.c.b16 %v3353, %v3346
  %v3550 = vpack.c.b16 %v3354, %v3347
  %v3551 = vpack.c.b16 %v3355, %v3348
  %v3552 = vpack.c.b16 %v3356, %v3349
  %v3553 = vpack.c.b16 %v3357, %v3350
  %v3554 = vpack.c.b16 %v3358, %v3351
  %v3555 = vpack.c.b16 %v3359, %v3352
  %v3556 = vpack.c.b16 %v3367, %v3360
  %v3557 = vpack.c.b16 %v3368, %v3361
  %v3558 = vpack.c.b16 %v3369, %v3362
  %v3559 = vpack.c.b16 %v3370, %v3363
  %v3560 = vpack.c.b16 %v3371, %v3364
  %v3561 = vpack.c.b16 %v3372, %v3365
  %v3562 = vpack.c.b16 %v3373, %v3366
  %v3563 = vpack.c.b16 %v3381, %v3374
  %v3564 = vpack.c.b16 %v3382, %v3375
  %v3565 = vpack.c.b16 %v3383, %v3376
  %v3566 = vpack.c.b16 %v3384, %v3377
  %v3567 = vpack.c.b16 %v3385, %v3378
  %v3568 = vpack.c.b16 %v3386, %v3379
  %v3569 = vpack.c.b16 %v3387, %v3380
  %v3570 = vpack.c.b16 %v3395, %v3388
  %v3571 = vpack.c.b16 %v3396, %v3389
  %v3572 = vpack.c.b16 %v3397, %v3390
  %v3573 = vpack.c.b16 %v3398, %v3391
  %v3574 = vpack.c.b16 %v3399, %v3392
  %v3575 = vpack.c.b16 %v3400, %v3393
  %v3576 = vpack.c.b16 %v3401, %v3394
  %v3577 = vpack.c.b16 %v3409, %v3402
  %v3578 = vpack.c.b16 %v3410, %v3403
  %v3579 = vpack.c.b16 %v3411, %v3404
  %v3580 = vpack.c.b16 %v3412, %v3405
  %v3581 = vpack.c.b16 %v3413, %v3406
  %v3582 = vpack.c.b16 %v3414, %v3407
  %v3583 = vpack.c.b16 %v3415, %v3408
  %v3584 = vpack.c.b16 %v3423, %v3416
  %v3585 = vpack.c.b16 %v3424, %v3417
  %v3586 = vpack.c.b16 %v3425, %v3418
  %v3587 = vpack.c.b16 %v3426, %v3419
  %v3588 = vpack.c.b16 %v3427, %v3420
  %v3589 = vpack.c.b16 %v3428, %v3421
  %v3590 = vpack.c.b16 %v3429, %v3422
  %v3591 = vpack.c.b16 %v3437, %v3430
  %v3592 = vpack.c.b16 %v3438, %v3431
  %v3593 = vpack.c.b16 %v3439, %v3432
  %v3594 = vpack.c.b16 %v3440, %v3433
  %v3595 = vpack.c.b16 %v3441, %v3434
  %v3596 = vpack.c.b16 %v3442, %v3435
  %v3597 = vpack.c.b16 %v3443, %v3436
  %v3598 = vpack.c.b16 %v3451, %v3444
  %v3599 = vpack.c.b16 %v3452, %v3445
  %v3600 = vpack.c.b16 %v3453, %v3446
  %v3601 = vpack.c.b16 %v3454, %v3447
  %v3602 = vpack.c.b16 %v3455, %v3448
  %v3603 = vpack.c.b16 %v3456, %v3449
  %v3604 = vpack.c.b16 %v3457, %v3450
  %v3605 = vpack.c.b16 %v3465, %v3458
  %v3606 = vpack.c.b16 %v3466, %v3459
  %v3607 = vpack.c.b16 %v3467, %v3460
  %v3608 = vpack.c.b16 %v3468, %v3461
  %v3609 = vpack.c.b16 %v3469, %v3462
  %v3610 = vpack.c.b16 %v3470, %v3463
  %v3611 = vpack.c.b16 %v3471, %v3464
  %v3612 = vpack.c.b16 %v3479, %v3472
  %v3613 = vpack.c.b16 %v3480, %v3473
  %v3614 = vpack.c.b16 %v3481, %v3474
  %v3615 = vpack.c.b16 %v3482, %v3475
  %v3616 = vpack.c.b16 %v3483, %v3476
  %v3617 = vpack.c.b16 %v3484, %v3477
  %v3618 = vpack.c.b16 %v3485, %v3478
  %v3619 = vpack.c.b16 %v3493, %v3486
  %v3620 = vpack.c.b16 %v3494, %v3487
  %v3621 = vpack.c.b16 %v3495, %v3488
  %v3622 = vpack.c.b16 %v3496, %v3489
  %v3623 = vpack.c.b16 %v3497, %v3490
  %v3624 = vpack.c.b16 %v3498, %v3491
  %v3625 = vpack.c.b16 %v3499, %v3492
  %v3626 = vpack.c.b16 %v3507, %v3500
  %v3627 = vpack.c.b16 %v3508, %v3501
  %v3628 = vpack.c.b16 %v3509, %v3502
  %v3629 = vpack.c.b16 %v3510, %v3503
  %v3630 = vpack.c.b16 %v3511, %v3504
  %v3631 = vpack.c.b16 %v3512, %v3505
  %v3632 = vpack.c.b16 %v3513, %v3506
  %v3633 = vpack.c.b16 %v3521, %v3514
  %v3634 = vpack.c.b16 %v3522, %v3515
  %v3635 = vpack.c.b16 %v3523, %v3516
  %v3636 = vpack.c.b16 %v3524, %v3517
  %v3637 = vpack.c.b16 %v3525, %v3518
  %v3638 = vpack.c.b16 %v3526, %v3519
  %v3639 = vpack.c.b16 %v3527, %v3520
  %3752 = vmatprep.subr.bf16.mxu0 %v3529
  %3753 = vmatpush1.bf16.msra.mxu0 %v3528
  %3754 = vmatprep.subr.bf16.mxu0 %v3536
  %3755 = vmatpush1.bf16.msra.mxu0 %v3535
  %3756 = vmatprep.subr.bf16.mxu0 %v3543
  %3757 = vmatpush1.bf16.msra.mxu0 %v3542
  %3758 = vmatprep.subr.bf16.mxu0 %v3550
  %3759 = vmatpush1.bf16.msra.mxu0 %v3549
  %3760 = vmatprep.subr.bf16.mxu0 %v3557
  %3761 = vmatpush1.bf16.msra.mxu0 %v3556
  %3762 = vmatprep.subr.bf16.mxu0 %v3564
  %3763 = vmatpush1.bf16.msra.mxu0 %v3563
  %3764 = vmatprep.subr.bf16.mxu0 %v3571
  %3765 = vmatpush1.bf16.msra.mxu0 %v3570
  %3766 = vmatprep.subr.bf16.mxu0 %v3578
  %3767 = vmatpush1.bf16.msra.mxu0 %v3577
  %3768 = vmatprep.subr.bf16.mxu0 %v3585
  %3769 = vmatpush1.bf16.msra.mxu0 %v3584
  %3770 = vmatprep.subr.bf16.mxu0 %v3592
  %3771 = vmatpush1.bf16.msra.mxu0 %v3591
  %3772 = vmatprep.subr.bf16.mxu0 %v3599
  %3773 = vmatpush1.bf16.msra.mxu0 %v3598
  %3774 = vmatprep.subr.bf16.mxu0 %v3606
  %3775 = vmatpush1.bf16.msra.mxu0 %v3605
  %3776 = vmatprep.subr.bf16.mxu0 %v3613
  %3777 = vmatpush1.bf16.msra.mxu0 %v3612
  %3778 = vmatprep.subr.bf16.mxu0 %v3620
  %3779 = vmatpush1.bf16.msra.mxu0 %v3619
  %3780 = vmatprep.subr.bf16.mxu0 %v3627
  %3781 = vmatpush1.bf16.msra.mxu0 %v3626
  %3782 = vmatprep.subr.bf16.mxu0 %v3634
  %3783 = vmatpush1.bf16.msra.mxu0 %v3633
  %3784 = vmatprep.mubr.bf16.mxu0 %v3047
  %3785 = vmatmul.mubr.bf16.gmra.mrb[0].mxu0 %v3046
  %v3786 = vpop.f32.mrb[0].mxu0
  %v3787 = vadd.f32 0.0, %v3786
  %v3788 = vpop.f32.mrb[0].mxu0
  %v3789 = vadd.f32 0.0, %v3788
  %v3790 = vpop.f32.mrb[0].mxu0
  %v3791 = vpop.f32.mrb[0].mxu0
  %3792 = vdwg.mxu0
  %3793 = vmatprep.subr.bf16.mxu0 %v3531
  %3794 = vmatpush1.bf16.msra.mxu0 %v3530
  %3795 = vmatprep.subr.bf16.mxu0 %v3538
  %3796 = vmatpush1.bf16.msra.mxu0 %v3537
  %3797 = vmatprep.subr.bf16.mxu0 %v3545
  %3798 = vmatpush1.bf16.msra.mxu0 %v3544
  %3799 = vmatprep.subr.bf16.mxu0 %v3552
  %3800 = vmatpush1.bf16.msra.mxu0 %v3551
  %3801 = vmatprep.subr.bf16.mxu0 %v3559
  %3802 = vmatpush1.bf16.msra.mxu0 %v3558
  %3803 = vmatprep.subr.bf16.mxu0 %v3566
  %3804 = vmatpush1.bf16.msra.mxu0 %v3565
  %3805 = vmatprep.subr.bf16.mxu0 %v3573
  %3806 = vmatpush1.bf16.msra.mxu0 %v3572
  %3807 = vmatprep.subr.bf16.mxu0 %v3580
  %3808 = vmatpush1.bf16.msra.mxu0 %v3579
  %3809 = vmatprep.subr.bf16.mxu0 %v3587
  %3810 = vmatpush1.bf16.msra.mxu0 %v3586
  %3811 = vmatprep.subr.bf16.mxu0 %v3594
  %3812 = vmatpush1.bf16.msra.mxu0 %v3593
  %3813 = vmatprep.subr.bf16.mxu0 %v3601
  %3814 = vmatpush1.bf16.msra.mxu0 %v3600
  %3815 = vmatprep.subr.bf16.mxu0 %v3608
  %3816 = vmatpush1.bf16.msra.mxu0 %v3607
  %3817 = vmatprep.subr.bf16.mxu0 %v3615
  %3818 = vmatpush1.bf16.msra.mxu0 %v3614
  %3819 = vmatprep.subr.bf16.mxu0 %v3622
  %3820 = vmatpush1.bf16.msra.mxu0 %v3621
  %3821 = vmatprep.subr.bf16.mxu0 %v3629
  %3822 = vmatpush1.bf16.msra.mxu0 %v3628
  %3823 = vmatprep.subr.bf16.mxu0 %v3636
  %3824 = vmatpush1.bf16.msra.mxu0 %v3635
  %3825 = vmatprep.mubr.bf16.mxu0 %v3047
  %3826 = vmatmul.mubr.bf16.gmra.mrb[0].mxu0 %v3046
  %v3827 = vpop.f32.mrb[0].mxu0
  %v3828 = vadd.f32 0.0, %v3827
  %v3829 = vpop.f32.mrb[0].mxu0
  %v3830 = vadd.f32 0.0, %v3829
  %v3831 = vpop.f32.mrb[0].mxu0
  %v3832 = vpop.f32.mrb[0].mxu0
  %3833 = vdwg.mxu0
  %3834 = vmatprep.subr.bf16.mxu0 %v3533
  %3835 = vmatpush1.bf16.msra.mxu0 %v3532
  %3836 = vmatprep.subr.bf16.mxu0 %v3540
  %3837 = vmatpush1.bf16.msra.mxu0 %v3539
  %3838 = vmatprep.subr.bf16.mxu0 %v3547
  %3839 = vmatpush1.bf16.msra.mxu0 %v3546
  %3840 = vmatprep.subr.bf16.mxu0 %v3554
  %3841 = vmatpush1.bf16.msra.mxu0 %v3553
  %3842 = vmatprep.subr.bf16.mxu0 %v3561
  %3843 = vmatpush1.bf16.msra.mxu0 %v3560
  %3844 = vmatprep.subr.bf16.mxu0 %v3568
  %3845 = vmatpush1.bf16.msra.mxu0 %v3567
  %3846 = vmatprep.subr.bf16.mxu0 %v3575
  %3847 = vmatpush1.bf16.msra.mxu0 %v3574
  %3848 = vmatprep.subr.bf16.mxu0 %v3582
  %3849 = vmatpush1.bf16.msra.mxu0 %v3581
  %3850 = vmatprep.subr.bf16.mxu0 %v3589
  %3851 = vmatpush1.bf16.msra.mxu0 %v3588
  %3852 = vmatprep.subr.bf16.mxu0 %v3596
  %3853 = vmatpush1.bf16.msra.mxu0 %v3595
  %3854 = vmatprep.subr.bf16.mxu0 %v3603
  %3855 = vmatpush1.bf16.msra.mxu0 %v3602
  %3856 = vmatprep.subr.bf16.mxu0 %v3610
  %3857 = vmatpush1.bf16.msra.mxu0 %v3609
  %3858 = vmatprep.subr.bf16.mxu0 %v3617
  %3859 = vmatpush1.bf16.msra.mxu0 %v3616
  %3860 = vmatprep.subr.bf16.mxu0 %v3624
  %3861 = vmatpush1.bf16.msra.mxu0 %v3623
  %3862 = vmatprep.subr.bf16.mxu0 %v3631
  %3863 = vmatpush1.bf16.msra.mxu0 %v3630
  %3864 = vmatprep.subr.bf16.mxu0 %v3638
  %3865 = vmatpush1.bf16.msra.mxu0 %v3637
  %3866 = vmatprep.mubr.bf16.mxu0 %v3047
  %3867 = vmatmul.mubr.bf16.gmra.mrb[0].mxu0 %v3046
  %v3868 = vpop.f32.mrb[0].mxu0
  %v3869 = vadd.f32 0.0, %v3868
  %v3870 = vpop.f32.mrb[0].mxu0
  %v3871 = vadd.f32 0.0, %v3870
  %v3872 = vpop.f32.mrb[0].mxu0
  %v3873 = vpop.f32.mrb[0].mxu0
  %3874 = vdwg.mxu0
  %3875 = vmatprep.subr.bf16.mxu0 0
  %3876 = vmatpush1.bf16.msra.mxu0 %v3534
  %3877 = vmatprep.subr.bf16.mxu0 0
  %3878 = vmatpush1.bf16.msra.mxu0 %v3541
  %3879 = vmatprep.subr.bf16.mxu0 0
  %3880 = vmatpush1.bf16.msra.mxu0 %v3548
  %3881 = vmatprep.subr.bf16.mxu0 0
  %3882 = vmatpush1.bf16.msra.mxu0 %v3555
  %3883 = vmatprep.subr.bf16.mxu0 0
  %3884 = vmatpush1.bf16.msra.mxu0 %v3562
  %3885 = vmatprep.subr.bf16.mxu0 0
  %3886 = vmatpush1.bf16.msra.mxu0 %v3569
  %3887 = vmatprep.subr.bf16.mxu0 0
  %3888 = vmatpush1.bf16.msra.mxu0 %v3576
  %3889 = vmatprep.subr.bf16.mxu0 0
  %3890 = vmatpush1.bf16.msra.mxu0 %v3583
  %3891 = vmatprep.subr.bf16.mxu0 0
  %3892 = vmatpush1.bf16.msra.mxu0 %v3590
  %3893 = vmatprep.subr.bf16.mxu0 0
  %3894 = vmatpush1.bf16.msra.mxu0 %v3597
  %3895 = vmatprep.subr.bf16.mxu0 0
  %3896 = vmatpush1.bf16.msra.mxu0 %v3604
  %3897 = vmatprep.subr.bf16.mxu0 0
  %3898 = vmatpush1.bf16.msra.mxu0 %v3611
  %3899 = vmatprep.subr.bf16.mxu0 0
  %3900 = vmatpush1.bf16.msra.mxu0 %v3618
  %3901 = vmatprep.subr.bf16.mxu0 0
  %3902 = vmatpush1.bf16.msra.mxu0 %v3625
  %3903 = vmatprep.subr.bf16.mxu0 0
  %3904 = vmatpush1.bf16.msra.mxu0 %v3632
  %3905 = vmatprep.subr.bf16.mxu0 0
  %3906 = vmatpush1.bf16.msra.mxu0 %v3639
  %3907 = vmatprep.mubr.bf16.mxu0 %v3047
  %3908 = vmatmul.mubr.bf16.gmra.mrb[0].mxu0 %v3046
  %v3909 = vpop.f32.mrb[0].mxu0
  %v3910 = vadd.f32 0.0, %v3909
  %v3911 = vpop.f32.mrb[0].mxu0
  %v3912 = vpop.f32.mrb[0].mxu0
  %v3913 = vpop.f32.mrb[0].mxu0
  %3914 = vdwg.mxu0
  %3915 = vst [vmem:[%s8] sm:$0xff] %v3787
  %3916 = vst [vmem:[%s8 + $0x8] sm:$0xff] %v3789
  %3917 = vst [vmem:[%s8 + $0x10] sm:$0xff] %v3828
  %3918 = vst [vmem:[%s8 + $0x18] sm:$0xff] %v3830
  %3919 = vst [vmem:[%s8 + $0x20] sm:$0xff] %v3869
  %3920 = vst [vmem:[%s8 + $0x28] sm:$0xff] %v3871
  %3921 = vst [vmem:[%s8 + $0x30] sm:$0xff] %v3910
  // Predicated region
  $region34: #{_lambda_.1} parent=0 // pred_check
    _
  $region35: #{_lambda_.1} parent=0 // pred_check_branch
    %3923 = sbr.rel (0) target = $region37
  $region36: #{_lambda_.1} parent=0 // pred_region
    _
  $region37: #{_lambda_.1} parent=0 // pred_fallthru
    _
  // Predicated region
  $region38: #{_lambda_.1} parent=0 // pred_check
    _
  $region39: #{_lambda_.1} parent=0 // pred_check_branch
    %3925 = sbr.rel (0) target = $region41
  $region40: #{_lambda_.1} parent=0 // pred_region
    _
  $region41: #{_lambda_.1} parent=0 // pred_fallthru
    _

</llo_original>
